<compile_context>
chip_gen: v5e
topology: v5e:2x2
jax: 0.10.0
libtpu: 0.0.40
codegen_flags: <defaults>
</compile_context>

<pallas_src>
import functools

import numpy as np

import jax
import jax.numpy as jnp
from jax import lax
from jax.experimental import pallas as pl
from jax.experimental.pallas import tpu as pltpu

_KSIZE = 5
_STRIDE = 2
_PAD = 2
_LANE = 128


def _round_up(x, m):
    return (x + m - 1) // m * m


def _conv_out(n):
    return (n + 2 * _PAD - _KSIZE) // _STRIDE + 1


# ----------------------------------------------------------------------------
# Fused kernel: 3 convs (+ReLU) + flatten + FC (+ReLU), everything VMEM-resident
# ----------------------------------------------------------------------------
def _fused_encoder_kernel(x_ref, w1_ref, b1_ref, w2_ref, b2_ref, w3_ref, b3_ref,
                          wfc_ref, bfc_ref, o_ref,
                          s1_ref, s2_ref, s3_ref, lhs_ref, fc_ref, *, geos):
    g1, g2, g3 = geos
    nb = x_ref.shape[0]

    # Zero the padded-activation scratches once.  Every interior write below is a
    # full-width 128-lane store, so halo rows / lane tails are never disturbed.
    s1_ref[...] = jnp.zeros_like(s1_ref)
    s2_ref[...] = jnp.zeros_like(s2_ref)
    s3_ref[...] = jnp.zeros_like(s3_ref)

    # ---- input layout prep (in-kernel): raw rows -> zero-padded, lane-aligned rows of s1
    wc1 = g1["w"] * g1["cin"]
    for r in range(g1["h"]):
        base = (r + _PAD) * g1["row_len"]
        s1_ref[:, base:base + wc1] = x_ref[:, r * wc1:(r + 1) * wc1]

    def conv_layer(src_ref, g, w_ref, b_ref):
        """5x5 stride-2 conv + bias + ReLU as ONE MXU matmul over stacked row windows.

        Returns (ho*nb, out_cols) f32; row i*nb+b is output row i of batch b, with
        columns >= wo*cout exactly zero (zero weight cols + zero bias + ReLU).
        """
        ho, rl = g["ho"], g["row_len"]
        kwidth = _KSIZE * rl
        for i in range(ho):   # stack the ho overlapping windows (replication unavoidable)
            lhs_ref[i * nb:(i + 1) * nb, :kwidth] = \
                src_ref[:, 2 * i * rl:(2 * i + _KSIZE) * rl]
        lhs = lhs_ref[:ho * nb, :kwidth].astype(jnp.bfloat16)
        y = jnp.dot(lhs, w_ref[...], preferred_element_type=jnp.float32)
        return jnp.maximum(y + b_ref[...], 0.0)          # bias/ReLU in f32 on the VPU

    # conv1 -> scatter rows into s2 (lane-dense 128-wide stores; out_cols1 == row_len2)
    y1 = conv_layer(s1_ref, g1, w1_ref, b1_ref)
    for i in range(g1["ho"]):
        base = (i + _PAD) * g2["row_len"]
        s2_ref[:, base:base + g1["out_cols"]] = y1[i * nb:(i + 1) * nb, :]

    # conv2 -> s3
    y2 = conv_layer(s2_ref, g2, w2_ref, b2_ref)
    for i in range(g2["ho"]):
        base = (i + _PAD) * g3["row_len"]
        s3_ref[:, base:base + g2["out_cols"]] = y2[i * nb:(i + 1) * nb, :]

    # conv3 -> stage rows into the FC LHS (N, ho3*out_cols3), then ONE FC matmul.
    # The NCHW .view(N,-1) permutation + the 128-col activation padding are folded into
    # wfc's rows at pack time.
    y3 = conv_layer(s3_ref, g3, w3_ref, b3_ref)
    oc3 = g3["out_cols"]
    for i in range(g3["ho"]):
        fc_ref[:, i * oc3:(i + 1) * oc3] = y3[i * nb:(i + 1) * nb, :]
    out = jnp.dot(fc_ref[...].astype(jnp.bfloat16), wfc_ref[...],
                  preferred_element_type=jnp.float32)
    o_ref[...] = jnp.maximum(out + bfc_ref[...], 0.0).astype(o_ref.dtype)  # last_activation='relu'


def conv_encoder_forward(x_nchw, weights, *, cfg):
    geos = cfg["geos"]
    g1, g2, g3 = geos
    n = x_nchw.shape[0]
    dimH = weights["bfc"].shape[-1]

    # Raw rows only: for cin==1 NCHW->NHWC is a pure reshape (no XLA copy); the zero-pad
    # and lane alignment happen inside the kernel.
    if g1["cin"] == 1:
        x = x_nchw.reshape(n, g1["h"] * g1["w"] * g1["cin"])
    else:
        x = jnp.transpose(x_nchw, (0, 2, 3, 1)).reshape(n, g1["h"] * g1["w"] * g1["cin"])

    args = (x,
            weights["wb"][0], weights["bt"][0],
            weights["wb"][1], weights["bt"][1],
            weights["wb"][2], weights["bt"][2],
            weights["wfc"], weights["bfc"])

    kernel = functools.partial(_fused_encoder_kernel, geos=geos)

    max_m = max(g["ho"] for g in geos) * n
    max_k = _KSIZE * max(g["row_len"] for g in geos)

    return pl.pallas_call(
        kernel,
        out_shape=jax.ShapeDtypeStruct((n, dimH), jnp.float32),
        grid=(1,),
        in_specs=[pl.BlockSpec(a.shape, lambda i: (0, 0)) for a in args],
        out_specs=pl.BlockSpec((n, dimH), lambda i: (0, 0)),
        scratch_shapes=[
            pltpu.VMEM((n, g1["hp"] * g1["row_len"]), jnp.float32),   # s1: padded input
            pltpu.VMEM((n, g2["hp"] * g2["row_len"]), jnp.float32),   # s2: conv1 out (padded)
            pltpu.VMEM((n, g3["hp"] * g3["row_len"]), jnp.float32),   # s3: conv2 out (padded)
            pltpu.VMEM((max_m, max_k), jnp.float32),                  # stacked-window LHS (reused)
            pltpu.VMEM((n, g3["ho"] * g3["out_cols"]), jnp.float32),  # FC LHS staging
        ],
        compiler_params=pltpu.CompilerParams(dimension_semantics=("arbitrary",)),
    )(*args)


# ----------------------------------------------------------------------------
# Parameter construction / packing (runs once, off the hot path)
# ----------------------------------------------------------------------------
def init_params(key, in_channels, n_channel, dimH, h_final, w_final):
    ks = jax.random.split(key, 4)
    convs = []
    cin = in_channels
    for i in range(3):                                       # layer_channels = [n_channel]*3
        w = 0.05 * jax.random.normal(ks[i], (_KSIZE, _KSIZE, cin, n_channel), jnp.float32)
        b = jnp.zeros((n_channel,), jnp.float32)
        convs.append((w, b))
        cin = n_channel
    fc_in = n_channel * h_final * w_final
    # FC weight rows in PyTorch .view(N,-1)-on-NCHW order, i.e. row index = c*H*W + h*W + w
    w_fc = 0.05 * jax.random.normal(ks[3], (fc_in, dimH), jnp.float32)
    b_fc = jnp.zeros((dimH,), jnp.float32)
    return {"convs": convs, "fc": (w_fc, b_fc)}


def pack_params(params, input_shape):
    """Fold each 5x5/stride-2 conv into a banded bf16 matmul weight with 128-padded output
    columns, and permute/pad the FC weight so the fused kernel consumes the flattened
    padded-row activation layout directly."""
    c0, h0, w0 = input_shape
    n_channel = int(params["convs"][0][0].shape[-1])

    geos = []
    cin, h, w = c0, h0, w0
    for _ in range(3):
        ho, wo = _conv_out(h), _conv_out(w)
        geos.append(dict(cin=cin, h=h, w=w, hp=h + 2 * _PAD, ho=ho, wo=wo,
                         row_len=_round_up(w * cin, _LANE),
                         out_cols=_round_up(wo * n_channel, _LANE)))
        cin, h, w = n_channel, ho, wo
    # Invariant: padded output row width of layer k == input row_len of layer k+1
    assert geos[0]["out_cols"] == geos[1]["row_len"]
    assert geos[1]["out_cols"] == geos[2]["row_len"]

    wbs, bts = [], []
    for geo, (w_hwio, b) in zip(geos, params["convs"]):
        w_np = np.asarray(w_hwio, np.float32)                # (5, 5, cin, cout)
        cout = w_np.shape[-1]
        wb = np.zeros((_KSIZE * geo["row_len"], geo["out_cols"]), np.float32)
        for kh in range(_KSIZE):
            for kw in range(_KSIZE):
                for j in range(geo["wo"]):
                    col = _STRIDE * j + kw                   # column in the virtually padded row
                    if _PAD <= col < _PAD + geo["w"]:        # stored content; outside = zero pad
                        r0 = kh * geo["row_len"] + (col - _PAD) * geo["cin"]
                        wb[r0:r0 + geo["cin"], j * cout:(j + 1) * cout] = w_np[kh, kw]
        wbs.append(jnp.asarray(wb, jnp.bfloat16))
        bt = np.zeros((1, geo["out_cols"]), np.float32)      # zero-padded bias keeps tails 0
        bt[0, :geo["wo"] * cout] = np.tile(np.asarray(b, np.float32), geo["wo"])
        bts.append(jnp.asarray(bt))

    # FC: permute rows from PyTorch NCHW-flatten order (c,h,w) to the kernel's (h,w,c) order,
    # then space the per-row blocks to match the 128-padded conv3 activation rows.
    w_fc, b_fc = params["fc"]
    g3 = geos[2]
    hf, wf = g3["ho"], g3["wo"]
    dimH = int(np.asarray(w_fc).shape[-1])
    w_fc_np = np.asarray(w_fc, np.float32).reshape(n_channel, hf, wf, dimH)
    w_fc_hwc = np.transpose(w_fc_np, (1, 2, 0, 3))            # (hf, wf, c, dimH)
    row_feat = wf * n_channel
    wfc = np.zeros((hf * g3["out_cols"], dimH), np.float32)
    for i in range(hf):
        wfc[i * g3["out_cols"]:i * g3["out_cols"] + row_feat, :] = \
            w_fc_hwc[i].reshape(row_feat, dimH)

    weights = dict(wb=wbs, bt=bts,
                   wfc=jnp.asarray(wfc, jnp.bfloat16),
                   bfc=jnp.asarray(np.asarray(b_fc, np.float32).reshape(1, -1)))
    cfg = dict(geos=geos, n_channel=n_channel)
    return weights, cfg


# ----------------------------------------------------------------------------
# Plain-JAX reference (for correctness verification only)
# ----------------------------------------------------------------------------
def reference_forward(x_nchw, params):
    x = jnp.transpose(x_nchw, (0, 2, 3, 1))                  # NHWC
    for (w, b) in params["convs"]:
        x = lax.conv_general_dilated(x, w, window_strides=(2, 2),
                                     padding=((2, 2), (2, 2)),
                                     dimension_numbers=("NHWC", "HWIO", "NHWC"))
        x = jnp.maximum(x + b, 0.0)
    flat = jnp.transpose(x, (0, 3, 1, 2)).reshape(x.shape[0], -1)   # NCHW .view(N,-1)
    w_fc, b_fc = params["fc"]
    return jnp.maximum(flat @ w_fc + b_fc, 0.0)


if __name__ == "__main__":
    # MNIST-like config: input_shape=(1,28,28), n_channel=8, dimH=32
    batch, c_in, H, W = 2, 1, 28, 28
    n_channel, dimH = 8, 32
    h_final = w_final = 4                                    # 28 -> 14 -> 7 -> 4

    key = jax.random.PRNGKey(0)
    k_x, k_p = jax.random.split(key)
    x = jax.random.normal(k_x, (batch, c_in, H, W), jnp.float32)     # NCHW input
    params = init_params(k_p, c_in, n_channel, dimH, h_final, w_final)
    weights, cfg = pack_params(params, (c_in, H, W))

    fwd = jax.jit(functools.partial(conv_encoder_forward, cfg=cfg))
    out = jax.block_until_ready(fwd(x, weights))
    assert out.shape == (batch, dimH), out.shape

    ref = jax.block_until_ready(reference_forward(x, params))
    max_err = float(jnp.max(jnp.abs(out - ref)))
    assert bool(jnp.allclose(out, ref, atol=1e-2, rtol=1e-2)), max_err

    print("KERNEL_OK")
</pallas_src>

<mosaic_0001>
module attributes {stable_mosaic.version = 11 : i64} {
  func.func @_fused_encoder_kernel(%arg0: i32, %arg1: memref<2x784xf32, #tpu.memory_space<vmem>>, %arg2: memref<640x128xbf16, #tpu.memory_space<vmem>>, %arg3: memref<1x128xf32, #tpu.memory_space<vmem>>, %arg4: memref<640x128xbf16, #tpu.memory_space<vmem>>, %arg5: memref<1x128xf32, #tpu.memory_space<vmem>>, %arg6: memref<640x128xbf16, #tpu.memory_space<vmem>>, %arg7: memref<1x128xf32, #tpu.memory_space<vmem>>, %arg8: memref<512x32xbf16, #tpu.memory_space<vmem>>, %arg9: memref<1x32xf32, #tpu.memory_space<vmem>>, %arg10: memref<2x32xf32, #tpu.memory_space<vmem>>, %arg11: memref<2x4096xf32, #tpu.memory_space<vmem>>, %arg12: memref<2x2304xf32, #tpu.memory_space<vmem>>, %arg13: memref<2x1408xf32, #tpu.memory_space<vmem>>, %arg14: memref<28x640xf32, #tpu.memory_space<vmem>>, %arg15: memref<2x512xf32, #tpu.memory_space<vmem>>) attributes {dimension_semantics = [#tpu.dimension_semantics<arbitrary>], iteration_bounds = array<i64: 1>, scalar_prefetch = 0 : i64, scratch_operands = 5 : i64, tpu.core_type = #tpu.core_type<tc>, window_params = [{pipeline_mode = #tpu.pipeline_mode<synchronous>, transform_indices = @transform_0, window_bounds = array<i64: 2, 784>}, {pipeline_mode = #tpu.pipeline_mode<synchronous>, transform_indices = @transform_1, window_bounds = array<i64: 640, 128>}, {pipeline_mode = #tpu.pipeline_mode<synchronous>, transform_indices = @transform_2, window_bounds = array<i64: 1, 128>}, {pipeline_mode = #tpu.pipeline_mode<synchronous>, transform_indices = @transform_3, window_bounds = array<i64: 640, 128>}, {pipeline_mode = #tpu.pipeline_mode<synchronous>, transform_indices = @transform_4, window_bounds = array<i64: 1, 128>}, {pipeline_mode = #tpu.pipeline_mode<synchronous>, transform_indices = @transform_5, window_bounds = array<i64: 640, 128>}, {pipeline_mode = #tpu.pipeline_mode<synchronous>, transform_indices = @transform_6, window_bounds = array<i64: 1, 128>}, {pipeline_mode = #tpu.pipeline_mode<synchronous>, transform_indices = @transform_7, window_bounds = array<i64: 512, 32>}, {pipeline_mode = #tpu.pipeline_mode<synchronous>, transform_indices = @transform_8, window_bounds = array<i64: 1, 32>}, {pipeline_mode = #tpu.pipeline_mode<synchronous>, transform_indices = @transform_9, window_bounds = array<i64: 2, 32>}]} {
    %cst = arith.constant 0.000000e+00 : f32
    %0 = vector.broadcast %cst : f32 to vector<2x4096xf32>
    %c0 = arith.constant 0 : index
    %c0_0 = arith.constant 0 : index
    %1 = vector.load %arg11[%c0, %c0_0] : memref<2x4096xf32, #tpu.memory_space<vmem>>, vector<2x4096xf32>
    tpu.vector_store %arg11[%c0, %c0_0], %0 {strides = array<i32>} : memref<2x4096xf32, #tpu.memory_space<vmem>>, vector<2x4096xf32>,
    %cst_1 = arith.constant 0.000000e+00 : f32
    %2 = vector.broadcast %cst_1 : f32 to vector<2x2304xf32>
    %c0_2 = arith.constant 0 : index
    %c0_3 = arith.constant 0 : index
    %3 = vector.load %arg12[%c0_2, %c0_3] : memref<2x2304xf32, #tpu.memory_space<vmem>>, vector<2x2304xf32>
    tpu.vector_store %arg12[%c0_2, %c0_3], %2 {strides = array<i32>} : memref<2x2304xf32, #tpu.memory_space<vmem>>, vector<2x2304xf32>,
    %cst_4 = arith.constant 0.000000e+00 : f32
    %4 = vector.broadcast %cst_4 : f32 to vector<2x1408xf32>
    %c0_5 = arith.constant 0 : index
    %c0_6 = arith.constant 0 : index
    %5 = vector.load %arg13[%c0_5, %c0_6] : memref<2x1408xf32, #tpu.memory_space<vmem>>, vector<2x1408xf32>
    tpu.vector_store %arg13[%c0_5, %c0_6], %4 {strides = array<i32>} : memref<2x1408xf32, #tpu.memory_space<vmem>>, vector<2x1408xf32>,
    %c0_7 = arith.constant 0 : index
    %c0_8 = arith.constant 0 : index
    %6 = vector.load %arg1[%c0_7, %c0_8] : memref<2x784xf32, #tpu.memory_space<vmem>>, vector<2x28xf32>
    %c0_9 = arith.constant 0 : index
    %c256 = arith.constant 256 : index
    %7 = vector.load %arg11[%c0_9, %c256] : memref<2x4096xf32, #tpu.memory_space<vmem>>, vector<2x28xf32>
    tpu.vector_store %arg11[%c0_9, %c256], %6 {strides = array<i32>} : memref<2x4096xf32, #tpu.memory_space<vmem>>, vector<2x28xf32>,
    %c0_10 = arith.constant 0 : index
    %c28 = arith.constant 28 : index
    %8 = vector.load %arg1[%c0_10, %c28] : memref<2x784xf32, #tpu.memory_space<vmem>>, vector<2x28xf32>
    %c0_11 = arith.constant 0 : index
    %c384 = arith.constant 384 : index
    %9 = vector.load %arg11[%c0_11, %c384] : memref<2x4096xf32, #tpu.memory_space<vmem>>, vector<2x28xf32>
    tpu.vector_store %arg11[%c0_11, %c384], %8 {strides = array<i32>} : memref<2x4096xf32, #tpu.memory_space<vmem>>, vector<2x28xf32>,
    %c0_12 = arith.constant 0 : index
    %c56 = arith.constant 56 : index
    %10 = vector.load %arg1[%c0_12, %c56] : memref<2x784xf32, #tpu.memory_space<vmem>>, vector<2x28xf32>
    %c0_13 = arith.constant 0 : index
    %c512 = arith.constant 512 : index
    %11 = vector.load %arg11[%c0_13, %c512] : memref<2x4096xf32, #tpu.memory_space<vmem>>, vector<2x28xf32>
    tpu.vector_store %arg11[%c0_13, %c512], %10 {strides = array<i32>} : memref<2x4096xf32, #tpu.memory_space<vmem>>, vector<2x28xf32>,
    %c0_14 = arith.constant 0 : index
    %c84 = arith.constant 84 : index
    %12 = vector.load %arg1[%c0_14, %c84] : memref<2x784xf32, #tpu.memory_space<vmem>>, vector<2x28xf32>
    %c0_15 = arith.constant 0 : index
    %c640 = arith.constant 640 : index
    %13 = vector.load %arg11[%c0_15, %c640] : memref<2x4096xf32, #tpu.memory_space<vmem>>, vector<2x28xf32>
    tpu.vector_store %arg11[%c0_15, %c640], %12 {strides = array<i32>} : memref<2x4096xf32, #tpu.memory_space<vmem>>, vector<2x28xf32>,
    %c0_16 = arith.constant 0 : index
    %c112 = arith.constant 112 : index
    %14 = vector.load %arg1[%c0_16, %c112] : memref<2x784xf32, #tpu.memory_space<vmem>>, vector<2x28xf32>
    %c0_17 = arith.constant 0 : index
    %c768 = arith.constant 768 : index
    %15 = vector.load %arg11[%c0_17, %c768] : memref<2x4096xf32, #tpu.memory_space<vmem>>, vector<2x28xf32>
    tpu.vector_store %arg11[%c0_17, %c768], %14 {strides = array<i32>} : memref<2x4096xf32, #tpu.memory_space<vmem>>, vector<2x28xf32>,
    %c0_18 = arith.constant 0 : index
    %c140 = arith.constant 140 : index
    %16 = vector.load %arg1[%c0_18, %c140] : memref<2x784xf32, #tpu.memory_space<vmem>>, vector<2x28xf32>
    %c0_19 = arith.constant 0 : index
    %c896 = arith.constant 896 : index
    %17 = vector.load %arg11[%c0_19, %c896] : memref<2x4096xf32, #tpu.memory_space<vmem>>, vector<2x28xf32>
    tpu.vector_store %arg11[%c0_19, %c896], %16 {strides = array<i32>} : memref<2x4096xf32, #tpu.memory_space<vmem>>, vector<2x28xf32>,
    %c0_20 = arith.constant 0 : index
    %c168 = arith.constant 168 : index
    %18 = vector.load %arg1[%c0_20, %c168] : memref<2x784xf32, #tpu.memory_space<vmem>>, vector<2x28xf32>
    %c0_21 = arith.constant 0 : index
    %c1024 = arith.constant 1024 : index
    %19 = vector.load %arg11[%c0_21, %c1024] : memref<2x4096xf32, #tpu.memory_space<vmem>>, vector<2x28xf32>
    tpu.vector_store %arg11[%c0_21, %c1024], %18 {strides = array<i32>} : memref<2x4096xf32, #tpu.memory_space<vmem>>, vector<2x28xf32>,
    %c0_22 = arith.constant 0 : index
    %c196 = arith.constant 196 : index
    %20 = vector.load %arg1[%c0_22, %c196] : memref<2x784xf32, #tpu.memory_space<vmem>>, vector<2x28xf32>
    %c0_23 = arith.constant 0 : index
    %c1152 = arith.constant 1152 : index
    %21 = vector.load %arg11[%c0_23, %c1152] : memref<2x4096xf32, #tpu.memory_space<vmem>>, vector<2x28xf32>
    tpu.vector_store %arg11[%c0_23, %c1152], %20 {strides = array<i32>} : memref<2x4096xf32, #tpu.memory_space<vmem>>, vector<2x28xf32>,
    %c0_24 = arith.constant 0 : index
    %c224 = arith.constant 224 : index
    %22 = vector.load %arg1[%c0_24, %c224] : memref<2x784xf32, #tpu.memory_space<vmem>>, vector<2x28xf32>
    %c0_25 = arith.constant 0 : index
    %c1280 = arith.constant 1280 : index
    %23 = vector.load %arg11[%c0_25, %c1280] : memref<2x4096xf32, #tpu.memory_space<vmem>>, vector<2x28xf32>
    tpu.vector_store %arg11[%c0_25, %c1280], %22 {strides = array<i32>} : memref<2x4096xf32, #tpu.memory_space<vmem>>, vector<2x28xf32>,
    %c0_26 = arith.constant 0 : index
    %c252 = arith.constant 252 : index
    %24 = vector.load %arg1[%c0_26, %c252] : memref<2x784xf32, #tpu.memory_space<vmem>>, vector<2x28xf32>
    %c0_27 = arith.constant 0 : index
    %c1408 = arith.constant 1408 : index
    %25 = vector.load %arg11[%c0_27, %c1408] : memref<2x4096xf32, #tpu.memory_space<vmem>>, vector<2x28xf32>
    tpu.vector_store %arg11[%c0_27, %c1408], %24 {strides = array<i32>} : memref<2x4096xf32, #tpu.memory_space<vmem>>, vector<2x28xf32>,
    %c0_28 = arith.constant 0 : index
    %c280 = arith.constant 280 : index
    %26 = vector.load %arg1[%c0_28, %c280] : memref<2x784xf32, #tpu.memory_space<vmem>>, vector<2x28xf32>
    %c0_29 = arith.constant 0 : index
    %c1536 = arith.constant 1536 : index
    %27 = vector.load %arg11[%c0_29, %c1536] : memref<2x4096xf32, #tpu.memory_space<vmem>>, vector<2x28xf32>
    tpu.vector_store %arg11[%c0_29, %c1536], %26 {strides = array<i32>} : memref<2x4096xf32, #tpu.memory_space<vmem>>, vector<2x28xf32>,
    %c0_30 = arith.constant 0 : index
    %c308 = arith.constant 308 : index
    %28 = vector.load %arg1[%c0_30, %c308] : memref<2x784xf32, #tpu.memory_space<vmem>>, vector<2x28xf32>
    %c0_31 = arith.constant 0 : index
    %c1664 = arith.constant 1664 : index
    %29 = vector.load %arg11[%c0_31, %c1664] : memref<2x4096xf32, #tpu.memory_space<vmem>>, vector<2x28xf32>
    tpu.vector_store %arg11[%c0_31, %c1664], %28 {strides = array<i32>} : memref<2x4096xf32, #tpu.memory_space<vmem>>, vector<2x28xf32>,
    %c0_32 = arith.constant 0 : index
    %c336 = arith.constant 336 : index
    %30 = vector.load %arg1[%c0_32, %c336] : memref<2x784xf32, #tpu.memory_space<vmem>>, vector<2x28xf32>
    %c0_33 = arith.constant 0 : index
    %c1792 = arith.constant 1792 : index
    %31 = vector.load %arg11[%c0_33, %c1792] : memref<2x4096xf32, #tpu.memory_space<vmem>>, vector<2x28xf32>
    tpu.vector_store %arg11[%c0_33, %c1792], %30 {strides = array<i32>} : memref<2x4096xf32, #tpu.memory_space<vmem>>, vector<2x28xf32>,
    %c0_34 = arith.constant 0 : index
    %c364 = arith.constant 364 : index
    %32 = vector.load %arg1[%c0_34, %c364] : memref<2x784xf32, #tpu.memory_space<vmem>>, vector<2x28xf32>
    %c0_35 = arith.constant 0 : index
    %c1920 = arith.constant 1920 : index
    %33 = vector.load %arg11[%c0_35, %c1920] : memref<2x4096xf32, #tpu.memory_space<vmem>>, vector<2x28xf32>
    tpu.vector_store %arg11[%c0_35, %c1920], %32 {strides = array<i32>} : memref<2x4096xf32, #tpu.memory_space<vmem>>, vector<2x28xf32>,
    %c0_36 = arith.constant 0 : index
    %c392 = arith.constant 392 : index
    %34 = vector.load %arg1[%c0_36, %c392] : memref<2x784xf32, #tpu.memory_space<vmem>>, vector<2x28xf32>
    %c0_37 = arith.constant 0 : index
    %c2048 = arith.constant 2048 : index
    %35 = vector.load %arg11[%c0_37, %c2048] : memref<2x4096xf32, #tpu.memory_space<vmem>>, vector<2x28xf32>
    tpu.vector_store %arg11[%c0_37, %c2048], %34 {strides = array<i32>} : memref<2x4096xf32, #tpu.memory_space<vmem>>, vector<2x28xf32>,
    %c0_38 = arith.constant 0 : index
    %c420 = arith.constant 420 : index
    %36 = vector.load %arg1[%c0_38, %c420] : memref<2x784xf32, #tpu.memory_space<vmem>>, vector<2x28xf32>
    %c0_39 = arith.constant 0 : index
    %c2176 = arith.constant 2176 : index
    %37 = vector.load %arg11[%c0_39, %c2176] : memref<2x4096xf32, #tpu.memory_space<vmem>>, vector<2x28xf32>
    tpu.vector_store %arg11[%c0_39, %c2176], %36 {strides = array<i32>} : memref<2x4096xf32, #tpu.memory_space<vmem>>, vector<2x28xf32>,
    %c0_40 = arith.constant 0 : index
    %c448 = arith.constant 448 : index
    %38 = vector.load %arg1[%c0_40, %c448] : memref<2x784xf32, #tpu.memory_space<vmem>>, vector<2x28xf32>
    %c0_41 = arith.constant 0 : index
    %c2304 = arith.constant 2304 : index
    %39 = vector.load %arg11[%c0_41, %c2304] : memref<2x4096xf32, #tpu.memory_space<vmem>>, vector<2x28xf32>
    tpu.vector_store %arg11[%c0_41, %c2304], %38 {strides = array<i32>} : memref<2x4096xf32, #tpu.memory_space<vmem>>, vector<2x28xf32>,
    %c0_42 = arith.constant 0 : index
    %c476 = arith.constant 476 : index
    %40 = vector.load %arg1[%c0_42, %c476] : memref<2x784xf32, #tpu.memory_space<vmem>>, vector<2x28xf32>
    %c0_43 = arith.constant 0 : index
    %c2432 = arith.constant 2432 : index
    %41 = vector.load %arg11[%c0_43, %c2432] : memref<2x4096xf32, #tpu.memory_space<vmem>>, vector<2x28xf32>
    tpu.vector_store %arg11[%c0_43, %c2432], %40 {strides = array<i32>} : memref<2x4096xf32, #tpu.memory_space<vmem>>, vector<2x28xf32>,
    %c0_44 = arith.constant 0 : index
    %c504 = arith.constant 504 : index
    %42 = vector.load %arg1[%c0_44, %c504] : memref<2x784xf32, #tpu.memory_space<vmem>>, vector<2x28xf32>
    %c0_45 = arith.constant 0 : index
    %c2560 = arith.constant 2560 : index
    %43 = vector.load %arg11[%c0_45, %c2560] : memref<2x4096xf32, #tpu.memory_space<vmem>>, vector<2x28xf32>
    tpu.vector_store %arg11[%c0_45, %c2560], %42 {strides = array<i32>} : memref<2x4096xf32, #tpu.memory_space<vmem>>, vector<2x28xf32>,
    %c0_46 = arith.constant 0 : index
    %c532 = arith.constant 532 : index
    %44 = vector.load %arg1[%c0_46, %c532] : memref<2x784xf32, #tpu.memory_space<vmem>>, vector<2x28xf32>
    %c0_47 = arith.constant 0 : index
    %c2688 = arith.constant 2688 : index
    %45 = vector.load %arg11[%c0_47, %c2688] : memref<2x4096xf32, #tpu.memory_space<vmem>>, vector<2x28xf32>
    tpu.vector_store %arg11[%c0_47, %c2688], %44 {strides = array<i32>} : memref<2x4096xf32, #tpu.memory_space<vmem>>, vector<2x28xf32>,
    %c0_48 = arith.constant 0 : index
    %c560 = arith.constant 560 : index
    %46 = vector.load %arg1[%c0_48, %c560] : memref<2x784xf32, #tpu.memory_space<vmem>>, vector<2x28xf32>
    %c0_49 = arith.constant 0 : index
    %c2816 = arith.constant 2816 : index
    %47 = vector.load %arg11[%c0_49, %c2816] : memref<2x4096xf32, #tpu.memory_space<vmem>>, vector<2x28xf32>
    tpu.vector_store %arg11[%c0_49, %c2816], %46 {strides = array<i32>} : memref<2x4096xf32, #tpu.memory_space<vmem>>, vector<2x28xf32>,
    %c0_50 = arith.constant 0 : index
    %c588 = arith.constant 588 : index
    %48 = vector.load %arg1[%c0_50, %c588] : memref<2x784xf32, #tpu.memory_space<vmem>>, vector<2x28xf32>
    %c0_51 = arith.constant 0 : index
    %c2944 = arith.constant 2944 : index
    %49 = vector.load %arg11[%c0_51, %c2944] : memref<2x4096xf32, #tpu.memory_space<vmem>>, vector<2x28xf32>
    tpu.vector_store %arg11[%c0_51, %c2944], %48 {strides = array<i32>} : memref<2x4096xf32, #tpu.memory_space<vmem>>, vector<2x28xf32>,
    %c0_52 = arith.constant 0 : index
    %c616 = arith.constant 616 : index
    %50 = vector.load %arg1[%c0_52, %c616] : memref<2x784xf32, #tpu.memory_space<vmem>>, vector<2x28xf32>
    %c0_53 = arith.constant 0 : index
    %c3072 = arith.constant 3072 : index
    %51 = vector.load %arg11[%c0_53, %c3072] : memref<2x4096xf32, #tpu.memory_space<vmem>>, vector<2x28xf32>
    tpu.vector_store %arg11[%c0_53, %c3072], %50 {strides = array<i32>} : memref<2x4096xf32, #tpu.memory_space<vmem>>, vector<2x28xf32>,
    %c0_54 = arith.constant 0 : index
    %c644 = arith.constant 644 : index
    %52 = vector.load %arg1[%c0_54, %c644] : memref<2x784xf32, #tpu.memory_space<vmem>>, vector<2x28xf32>
    %c0_55 = arith.constant 0 : index
    %c3200 = arith.constant 3200 : index
    %53 = vector.load %arg11[%c0_55, %c3200] : memref<2x4096xf32, #tpu.memory_space<vmem>>, vector<2x28xf32>
    tpu.vector_store %arg11[%c0_55, %c3200], %52 {strides = array<i32>} : memref<2x4096xf32, #tpu.memory_space<vmem>>, vector<2x28xf32>,
    %c0_56 = arith.constant 0 : index
    %c672 = arith.constant 672 : index
    %54 = vector.load %arg1[%c0_56, %c672] : memref<2x784xf32, #tpu.memory_space<vmem>>, vector<2x28xf32>
    %c0_57 = arith.constant 0 : index
    %c3328 = arith.constant 3328 : index
    %55 = vector.load %arg11[%c0_57, %c3328] : memref<2x4096xf32, #tpu.memory_space<vmem>>, vector<2x28xf32>
    tpu.vector_store %arg11[%c0_57, %c3328], %54 {strides = array<i32>} : memref<2x4096xf32, #tpu.memory_space<vmem>>, vector<2x28xf32>,
    %c0_58 = arith.constant 0 : index
    %c700 = arith.constant 700 : index
    %56 = vector.load %arg1[%c0_58, %c700] : memref<2x784xf32, #tpu.memory_space<vmem>>, vector<2x28xf32>
    %c0_59 = arith.constant 0 : index
    %c3456 = arith.constant 3456 : index
    %57 = vector.load %arg11[%c0_59, %c3456] : memref<2x4096xf32, #tpu.memory_space<vmem>>, vector<2x28xf32>
    tpu.vector_store %arg11[%c0_59, %c3456], %56 {strides = array<i32>} : memref<2x4096xf32, #tpu.memory_space<vmem>>, vector<2x28xf32>,
    %c0_60 = arith.constant 0 : index
    %c728 = arith.constant 728 : index
    %58 = vector.load %arg1[%c0_60, %c728] : memref<2x784xf32, #tpu.memory_space<vmem>>, vector<2x28xf32>
    %c0_61 = arith.constant 0 : index
    %c3584 = arith.constant 3584 : index
    %59 = vector.load %arg11[%c0_61, %c3584] : memref<2x4096xf32, #tpu.memory_space<vmem>>, vector<2x28xf32>
    tpu.vector_store %arg11[%c0_61, %c3584], %58 {strides = array<i32>} : memref<2x4096xf32, #tpu.memory_space<vmem>>, vector<2x28xf32>,
    %c0_62 = arith.constant 0 : index
    %c756 = arith.constant 756 : index
    %60 = vector.load %arg1[%c0_62, %c756] : memref<2x784xf32, #tpu.memory_space<vmem>>, vector<2x28xf32>
    %c0_63 = arith.constant 0 : index
    %c3712 = arith.constant 3712 : index
    %61 = vector.load %arg11[%c0_63, %c3712] : memref<2x4096xf32, #tpu.memory_space<vmem>>, vector<2x28xf32>
    tpu.vector_store %arg11[%c0_63, %c3712], %60 {strides = array<i32>} : memref<2x4096xf32, #tpu.memory_space<vmem>>, vector<2x28xf32>,
    %c0_64 = arith.constant 0 : index
    %c0_65 = arith.constant 0 : index
    %62 = vector.load %arg11[%c0_64, %c0_65] : memref<2x4096xf32, #tpu.memory_space<vmem>>, vector<2x640xf32>
    %c0_66 = arith.constant 0 : index
    %c0_67 = arith.constant 0 : index
    %63 = vector.load %arg14[%c0_66, %c0_67] : memref<28x640xf32, #tpu.memory_space<vmem>>, vector<2x640xf32>
    tpu.vector_store %arg14[%c0_66, %c0_67], %62 {strides = array<i32>} : memref<28x640xf32, #tpu.memory_space<vmem>>, vector<2x640xf32>,
    %c0_68 = arith.constant 0 : index
    %c256_69 = arith.constant 256 : index
    %64 = vector.load %arg11[%c0_68, %c256_69] : memref<2x4096xf32, #tpu.memory_space<vmem>>, vector<2x640xf32>
    %c2 = arith.constant 2 : index
    %c0_70 = arith.constant 0 : index
    %65 = vector.load %arg14[%c2, %c0_70] : memref<28x640xf32, #tpu.memory_space<vmem>>, vector<2x640xf32>
    tpu.vector_store %arg14[%c2, %c0_70], %64 {strides = array<i32>} : memref<28x640xf32, #tpu.memory_space<vmem>>, vector<2x640xf32>,
    %c0_71 = arith.constant 0 : index
    %c512_72 = arith.constant 512 : index
    %66 = vector.load %arg11[%c0_71, %c512_72] : memref<2x4096xf32, #tpu.memory_space<vmem>>, vector<2x640xf32>
    %c4 = arith.constant 4 : index
    %c0_73 = arith.constant 0 : index
    %67 = vector.load %arg14[%c4, %c0_73] : memref<28x640xf32, #tpu.memory_space<vmem>>, vector<2x640xf32>
    tpu.vector_store %arg14[%c4, %c0_73], %66 {strides = array<i32>} : memref<28x640xf32, #tpu.memory_space<vmem>>, vector<2x640xf32>,
    %c0_74 = arith.constant 0 : index
    %c768_75 = arith.constant 768 : index
    %68 = vector.load %arg11[%c0_74, %c768_75] : memref<2x4096xf32, #tpu.memory_space<vmem>>, vector<2x640xf32>
    %c6 = arith.constant 6 : index
    %c0_76 = arith.constant 0 : index
    %69 = vector.load %arg14[%c6, %c0_76] : memref<28x640xf32, #tpu.memory_space<vmem>>, vector<2x640xf32>
    tpu.vector_store %arg14[%c6, %c0_76], %68 {strides = array<i32>} : memref<28x640xf32, #tpu.memory_space<vmem>>, vector<2x640xf32>,
    %c0_77 = arith.constant 0 : index
    %c1024_78 = arith.constant 1024 : index
    %70 = vector.load %arg11[%c0_77, %c1024_78] : memref<2x4096xf32, #tpu.memory_space<vmem>>, vector<2x640xf32>
    %c8 = arith.constant 8 : index
    %c0_79 = arith.constant 0 : index
    %71 = vector.load %arg14[%c8, %c0_79] : memref<28x640xf32, #tpu.memory_space<vmem>>, vector<2x640xf32>
    tpu.vector_store %arg14[%c8, %c0_79], %70 {strides = array<i32>} : memref<28x640xf32, #tpu.memory_space<vmem>>, vector<2x640xf32>,
    %c0_80 = arith.constant 0 : index
    %c1280_81 = arith.constant 1280 : index
    %72 = vector.load %arg11[%c0_80, %c1280_81] : memref<2x4096xf32, #tpu.memory_space<vmem>>, vector<2x640xf32>
    %c10 = arith.constant 10 : index
    %c0_82 = arith.constant 0 : index
    %73 = vector.load %arg14[%c10, %c0_82] : memref<28x640xf32, #tpu.memory_space<vmem>>, vector<2x640xf32>
    tpu.vector_store %arg14[%c10, %c0_82], %72 {strides = array<i32>} : memref<28x640xf32, #tpu.memory_space<vmem>>, vector<2x640xf32>,
    %c0_83 = arith.constant 0 : index
    %c1536_84 = arith.constant 1536 : index
    %74 = vector.load %arg11[%c0_83, %c1536_84] : memref<2x4096xf32, #tpu.memory_space<vmem>>, vector<2x640xf32>
    %c12 = arith.constant 12 : index
    %c0_85 = arith.constant 0 : index
    %75 = vector.load %arg14[%c12, %c0_85] : memref<28x640xf32, #tpu.memory_space<vmem>>, vector<2x640xf32>
    tpu.vector_store %arg14[%c12, %c0_85], %74 {strides = array<i32>} : memref<28x640xf32, #tpu.memory_space<vmem>>, vector<2x640xf32>,
    %c0_86 = arith.constant 0 : index
    %c1792_87 = arith.constant 1792 : index
    %76 = vector.load %arg11[%c0_86, %c1792_87] : memref<2x4096xf32, #tpu.memory_space<vmem>>, vector<2x640xf32>
    %c14 = arith.constant 14 : index
    %c0_88 = arith.constant 0 : index
    %77 = vector.load %arg14[%c14, %c0_88] : memref<28x640xf32, #tpu.memory_space<vmem>>, vector<2x640xf32>
    tpu.vector_store %arg14[%c14, %c0_88], %76 {strides = array<i32>} : memref<28x640xf32, #tpu.memory_space<vmem>>, vector<2x640xf32>,
    %c0_89 = arith.constant 0 : index
    %c2048_90 = arith.constant 2048 : index
    %78 = vector.load %arg11[%c0_89, %c2048_90] : memref<2x4096xf32, #tpu.memory_space<vmem>>, vector<2x640xf32>
    %c16 = arith.constant 16 : index
    %c0_91 = arith.constant 0 : index
    %79 = vector.load %arg14[%c16, %c0_91] : memref<28x640xf32, #tpu.memory_space<vmem>>, vector<2x640xf32>
    tpu.vector_store %arg14[%c16, %c0_91], %78 {strides = array<i32>} : memref<28x640xf32, #tpu.memory_space<vmem>>, vector<2x640xf32>,
    %c0_92 = arith.constant 0 : index
    %c2304_93 = arith.constant 2304 : index
    %80 = vector.load %arg11[%c0_92, %c2304_93] : memref<2x4096xf32, #tpu.memory_space<vmem>>, vector<2x640xf32>
    %c18 = arith.constant 18 : index
    %c0_94 = arith.constant 0 : index
    %81 = vector.load %arg14[%c18, %c0_94] : memref<28x640xf32, #tpu.memory_space<vmem>>, vector<2x640xf32>
    tpu.vector_store %arg14[%c18, %c0_94], %80 {strides = array<i32>} : memref<28x640xf32, #tpu.memory_space<vmem>>, vector<2x640xf32>,
    %c0_95 = arith.constant 0 : index
    %c2560_96 = arith.constant 2560 : index
    %82 = vector.load %arg11[%c0_95, %c2560_96] : memref<2x4096xf32, #tpu.memory_space<vmem>>, vector<2x640xf32>
    %c20 = arith.constant 20 : index
    %c0_97 = arith.constant 0 : index
    %83 = vector.load %arg14[%c20, %c0_97] : memref<28x640xf32, #tpu.memory_space<vmem>>, vector<2x640xf32>
    tpu.vector_store %arg14[%c20, %c0_97], %82 {strides = array<i32>} : memref<28x640xf32, #tpu.memory_space<vmem>>, vector<2x640xf32>,
    %c0_98 = arith.constant 0 : index
    %c2816_99 = arith.constant 2816 : index
    %84 = vector.load %arg11[%c0_98, %c2816_99] : memref<2x4096xf32, #tpu.memory_space<vmem>>, vector<2x640xf32>
    %c22 = arith.constant 22 : index
    %c0_100 = arith.constant 0 : index
    %85 = vector.load %arg14[%c22, %c0_100] : memref<28x640xf32, #tpu.memory_space<vmem>>, vector<2x640xf32>
    tpu.vector_store %arg14[%c22, %c0_100], %84 {strides = array<i32>} : memref<28x640xf32, #tpu.memory_space<vmem>>, vector<2x640xf32>,
    %c0_101 = arith.constant 0 : index
    %c3072_102 = arith.constant 3072 : index
    %86 = vector.load %arg11[%c0_101, %c3072_102] : memref<2x4096xf32, #tpu.memory_space<vmem>>, vector<2x640xf32>
    %c24 = arith.constant 24 : index
    %c0_103 = arith.constant 0 : index
    %87 = vector.load %arg14[%c24, %c0_103] : memref<28x640xf32, #tpu.memory_space<vmem>>, vector<2x640xf32>
    tpu.vector_store %arg14[%c24, %c0_103], %86 {strides = array<i32>} : memref<28x640xf32, #tpu.memory_space<vmem>>, vector<2x640xf32>,
    %c0_104 = arith.constant 0 : index
    %c3328_105 = arith.constant 3328 : index
    %88 = vector.load %arg11[%c0_104, %c3328_105] : memref<2x4096xf32, #tpu.memory_space<vmem>>, vector<2x640xf32>
    %c26 = arith.constant 26 : index
    %c0_106 = arith.constant 0 : index
    %89 = vector.load %arg14[%c26, %c0_106] : memref<28x640xf32, #tpu.memory_space<vmem>>, vector<2x640xf32>
    tpu.vector_store %arg14[%c26, %c0_106], %88 {strides = array<i32>} : memref<28x640xf32, #tpu.memory_space<vmem>>, vector<2x640xf32>,
    %c0_107 = arith.constant 0 : index
    %c0_108 = arith.constant 0 : index
    %90 = vector.load %arg14[%c0_107, %c0_108] : memref<28x640xf32, #tpu.memory_space<vmem>>, vector<28x640xf32>
    %91 = arith.truncf %90 : vector<28x640xf32> to vector<28x640xbf16>
    %c0_109 = arith.constant 0 : index
    %c0_110 = arith.constant 0 : index
    %92 = vector.load %arg2[%c0_109, %c0_110] : memref<640x128xbf16, #tpu.memory_space<vmem>>, vector<640x128xbf16>
    %cst_111 = arith.constant dense<0.000000e+00> : vector<28x128xf32>
    %93 = tpu.matmul %91, %92, %cst_111 {dimension_numbers = #tpu.dot_dimension_numbers<[1], [0], [0], [1], [0, 0, 1, 1], [], []>} : vector<28x640xbf16>, vector<640x128xbf16>, vector<28x128xf32> -> vector<28x128xf32>
    %c0_112 = arith.constant 0 : index
    %c0_113 = arith.constant 0 : index
    %94 = vector.load %arg3[%c0_112, %c0_113] : memref<1x128xf32, #tpu.memory_space<vmem>>, vector<1x128xf32>
    %95 = vector.broadcast %94 : vector<1x128xf32> to vector<28x128xf32>
    %96 = arith.addf %93, %95 : vector<28x128xf32>
    %cst_114 = arith.constant 0.000000e+00 : f32
    %97 = vector.broadcast %cst_114 : f32 to vector<28x128xf32>
    %98 = arith.maximumf %96, %97 : vector<28x128xf32>
    %99 = vector.extract_strided_slice %98 {offsets = [0, 0], sizes = [2, 128], strides = [1, 1]} : vector<28x128xf32> to vector<2x128xf32>
    %c0_115 = arith.constant 0 : index
    %c256_116 = arith.constant 256 : index
    %100 = vector.load %arg12[%c0_115, %c256_116] : memref<2x2304xf32, #tpu.memory_space<vmem>>, vector<2x128xf32>
    tpu.vector_store %arg12[%c0_115, %c256_116], %99 {strides = array<i32>} : memref<2x2304xf32, #tpu.memory_space<vmem>>, vector<2x128xf32>,
    %101 = vector.extract_strided_slice %98 {offsets = [2, 0], sizes = [2, 128], strides = [1, 1]} : vector<28x128xf32> to vector<2x128xf32>
    %c0_117 = arith.constant 0 : index
    %c384_118 = arith.constant 384 : index
    %102 = vector.load %arg12[%c0_117, %c384_118] : memref<2x2304xf32, #tpu.memory_space<vmem>>, vector<2x128xf32>
    tpu.vector_store %arg12[%c0_117, %c384_118], %101 {strides = array<i32>} : memref<2x2304xf32, #tpu.memory_space<vmem>>, vector<2x128xf32>,
    %103 = vector.extract_strided_slice %98 {offsets = [4, 0], sizes = [2, 128], strides = [1, 1]} : vector<28x128xf32> to vector<2x128xf32>
    %c0_119 = arith.constant 0 : index
    %c512_120 = arith.constant 512 : index
    %104 = vector.load %arg12[%c0_119, %c512_120] : memref<2x2304xf32, #tpu.memory_space<vmem>>, vector<2x128xf32>
    tpu.vector_store %arg12[%c0_119, %c512_120], %103 {strides = array<i32>} : memref<2x2304xf32, #tpu.memory_space<vmem>>, vector<2x128xf32>,
    %105 = vector.extract_strided_slice %98 {offsets = [6, 0], sizes = [2, 128], strides = [1, 1]} : vector<28x128xf32> to vector<2x128xf32>
    %c0_121 = arith.constant 0 : index
    %c640_122 = arith.constant 640 : index
    %106 = vector.load %arg12[%c0_121, %c640_122] : memref<2x2304xf32, #tpu.memory_space<vmem>>, vector<2x128xf32>
    tpu.vector_store %arg12[%c0_121, %c640_122], %105 {strides = array<i32>} : memref<2x2304xf32, #tpu.memory_space<vmem>>, vector<2x128xf32>,
    %107 = vector.extract_strided_slice %98 {offsets = [8, 0], sizes = [2, 128], strides = [1, 1]} : vector<28x128xf32> to vector<2x128xf32>
    %c0_123 = arith.constant 0 : index
    %c768_124 = arith.constant 768 : index
    %108 = vector.load %arg12[%c0_123, %c768_124] : memref<2x2304xf32, #tpu.memory_space<vmem>>, vector<2x128xf32>
    tpu.vector_store %arg12[%c0_123, %c768_124], %107 {strides = array<i32>} : memref<2x2304xf32, #tpu.memory_space<vmem>>, vector<2x128xf32>,
    %109 = vector.extract_strided_slice %98 {offsets = [10, 0], sizes = [2, 128], strides = [1, 1]} : vector<28x128xf32> to vector<2x128xf32>
    %c0_125 = arith.constant 0 : index
    %c896_126 = arith.constant 896 : index
    %110 = vector.load %arg12[%c0_125, %c896_126] : memref<2x2304xf32, #tpu.memory_space<vmem>>, vector<2x128xf32>
    tpu.vector_store %arg12[%c0_125, %c896_126], %109 {strides = array<i32>} : memref<2x2304xf32, #tpu.memory_space<vmem>>, vector<2x128xf32>,
    %111 = vector.extract_strided_slice %98 {offsets = [12, 0], sizes = [2, 128], strides = [1, 1]} : vector<28x128xf32> to vector<2x128xf32>
    %c0_127 = arith.constant 0 : index
    %c1024_128 = arith.constant 1024 : index
    %112 = vector.load %arg12[%c0_127, %c1024_128] : memref<2x2304xf32, #tpu.memory_space<vmem>>, vector<2x128xf32>
    tpu.vector_store %arg12[%c0_127, %c1024_128], %111 {strides = array<i32>} : memref<2x2304xf32, #tpu.memory_space<vmem>>, vector<2x128xf32>,
    %113 = vector.extract_strided_slice %98 {offsets = [14, 0], sizes = [2, 128], strides = [1, 1]} : vector<28x128xf32> to vector<2x128xf32>
    %c0_129 = arith.constant 0 : index
    %c1152_130 = arith.constant 1152 : index
    %114 = vector.load %arg12[%c0_129, %c1152_130] : memref<2x2304xf32, #tpu.memory_space<vmem>>, vector<2x128xf32>
    tpu.vector_store %arg12[%c0_129, %c1152_130], %113 {strides = array<i32>} : memref<2x2304xf32, #tpu.memory_space<vmem>>, vector<2x128xf32>,
    %115 = vector.extract_strided_slice %98 {offsets = [16, 0], sizes = [2, 128], strides = [1, 1]} : vector<28x128xf32> to vector<2x128xf32>
    %c0_131 = arith.constant 0 : index
    %c1280_132 = arith.constant 1280 : index
    %116 = vector.load %arg12[%c0_131, %c1280_132] : memref<2x2304xf32, #tpu.memory_space<vmem>>, vector<2x128xf32>
    tpu.vector_store %arg12[%c0_131, %c1280_132], %115 {strides = array<i32>} : memref<2x2304xf32, #tpu.memory_space<vmem>>, vector<2x128xf32>,
    %117 = vector.extract_strided_slice %98 {offsets = [18, 0], sizes = [2, 128], strides = [1, 1]} : vector<28x128xf32> to vector<2x128xf32>
    %c0_133 = arith.constant 0 : index
    %c1408_134 = arith.constant 1408 : index
    %118 = vector.load %arg12[%c0_133, %c1408_134] : memref<2x2304xf32, #tpu.memory_space<vmem>>, vector<2x128xf32>
    tpu.vector_store %arg12[%c0_133, %c1408_134], %117 {strides = array<i32>} : memref<2x2304xf32, #tpu.memory_space<vmem>>, vector<2x128xf32>,
    %119 = vector.extract_strided_slice %98 {offsets = [20, 0], sizes = [2, 128], strides = [1, 1]} : vector<28x128xf32> to vector<2x128xf32>
    %c0_135 = arith.constant 0 : index
    %c1536_136 = arith.constant 1536 : index
    %120 = vector.load %arg12[%c0_135, %c1536_136] : memref<2x2304xf32, #tpu.memory_space<vmem>>, vector<2x128xf32>
    tpu.vector_store %arg12[%c0_135, %c1536_136], %119 {strides = array<i32>} : memref<2x2304xf32, #tpu.memory_space<vmem>>, vector<2x128xf32>,
    %121 = vector.extract_strided_slice %98 {offsets = [22, 0], sizes = [2, 128], strides = [1, 1]} : vector<28x128xf32> to vector<2x128xf32>
    %c0_137 = arith.constant 0 : index
    %c1664_138 = arith.constant 1664 : index
    %122 = vector.load %arg12[%c0_137, %c1664_138] : memref<2x2304xf32, #tpu.memory_space<vmem>>, vector<2x128xf32>
    tpu.vector_store %arg12[%c0_137, %c1664_138], %121 {strides = array<i32>} : memref<2x2304xf32, #tpu.memory_space<vmem>>, vector<2x128xf32>,
    %123 = vector.extract_strided_slice %98 {offsets = [24, 0], sizes = [2, 128], strides = [1, 1]} : vector<28x128xf32> to vector<2x128xf32>
    %c0_139 = arith.constant 0 : index
    %c1792_140 = arith.constant 1792 : index
    %124 = vector.load %arg12[%c0_139, %c1792_140] : memref<2x2304xf32, #tpu.memory_space<vmem>>, vector<2x128xf32>
    tpu.vector_store %arg12[%c0_139, %c1792_140], %123 {strides = array<i32>} : memref<2x2304xf32, #tpu.memory_space<vmem>>, vector<2x128xf32>,
    %125 = vector.extract_strided_slice %98 {offsets = [26, 0], sizes = [2, 128], strides = [1, 1]} : vector<28x128xf32> to vector<2x128xf32>
    %c0_141 = arith.constant 0 : index
    %c1920_142 = arith.constant 1920 : index
    %126 = vector.load %arg12[%c0_141, %c1920_142] : memref<2x2304xf32, #tpu.memory_space<vmem>>, vector<2x128xf32>
    tpu.vector_store %arg12[%c0_141, %c1920_142], %125 {strides = array<i32>} : memref<2x2304xf32, #tpu.memory_space<vmem>>, vector<2x128xf32>,
    %c0_143 = arith.constant 0 : index
    %c0_144 = arith.constant 0 : index
    %127 = vector.load %arg12[%c0_143, %c0_144] : memref<2x2304xf32, #tpu.memory_space<vmem>>, vector<2x640xf32>
    %c0_145 = arith.constant 0 : index
    %c0_146 = arith.constant 0 : index
    %128 = vector.load %arg14[%c0_145, %c0_146] : memref<28x640xf32, #tpu.memory_space<vmem>>, vector<2x640xf32>
    tpu.vector_store %arg14[%c0_145, %c0_146], %127 {strides = array<i32>} : memref<28x640xf32, #tpu.memory_space<vmem>>, vector<2x640xf32>,
    %c0_147 = arith.constant 0 : index
    %c256_148 = arith.constant 256 : index
    %129 = vector.load %arg12[%c0_147, %c256_148] : memref<2x2304xf32, #tpu.memory_space<vmem>>, vector<2x640xf32>
    %c2_149 = arith.constant 2 : index
    %c0_150 = arith.constant 0 : index
    %130 = vector.load %arg14[%c2_149, %c0_150] : memref<28x640xf32, #tpu.memory_space<vmem>>, vector<2x640xf32>
    tpu.vector_store %arg14[%c2_149, %c0_150], %129 {strides = array<i32>} : memref<28x640xf32, #tpu.memory_space<vmem>>, vector<2x640xf32>,
    %c0_151 = arith.constant 0 : index
    %c512_152 = arith.constant 512 : index
    %131 = vector.load %arg12[%c0_151, %c512_152] : memref<2x2304xf32, #tpu.memory_space<vmem>>, vector<2x640xf32>
    %c4_153 = arith.constant 4 : index
    %c0_154 = arith.constant 0 : index
    %132 = vector.load %arg14[%c4_153, %c0_154] : memref<28x640xf32, #tpu.memory_space<vmem>>, vector<2x640xf32>
    tpu.vector_store %arg14[%c4_153, %c0_154], %131 {strides = array<i32>} : memref<28x640xf32, #tpu.memory_space<vmem>>, vector<2x640xf32>,
    %c0_155 = arith.constant 0 : index
    %c768_156 = arith.constant 768 : index
    %133 = vector.load %arg12[%c0_155, %c768_156] : memref<2x2304xf32, #tpu.memory_space<vmem>>, vector<2x640xf32>
    %c6_157 = arith.constant 6 : index
    %c0_158 = arith.constant 0 : index
    %134 = vector.load %arg14[%c6_157, %c0_158] : memref<28x640xf32, #tpu.memory_space<vmem>>, vector<2x640xf32>
    tpu.vector_store %arg14[%c6_157, %c0_158], %133 {strides = array<i32>} : memref<28x640xf32, #tpu.memory_space<vmem>>, vector<2x640xf32>,
    %c0_159 = arith.constant 0 : index
    %c1024_160 = arith.constant 1024 : index
    %135 = vector.load %arg12[%c0_159, %c1024_160] : memref<2x2304xf32, #tpu.memory_space<vmem>>, vector<2x640xf32>
    %c8_161 = arith.constant 8 : index
    %c0_162 = arith.constant 0 : index
    %136 = vector.load %arg14[%c8_161, %c0_162] : memref<28x640xf32, #tpu.memory_space<vmem>>, vector<2x640xf32>
    tpu.vector_store %arg14[%c8_161, %c0_162], %135 {strides = array<i32>} : memref<28x640xf32, #tpu.memory_space<vmem>>, vector<2x640xf32>,
    %c0_163 = arith.constant 0 : index
    %c1280_164 = arith.constant 1280 : index
    %137 = vector.load %arg12[%c0_163, %c1280_164] : memref<2x2304xf32, #tpu.memory_space<vmem>>, vector<2x640xf32>
    %c10_165 = arith.constant 10 : index
    %c0_166 = arith.constant 0 : index
    %138 = vector.load %arg14[%c10_165, %c0_166] : memref<28x640xf32, #tpu.memory_space<vmem>>, vector<2x640xf32>
    tpu.vector_store %arg14[%c10_165, %c0_166], %137 {strides = array<i32>} : memref<28x640xf32, #tpu.memory_space<vmem>>, vector<2x640xf32>,
    %c0_167 = arith.constant 0 : index
    %c1536_168 = arith.constant 1536 : index
    %139 = vector.load %arg12[%c0_167, %c1536_168] : memref<2x2304xf32, #tpu.memory_space<vmem>>, vector<2x640xf32>
    %c12_169 = arith.constant 12 : index
    %c0_170 = arith.constant 0 : index
    %140 = vector.load %arg14[%c12_169, %c0_170] : memref<28x640xf32, #tpu.memory_space<vmem>>, vector<2x640xf32>
    tpu.vector_store %arg14[%c12_169, %c0_170], %139 {strides = array<i32>} : memref<28x640xf32, #tpu.memory_space<vmem>>, vector<2x640xf32>,
    %c0_171 = arith.constant 0 : index
    %c0_172 = arith.constant 0 : index
    %141 = vector.load %arg14[%c0_171, %c0_172] : memref<28x640xf32, #tpu.memory_space<vmem>>, vector<14x640xf32>
    %142 = arith.truncf %141 : vector<14x640xf32> to vector<14x640xbf16>
    %c0_173 = arith.constant 0 : index
    %c0_174 = arith.constant 0 : index
    %143 = vector.load %arg4[%c0_173, %c0_174] : memref<640x128xbf16, #tpu.memory_space<vmem>>, vector<640x128xbf16>
    %cst_175 = arith.constant dense<0.000000e+00> : vector<14x128xf32>
    %144 = tpu.matmul %142, %143, %cst_175 {dimension_numbers = #tpu.dot_dimension_numbers<[1], [0], [0], [1], [0, 0, 1, 1], [], []>} : vector<14x640xbf16>, vector<640x128xbf16>, vector<14x128xf32> -> vector<14x128xf32>
    %c0_176 = arith.constant 0 : index
    %c0_177 = arith.constant 0 : index
    %145 = vector.load %arg5[%c0_176, %c0_177] : memref<1x128xf32, #tpu.memory_space<vmem>>, vector<1x128xf32>
    %146 = vector.broadcast %145 : vector<1x128xf32> to vector<14x128xf32>
    %147 = arith.addf %144, %146 : vector<14x128xf32>
    %cst_178 = arith.constant 0.000000e+00 : f32
    %148 = vector.broadcast %cst_178 : f32 to vector<14x128xf32>
    %149 = arith.maximumf %147, %148 : vector<14x128xf32>
    %150 = vector.extract_strided_slice %149 {offsets = [0, 0], sizes = [2, 128], strides = [1, 1]} : vector<14x128xf32> to vector<2x128xf32>
    %c0_179 = arith.constant 0 : index
    %c256_180 = arith.constant 256 : index
    %151 = vector.load %arg13[%c0_179, %c256_180] : memref<2x1408xf32, #tpu.memory_space<vmem>>, vector<2x128xf32>
    tpu.vector_store %arg13[%c0_179, %c256_180], %150 {strides = array<i32>} : memref<2x1408xf32, #tpu.memory_space<vmem>>, vector<2x128xf32>,
    %152 = vector.extract_strided_slice %149 {offsets = [2, 0], sizes = [2, 128], strides = [1, 1]} : vector<14x128xf32> to vector<2x128xf32>
    %c0_181 = arith.constant 0 : index
    %c384_182 = arith.constant 384 : index
    %153 = vector.load %arg13[%c0_181, %c384_182] : memref<2x1408xf32, #tpu.memory_space<vmem>>, vector<2x128xf32>
    tpu.vector_store %arg13[%c0_181, %c384_182], %152 {strides = array<i32>} : memref<2x1408xf32, #tpu.memory_space<vmem>>, vector<2x128xf32>,
    %154 = vector.extract_strided_slice %149 {offsets = [4, 0], sizes = [2, 128], strides = [1, 1]} : vector<14x128xf32> to vector<2x128xf32>
    %c0_183 = arith.constant 0 : index
    %c512_184 = arith.constant 512 : index
    %155 = vector.load %arg13[%c0_183, %c512_184] : memref<2x1408xf32, #tpu.memory_space<vmem>>, vector<2x128xf32>
    tpu.vector_store %arg13[%c0_183, %c512_184], %154 {strides = array<i32>} : memref<2x1408xf32, #tpu.memory_space<vmem>>, vector<2x128xf32>,
    %156 = vector.extract_strided_slice %149 {offsets = [6, 0], sizes = [2, 128], strides = [1, 1]} : vector<14x128xf32> to vector<2x128xf32>
    %c0_185 = arith.constant 0 : index
    %c640_186 = arith.constant 640 : index
    %157 = vector.load %arg13[%c0_185, %c640_186] : memref<2x1408xf32, #tpu.memory_space<vmem>>, vector<2x128xf32>
    tpu.vector_store %arg13[%c0_185, %c640_186], %156 {strides = array<i32>} : memref<2x1408xf32, #tpu.memory_space<vmem>>, vector<2x128xf32>,
    %158 = vector.extract_strided_slice %149 {offsets = [8, 0], sizes = [2, 128], strides = [1, 1]} : vector<14x128xf32> to vector<2x128xf32>
    %c0_187 = arith.constant 0 : index
    %c768_188 = arith.constant 768 : index
    %159 = vector.load %arg13[%c0_187, %c768_188] : memref<2x1408xf32, #tpu.memory_space<vmem>>, vector<2x128xf32>
    tpu.vector_store %arg13[%c0_187, %c768_188], %158 {strides = array<i32>} : memref<2x1408xf32, #tpu.memory_space<vmem>>, vector<2x128xf32>,
    %160 = vector.extract_strided_slice %149 {offsets = [10, 0], sizes = [2, 128], strides = [1, 1]} : vector<14x128xf32> to vector<2x128xf32>
    %c0_189 = arith.constant 0 : index
    %c896_190 = arith.constant 896 : index
    %161 = vector.load %arg13[%c0_189, %c896_190] : memref<2x1408xf32, #tpu.memory_space<vmem>>, vector<2x128xf32>
    tpu.vector_store %arg13[%c0_189, %c896_190], %160 {strides = array<i32>} : memref<2x1408xf32, #tpu.memory_space<vmem>>, vector<2x128xf32>,
    %162 = vector.extract_strided_slice %149 {offsets = [12, 0], sizes = [2, 128], strides = [1, 1]} : vector<14x128xf32> to vector<2x128xf32>
    %c0_191 = arith.constant 0 : index
    %c1024_192 = arith.constant 1024 : index
    %163 = vector.load %arg13[%c0_191, %c1024_192] : memref<2x1408xf32, #tpu.memory_space<vmem>>, vector<2x128xf32>
    tpu.vector_store %arg13[%c0_191, %c1024_192], %162 {strides = array<i32>} : memref<2x1408xf32, #tpu.memory_space<vmem>>, vector<2x128xf32>,
    %c0_193 = arith.constant 0 : index
    %c0_194 = arith.constant 0 : index
    %164 = vector.load %arg13[%c0_193, %c0_194] : memref<2x1408xf32, #tpu.memory_space<vmem>>, vector<2x640xf32>
    %c0_195 = arith.constant 0 : index
    %c0_196 = arith.constant 0 : index
    %165 = vector.load %arg14[%c0_195, %c0_196] : memref<28x640xf32, #tpu.memory_space<vmem>>, vector<2x640xf32>
    tpu.vector_store %arg14[%c0_195, %c0_196], %164 {strides = array<i32>} : memref<28x640xf32, #tpu.memory_space<vmem>>, vector<2x640xf32>,
    %c0_197 = arith.constant 0 : index
    %c256_198 = arith.constant 256 : index
    %166 = vector.load %arg13[%c0_197, %c256_198] : memref<2x1408xf32, #tpu.memory_space<vmem>>, vector<2x640xf32>
    %c2_199 = arith.constant 2 : index
    %c0_200 = arith.constant 0 : index
    %167 = vector.load %arg14[%c2_199, %c0_200] : memref<28x640xf32, #tpu.memory_space<vmem>>, vector<2x640xf32>
    tpu.vector_store %arg14[%c2_199, %c0_200], %166 {strides = array<i32>} : memref<28x640xf32, #tpu.memory_space<vmem>>, vector<2x640xf32>,
    %c0_201 = arith.constant 0 : index
    %c512_202 = arith.constant 512 : index
    %168 = vector.load %arg13[%c0_201, %c512_202] : memref<2x1408xf32, #tpu.memory_space<vmem>>, vector<2x640xf32>
    %c4_203 = arith.constant 4 : index
    %c0_204 = arith.constant 0 : index
    %169 = vector.load %arg14[%c4_203, %c0_204] : memref<28x640xf32, #tpu.memory_space<vmem>>, vector<2x640xf32>
    tpu.vector_store %arg14[%c4_203, %c0_204], %168 {strides = array<i32>} : memref<28x640xf32, #tpu.memory_space<vmem>>, vector<2x640xf32>,
    %c0_205 = arith.constant 0 : index
    %c768_206 = arith.constant 768 : index
    %170 = vector.load %arg13[%c0_205, %c768_206] : memref<2x1408xf32, #tpu.memory_space<vmem>>, vector<2x640xf32>
    %c6_207 = arith.constant 6 : index
    %c0_208 = arith.constant 0 : index
    %171 = vector.load %arg14[%c6_207, %c0_208] : memref<28x640xf32, #tpu.memory_space<vmem>>, vector<2x640xf32>
    tpu.vector_store %arg14[%c6_207, %c0_208], %170 {strides = array<i32>} : memref<28x640xf32, #tpu.memory_space<vmem>>, vector<2x640xf32>,
    %c0_209 = arith.constant 0 : index
    %c0_210 = arith.constant 0 : index
    %172 = vector.load %arg14[%c0_209, %c0_210] : memref<28x640xf32, #tpu.memory_space<vmem>>, vector<8x640xf32>
    %173 = arith.truncf %172 : vector<8x640xf32> to vector<8x640xbf16>
    %c0_211 = arith.constant 0 : index
    %c0_212 = arith.constant 0 : index
    %174 = vector.load %arg6[%c0_211, %c0_212] : memref<640x128xbf16, #tpu.memory_space<vmem>>, vector<640x128xbf16>
    %cst_213 = arith.constant dense<0.000000e+00> : vector<8x128xf32>
    %175 = tpu.matmul %173, %174, %cst_213 {dimension_numbers = #tpu.dot_dimension_numbers<[1], [0], [0], [1], [0, 0, 1, 1], [], []>} : vector<8x640xbf16>, vector<640x128xbf16>, vector<8x128xf32> -> vector<8x128xf32>
    %c0_214 = arith.constant 0 : index
    %c0_215 = arith.constant 0 : index
    %176 = vector.load %arg7[%c0_214, %c0_215] : memref<1x128xf32, #tpu.memory_space<vmem>>, vector<1x128xf32>
    %177 = vector.broadcast %176 : vector<1x128xf32> to vector<8x128xf32>
    %178 = arith.addf %175, %177 : vector<8x128xf32>
    %cst_216 = arith.constant 0.000000e+00 : f32
    %179 = vector.broadcast %cst_216 : f32 to vector<8x128xf32>
    %180 = arith.maximumf %178, %179 : vector<8x128xf32>
    %181 = vector.extract_strided_slice %180 {offsets = [0, 0], sizes = [2, 128], strides = [1, 1]} : vector<8x128xf32> to vector<2x128xf32>
    %c0_217 = arith.constant 0 : index
    %c0_218 = arith.constant 0 : index
    %182 = vector.load %arg15[%c0_217, %c0_218] : memref<2x512xf32, #tpu.memory_space<vmem>>, vector<2x128xf32>
    tpu.vector_store %arg15[%c0_217, %c0_218], %181 {strides = array<i32>} : memref<2x512xf32, #tpu.memory_space<vmem>>, vector<2x128xf32>,
    %183 = vector.extract_strided_slice %180 {offsets = [2, 0], sizes = [2, 128], strides = [1, 1]} : vector<8x128xf32> to vector<2x128xf32>
    %c0_219 = arith.constant 0 : index
    %c128 = arith.constant 128 : index
    %184 = vector.load %arg15[%c0_219, %c128] : memref<2x512xf32, #tpu.memory_space<vmem>>, vector<2x128xf32>
    tpu.vector_store %arg15[%c0_219, %c128], %183 {strides = array<i32>} : memref<2x512xf32, #tpu.memory_space<vmem>>, vector<2x128xf32>,
    %185 = vector.extract_strided_slice %180 {offsets = [4, 0], sizes = [2, 128], strides = [1, 1]} : vector<8x128xf32> to vector<2x128xf32>
    %c0_220 = arith.constant 0 : index
    %c256_221 = arith.constant 256 : index
    %186 = vector.load %arg15[%c0_220, %c256_221] : memref<2x512xf32, #tpu.memory_space<vmem>>, vector<2x128xf32>
    tpu.vector_store %arg15[%c0_220, %c256_221], %185 {strides = array<i32>} : memref<2x512xf32, #tpu.memory_space<vmem>>, vector<2x128xf32>,
    %187 = vector.extract_strided_slice %180 {offsets = [6, 0], sizes = [2, 128], strides = [1, 1]} : vector<8x128xf32> to vector<2x128xf32>
    %c0_222 = arith.constant 0 : index
    %c384_223 = arith.constant 384 : index
    %188 = vector.load %arg15[%c0_222, %c384_223] : memref<2x512xf32, #tpu.memory_space<vmem>>, vector<2x128xf32>
    tpu.vector_store %arg15[%c0_222, %c384_223], %187 {strides = array<i32>} : memref<2x512xf32, #tpu.memory_space<vmem>>, vector<2x128xf32>,
    %c0_224 = arith.constant 0 : index
    %c0_225 = arith.constant 0 : index
    %189 = vector.load %arg15[%c0_224, %c0_225] : memref<2x512xf32, #tpu.memory_space<vmem>>, vector<2x512xf32>
    %190 = arith.truncf %189 : vector<2x512xf32> to vector<2x512xbf16>
    %c0_226 = arith.constant 0 : index
    %c0_227 = arith.constant 0 : index
    %191 = vector.load %arg8[%c0_226, %c0_227] : memref<512x32xbf16, #tpu.memory_space<vmem>>, vector<512x32xbf16>
    %cst_228 = arith.constant dense<0.000000e+00> : vector<2x32xf32>
    %192 = tpu.matmul %190, %191, %cst_228 {dimension_numbers = #tpu.dot_dimension_numbers<[1], [0], [0], [1], [0, 0, 1, 1], [], []>} : vector<2x512xbf16>, vector<512x32xbf16>, vector<2x32xf32> -> vector<2x32xf32>
    %c0_229 = arith.constant 0 : index
    %c0_230 = arith.constant 0 : index
    %193 = vector.load %arg9[%c0_229, %c0_230] : memref<1x32xf32, #tpu.memory_space<vmem>>, vector<1x32xf32>
    %194 = vector.broadcast %193 : vector<1x32xf32> to vector<2x32xf32>
    %195 = arith.addf %192, %194 : vector<2x32xf32>
    %cst_231 = arith.constant 0.000000e+00 : f32
    %196 = vector.broadcast %cst_231 : f32 to vector<2x32xf32>
    %197 = arith.maximumf %195, %196 : vector<2x32xf32>
    %c0_232 = arith.constant 0 : index
    %c0_233 = arith.constant 0 : index
    %198 = vector.load %arg10[%c0_232, %c0_233] : memref<2x32xf32, #tpu.memory_space<vmem>>, vector<2x32xf32>
    tpu.vector_store %arg10[%c0_232, %c0_233], %197 {strides = array<i32>} : memref<2x32xf32, #tpu.memory_space<vmem>>, vector<2x32xf32>,
    return
  }
  func.func @transform_0(%arg0: i32) -> (i32, i32) {
    %c0_i32 = arith.constant 0 : i32
    %c0_i32_0 = arith.constant 0 : i32
    %c0_i32_1 = arith.constant 0 : i32
    return %c0_i32, %c0_i32_0 : i32, i32
  }
  func.func @transform_1(%arg0: i32) -> (i32, i32) {
    %c0_i32 = arith.constant 0 : i32
    %c0_i32_0 = arith.constant 0 : i32
    %c0_i32_1 = arith.constant 0 : i32
    return %c0_i32, %c0_i32_0 : i32, i32
  }
  func.func @transform_2(%arg0: i32) -> (i32, i32) {
    %c0_i32 = arith.constant 0 : i32
    %c0_i32_0 = arith.constant 0 : i32
    %c0_i32_1 = arith.constant 0 : i32
    return %c0_i32, %c0_i32_0 : i32, i32
  }
  func.func @transform_3(%arg0: i32) -> (i32, i32) {
    %c0_i32 = arith.constant 0 : i32
    %c0_i32_0 = arith.constant 0 : i32
    %c0_i32_1 = arith.constant 0 : i32
    return %c0_i32, %c0_i32_0 : i32, i32
  }
  func.func @transform_4(%arg0: i32) -> (i32, i32) {
    %c0_i32 = arith.constant 0 : i32
    %c0_i32_0 = arith.constant 0 : i32
    %c0_i32_1 = arith.constant 0 : i32
    return %c0_i32, %c0_i32_0 : i32, i32
  }
  func.func @transform_5(%arg0: i32) -> (i32, i32) {
    %c0_i32 = arith.constant 0 : i32
    %c0_i32_0 = arith.constant 0 : i32
    %c0_i32_1 = arith.constant 0 : i32
    return %c0_i32, %c0_i32_0 : i32, i32
  }
  func.func @transform_6(%arg0: i32) -> (i32, i32) {
    %c0_i32 = arith.constant 0 : i32
    %c0_i32_0 = arith.constant 0 : i32
    %c0_i32_1 = arith.constant 0 : i32
    return %c0_i32, %c0_i32_0 : i32, i32
  }
  func.func @transform_7(%arg0: i32) -> (i32, i32) {
    %c0_i32 = arith.constant 0 : i32
    %c0_i32_0 = arith.constant 0 : i32
    %c0_i32_1 = arith.constant 0 : i32
    return %c0_i32, %c0_i32_0 : i32, i32
  }
  func.func @transform_8(%arg0: i32) -> (i32, i32) {
    %c0_i32 = arith.constant 0 : i32
    %c0_i32_0 = arith.constant 0 : i32
    %c0_i32_1 = arith.constant 0 : i32
    return %c0_i32, %c0_i32_0 : i32, i32
  }
  func.func @transform_9(%arg0: i32) -> (i32, i32) {
    %c0_i32 = arith.constant 0 : i32
    %c0_i32_0 = arith.constant 0 : i32
    %c0_i32_1 = arith.constant 0 : i32
    return %c0_i32, %c0_i32_0 : i32, i32
  }
}

</mosaic_0001>

<llo_original>
// kernel: conv_encoder_forward.1
$region0: #{conv_encoder_forward.1}
  #allocation0 [shape = 'u32[]', space=smem, size = 0x4, offset = 0x4, fixed_abs, tag = 'smem constant byte address 0x4 - core index']
  #allocation1 [shape = 'u32[72,128]{1,0:T(1,128)}', space=vmem, size = 0x9000, scoped, tag = 'internal scratch']
  #allocation2 [shape = 'f32[2,4096]{1,0:T(2,128)}', space=vmem, size = 0x8000, scoped, tag = 'scratch operand']
  #allocation3 [shape = 'f32[2,2304]{1,0:T(2,128)}', space=vmem, size = 0x4800, scoped, tag = 'scratch operand']
  #allocation4 [shape = 'f32[2,1408]{1,0:T(2,128)}', space=vmem, size = 0x2c00, scoped, tag = 'scratch operand']
  #allocation5 [shape = 'f32[28,640]{1,0:T(8,128)}', space=vmem, size = 0x14000, scoped, tag = 'scratch operand']
  #allocation6 [shape = 'f32[2,512]{1,0:T(2,128)}', space=vmem, size = 0x1000, scoped, tag = 'scratch operand']
  %s0 = inlined_call_operand.vmem [shape: f32[2,784], index: 0, kind: input, shape index: {}]
  %s1 = inlined_call_operand.vmem [shape: bf16[640,128], index: 1, kind: input, shape index: {}]
  %s2 = inlined_call_operand.vmem [shape: f32[1,128], index: 2, kind: input, shape index: {}]
  %s3 = inlined_call_operand.hbm [shape: bf16[640,128], index: 3, kind: input, shape index: {}]
  %s4 = inlined_call_operand.vmem [shape: f32[1,128], index: 4, kind: input, shape index: {}]
  %s5 = inlined_call_operand.hbm [shape: bf16[640,128], index: 5, kind: input, shape index: {}]
  %s6 = inlined_call_operand.vmem [shape: f32[1,128], index: 6, kind: input, shape index: {}]
  %s7 = inlined_call_operand.vmem [shape: bf16[512,32], index: 7, kind: input, shape index: {}]
  %s8 = inlined_call_operand.vmem [shape: f32[1,32], index: 8, kind: input, shape index: {}]
  %s9 = inlined_call_operand.hbm [shape: f32[2,32], index: 9, kind: output, shape index: {}]
  %s10 = sld [smem:[#allocation0]]
  $region54: #{conv_encoder_forward.1} parent=0
    _
  %s12 = ssub.s32 1, %s10
  %s13 = scalar_select 0, %s12, %s10
  $region1: #{conv_encoder_forward.1} parent=0
    #allocation7 [shape = 'u8[163840]{0}', space=vmem, size = 0x28000, scoped, tag = 'input window, operand 3, single buffered']
    #allocation8 [shape = 's32[1]{0}', space=sflag, size = 0x4, scoped, tag = 'scoped memory for conv_encoder_forward.1']
    #allocation9 [shape = 's32[1]{0}', space=sflag, size = 0x4, scoped, tag = 'scoped memory for conv_encoder_forward.1']
    #allocation10 [shape = 'u8[163840]{0}', space=vmem, size = 0x28000, scoped, tag = 'input window, operand 5, single buffered']
    #allocation11 [shape = 's32[1]{0}', space=sflag, size = 0x4, scoped, tag = 'scoped memory for conv_encoder_forward.1']
    #allocation12 [shape = 'u8[1024]{0}', space=vmem, size = 0x400, scoped, tag = 'output window, operand 0, single buffered']
    %14 = vsyncpa [#allocation8], 0
    %15 = vsyncpa [#allocation11], 0
    %16 = vsyncpa [#allocation9], 0
    // Predicated region
    $region2: #{conv_encoder_forward.1} parent=1 // pred_check
      _
    $region3: #{conv_encoder_forward.1} parent=1 // pred_check_branch
      %18 = sbr.rel (0) target = $region5
    $region4: #{conv_encoder_forward.1} parent=1 // pred_region
      _
    $region5: #{conv_encoder_forward.1} parent=1 // pred_fallthru
      _
    // Predicated region
    $region6: #{conv_encoder_forward.1} parent=1 // pred_check
      _
    $region7: #{conv_encoder_forward.1} parent=1 // pred_check_branch
      %20 = sbr.rel (0) target = $region9
    $region8: #{conv_encoder_forward.1} parent=1 // pred_region
      _
    $region9: #{conv_encoder_forward.1} parent=1 // pred_fallthru
      _
    // Predicated region
    $region10: #{conv_encoder_forward.1} parent=1 // pred_check
      _
    $region11: #{conv_encoder_forward.1} parent=1 // pred_check_branch
      %22 = sbr.rel (0) target = $region13
    $region12: #{conv_encoder_forward.1} parent=1 // pred_region
      _
    $region13: #{conv_encoder_forward.1} parent=1 // pred_fallthru
      _
    // Predicated region
    $region14: #{conv_encoder_forward.1} parent=1 // pred_check
      _
    $region15: #{conv_encoder_forward.1} parent=1 // pred_check_branch
      %24 = sbr.rel (0) target = $region17
    $region16: #{conv_encoder_forward.1} parent=1 // pred_region
      %26 = vsyncadd [#allocation8], 0
      %s27 = sshll.u32 %s3, 4
      %s28 = int_to_ptr.hbm [resolvable:$true] %s27
      %s29 = sshll.u32 [#allocation7], 4
      %s30 = int_to_ptr.vmem [resolvable:$true] %s29
      %35 = dma.hbm_to_vmem [thread:$0]  %s28, 5120, %s30, [#allocation8], 64, 64, 4
    $region17: #{conv_encoder_forward.1} parent=1 // pred_fallthru
      _
    // Predicated region
    $region18: #{conv_encoder_forward.1} parent=1 // pred_check
      _
    $region19: #{conv_encoder_forward.1} parent=1 // pred_check_branch
      %37 = sbr.rel (0) target = $region21
    $region20: #{conv_encoder_forward.1} parent=1 // pred_region
      _
    $region21: #{conv_encoder_forward.1} parent=1 // pred_fallthru
      _
    // Predicated region
    $region22: #{conv_encoder_forward.1} parent=1 // pred_check
      _
    $region23: #{conv_encoder_forward.1} parent=1 // pred_check_branch
      %39 = sbr.rel (0) target = $region25
    $region24: #{conv_encoder_forward.1} parent=1 // pred_region
      %41 = vsyncadd [#allocation11], 0
      %s42 = sshll.u32 %s5, 4
      %s43 = int_to_ptr.hbm [resolvable:$true] %s42
      %s44 = sshll.u32 [#allocation10], 4
      %s45 = int_to_ptr.vmem [resolvable:$true] %s44
      %50 = dma.hbm_to_vmem [thread:$0]  %s43, 5120, %s45, [#allocation11], 64, 64, 4
    $region25: #{conv_encoder_forward.1} parent=1 // pred_fallthru
      _
    // Predicated region
    $region26: #{conv_encoder_forward.1} parent=1 // pred_check
      _
    $region27: #{conv_encoder_forward.1} parent=1 // pred_check_branch
      %52 = sbr.rel (0) target = $region29
    $region28: #{conv_encoder_forward.1} parent=1 // pred_region
      _
    $region29: #{conv_encoder_forward.1} parent=1 // pred_fallthru
      _
    // Predicated region
    $region30: #{conv_encoder_forward.1} parent=1 // pred_check
      _
    $region31: #{conv_encoder_forward.1} parent=1 // pred_check_branch
      %54 = sbr.rel (0) target = $region33
    $region32: #{conv_encoder_forward.1} parent=1 // pred_region
      _
    $region33: #{conv_encoder_forward.1} parent=1 // pred_fallthru
      _
    // Predicated region
    $region34: #{conv_encoder_forward.1} parent=1 // pred_check
      _
    $region35: #{conv_encoder_forward.1} parent=1 // pred_check_branch
      %56 = sbr.rel (0) target = $region37
    $region36: #{conv_encoder_forward.1} parent=1 // pred_region
      _
    $region37: #{conv_encoder_forward.1} parent=1 // pred_fallthru
      _
    // Predicated region
    $region38: #{conv_encoder_forward.1} parent=1 // pred_check
      _
    $region39: #{conv_encoder_forward.1} parent=1 // pred_check_branch
      %58 = sbr.rel (0) target = $region41
    $region40: #{conv_encoder_forward.1} parent=1 // pred_region
      %60 = dma.done [#allocation8], 5120
    $region41: #{conv_encoder_forward.1} parent=1 // pred_fallthru
      _
    // Predicated region
    $region42: #{conv_encoder_forward.1} parent=1 // pred_check
      _
    $region43: #{conv_encoder_forward.1} parent=1 // pred_check_branch
      %62 = sbr.rel (0) target = $region45
    $region44: #{conv_encoder_forward.1} parent=1 // pred_region
      %64 = dma.done [#allocation11], 5120
    $region45: #{conv_encoder_forward.1} parent=1 // pred_fallthru
      _
    %65 = vst [vmem:[#allocation2] sm:$0xff] 0.0
    %66 = vst [vmem:[#allocation2 + $0x8] sm:$0xff] 0.0
    %67 = vst [vmem:[#allocation2 + $0x10] sm:$0xff] 0.0
    %68 = vst [vmem:[#allocation2 + $0x18] sm:$0xff] 0.0
    %69 = vst [vmem:[#allocation2 + $0x20] sm:$0xff] 0.0
    %70 = vst [vmem:[#allocation2 + $0x28] sm:$0xff] 0.0
    %71 = vst [vmem:[#allocation2 + $0x30] sm:$0xff] 0.0
    %72 = vst [vmem:[#allocation2 + $0x38] sm:$0xff] 0.0
    %73 = vst [vmem:[#allocation3] sm:$0xff] 0.0
    %74 = vst [vmem:[#allocation3 + $0x8] sm:$0xff] 0.0
    %75 = vst [vmem:[#allocation3 + $0x10] sm:$0xff] 0.0
    %76 = vst [vmem:[#allocation3 + $0x18] sm:$0xff] 0.0
    %77 = vst [vmem:[#allocation3 + $0x20] sm:$0xf] 0.0
    %78 = vst [vmem:[#allocation4] sm:$0xff] 0.0
    %79 = vst [vmem:[#allocation4 + $0x8] sm:$0xff] 0.0
    %80 = vst [vmem:[#allocation4 + $0x10] sm:$0x3f] 0.0
    %v81 = vld [vmem:[%s0] sm:$0x3]
    %vm82 = vcmask 222208
    %83 = vst.msk [vmem:[#allocation2 + $0x4] sm:$0x3] %vm82, %v81
    %v84 = vld [vmem:[%s0] sm:$0x3]
    %86 = vrot.lane.b32.xlu0 %v84, 100
    %v87 = vpop.permute.xlu0 %86
    %89 = vst.msk [vmem:[#allocation2 + $0x6] sm:$0x3] %vm82, %v87
    %v90 = vld [vmem:[%s0] sm:$0x3]
    %92 = vrot.lane.b32.xlu0 %v90, 72
    %v93 = vpop.permute.xlu0 %92
    %95 = vst.msk [vmem:[#allocation2 + $0x8] sm:$0x3] %vm82, %v93
    %v96 = vld [vmem:[%s0] sm:$0x3]
    %98 = vrot.lane.b32.xlu0 %v96, 44
    %v99 = vpop.permute.xlu0 %98
    %101 = vst.msk [vmem:[#allocation2 + $0xa] sm:$0x3] %vm82, %v99
    %v102 = vld [vmem:[%s0] sm:$0xf]
    %104 = vrot.lane.b32.xlu0 %v102, 16
    %v105 = vpop.permute.xlu0 %104
    %v106 = vrot.slane %v105, 2
    %vm107 = vcmask 130048
    %v108 = vsel %vm107, %v105, %v106
    %110 = vst.msk [vmem:[#allocation2 + $0xc] sm:$0x3] %vm82, %v108
    %v111 = vld [vmem:[%s0 + $0x2] sm:$0x3]
    %113 = vrot.lane.b32.xlu0 %v111, 116
    %v114 = vpop.permute.xlu0 %113
    %116 = vst.msk [vmem:[#allocation2 + $0xe] sm:$0x3] %vm82, %v114
    %v117 = vld [vmem:[%s0 + $0x2] sm:$0x3]
    %119 = vrot.lane.b32.xlu0 %v117, 88
    %v120 = vpop.permute.xlu0 %119
    %122 = vst.msk [vmem:[#allocation2 + $0x10] sm:$0x3] %vm82, %v120
    %v123 = vld [vmem:[%s0 + $0x2] sm:$0x3]
    %125 = vrot.lane.b32.xlu0 %v123, 60
    %v126 = vpop.permute.xlu0 %125
    %128 = vst.msk [vmem:[#allocation2 + $0x12] sm:$0x3] %vm82, %v126
    %v129 = vld [vmem:[%s0 + $0x2] sm:$0x3]
    %131 = vrot.lane.b32.xlu0 %v129, 32
    %v132 = vpop.permute.xlu0 %131
    %134 = vst.msk [vmem:[#allocation2 + $0x14] sm:$0x3] %vm82, %v132
    %v135 = vld [vmem:[%s0 + $0x2] sm:$0xf]
    %137 = vrot.lane.b32.xlu0 %v135, 4
    %v138 = vpop.permute.xlu0 %137
    %v139 = vrot.slane %v138, 2
    %vm140 = vcmask 31744
    %v141 = vsel %vm140, %v138, %v139
    %143 = vst.msk [vmem:[#allocation2 + $0x16] sm:$0x3] %vm82, %v141
    %v144 = vld [vmem:[%s0 + $0x4] sm:$0x3]
    %146 = vrot.lane.b32.xlu0 %v144, 104
    %v147 = vpop.permute.xlu0 %146
    %149 = vst.msk [vmem:[#allocation2 + $0x18] sm:$0x3] %vm82, %v147
    %v150 = vld [vmem:[%s0 + $0x4] sm:$0x3]
    %152 = vrot.lane.b32.xlu0 %v150, 76
    %v153 = vpop.permute.xlu0 %152
    %155 = vst.msk [vmem:[#allocation2 + $0x1a] sm:$0x3] %vm82, %v153
    %v156 = vld [vmem:[%s0 + $0x4] sm:$0x3]
    %158 = vrot.lane.b32.xlu0 %v156, 48
    %v159 = vpop.permute.xlu0 %158
    %161 = vst.msk [vmem:[#allocation2 + $0x1c] sm:$0x3] %vm82, %v159
    %v162 = vld [vmem:[%s0 + $0x4] sm:$0xf]
    %164 = vrot.lane.b32.xlu0 %v162, 20
    %v165 = vpop.permute.xlu0 %164
    %v166 = vrot.slane %v165, 2
    %vm167 = vcmask 162816
    %v168 = vsel %vm167, %v165, %v166
    %170 = vst.msk [vmem:[#allocation2 + $0x1e] sm:$0x3] %vm82, %v168
    %v171 = vld [vmem:[%s0 + $0x6] sm:$0x3]
    %173 = vrot.lane.b32.xlu0 %v171, 120
    %v174 = vpop.permute.xlu0 %173
    %176 = vst.msk [vmem:[#allocation2 + $0x20] sm:$0x3] %vm82, %v174
    %v177 = vld [vmem:[%s0 + $0x6] sm:$0x3]
    %179 = vrot.lane.b32.xlu0 %v177, 92
    %v180 = vpop.permute.xlu0 %179
    %182 = vst.msk [vmem:[#allocation2 + $0x22] sm:$0x3] %vm82, %v180
    %v183 = vld [vmem:[%s0 + $0x6] sm:$0x3]
    %185 = vrot.lane.b32.xlu0 %v183, 64
    %v186 = vpop.permute.xlu0 %185
    %188 = vst.msk [vmem:[#allocation2 + $0x24] sm:$0x3] %vm82, %v186
    %v189 = vld [vmem:[%s0 + $0x6] sm:$0x3]
    %191 = vrot.lane.b32.xlu0 %v189, 36
    %v192 = vpop.permute.xlu0 %191
    %194 = vst.msk [vmem:[#allocation2 + $0x26] sm:$0x3] %vm82, %v192
    %v195 = vld [vmem:[%s0 + $0x6] sm:$0xf]
    %197 = vrot.lane.b32.xlu0 %v195, 8
    %v198 = vpop.permute.xlu0 %197
    %v199 = vrot.slane %v198, 2
    %vm200 = vcmask 64512
    %v201 = vsel %vm200, %v198, %v199
    %203 = vst.msk [vmem:[#allocation2 + $0x28] sm:$0x3] %vm82, %v201
    %v204 = vld [vmem:[%s0 + $0x8] sm:$0x3]
    %206 = vrot.lane.b32.xlu0 %v204, 108
    %v207 = vpop.permute.xlu0 %206
    %209 = vst.msk [vmem:[#allocation2 + $0x2a] sm:$0x3] %vm82, %v207
    %v210 = vld [vmem:[%s0 + $0x8] sm:$0x3]
    %212 = vrot.lane.b32.xlu0 %v210, 80
    %v213 = vpop.permute.xlu0 %212
    %215 = vst.msk [vmem:[#allocation2 + $0x2c] sm:$0x3] %vm82, %v213
    %v216 = vld [vmem:[%s0 + $0x8] sm:$0x3]
    %218 = vrot.lane.b32.xlu0 %v216, 52
    %v219 = vpop.permute.xlu0 %218
    %221 = vst.msk [vmem:[#allocation2 + $0x2e] sm:$0x3] %vm82, %v219
    %v222 = vld [vmem:[%s0 + $0x8] sm:$0xf]
    %224 = vrot.lane.b32.xlu0 %v222, 24
    %v225 = vpop.permute.xlu0 %224
    %v226 = vrot.slane %v225, 2
    %vm227 = vcmask 195584
    %v228 = vsel %vm227, %v225, %v226
    %230 = vst.msk [vmem:[#allocation2 + $0x30] sm:$0x3] %vm82, %v228
    %v231 = vld [vmem:[%s0 + $0xa] sm:$0x3]
    %233 = vrot.lane.b32.xlu0 %v231, 124
    %v234 = vpop.permute.xlu0 %233
    %236 = vst.msk [vmem:[#allocation2 + $0x32] sm:$0x3] %vm82, %v234
    %v237 = vld [vmem:[%s0 + $0xa] sm:$0x3]
    %239 = vrot.lane.b32.xlu0 %v237, 96
    %v240 = vpop.permute.xlu0 %239
    %242 = vst.msk [vmem:[#allocation2 + $0x34] sm:$0x3] %vm82, %v240
    %v243 = vld [vmem:[%s0 + $0xa] sm:$0x3]
    %245 = vrot.lane.b32.xlu0 %v243, 68
    %v246 = vpop.permute.xlu0 %245
    %248 = vst.msk [vmem:[#allocation2 + $0x36] sm:$0x3] %vm82, %v246
    %v249 = vld [vmem:[%s0 + $0xa] sm:$0x3]
    %251 = vrot.lane.b32.xlu0 %v249, 40
    %v252 = vpop.permute.xlu0 %251
    %254 = vst.msk [vmem:[#allocation2 + $0x38] sm:$0x3] %vm82, %v252
    %v255 = vld [vmem:[%s0 + $0xa] sm:$0xf]
    %257 = vrot.lane.b32.xlu0 %v255, 12
    %v258 = vpop.permute.xlu0 %257
    %v259 = vrot.slane %v258, 2
    %vm260 = vcmask 97280
    %v261 = vsel %vm260, %v258, %v259
    %263 = vst.msk [vmem:[#allocation2 + $0x3a] sm:$0x3] %vm82, %v261
    %v264 = vld [vmem:[#allocation2] sm:$0xff]
    %v265 = vld [vmem:[#allocation2 + $0x8] sm:$0x3]
    %268 = vst [vmem:[#allocation1] ss:$4 sm:$0xff] %v264
    %s269 = scalar_lea.vmem [#allocation1], 32
    %270 = vst [vmem:[%s269] ss:$4 sm:$0xff] %v265
    %v271 = vld.sshfl [vmem:[#allocation1] sm:$0xff pattern:$0x73625140]
    %v272 = vld.sshfl [vmem:[#allocation1 + $0x8] sm:$0xff pattern:$0x73625140]
    %v273 = vld.sshfl [vmem:[#allocation1 + $0x10] sm:$0xff pattern:$0x73625140]
    %v274 = vld.sshfl [vmem:[#allocation1 + $0x18] sm:$0xff pattern:$0x73625140]
    %v275 = vld.sshfl [vmem:[#allocation1 + $0x20] sm:$0xff pattern:$0x73625140]
    %281 = vst [vmem:[#allocation5] sm:$0x3] %v271
    %282 = vst [vmem:[#allocation5 + $0x8] sm:$0x3] %v272
    %283 = vst [vmem:[#allocation5 + $0x10] sm:$0x3] %v273
    %284 = vst [vmem:[#allocation5 + $0x18] sm:$0x3] %v274
    %285 = vst [vmem:[#allocation5 + $0x20] sm:$0x3] %v275
    %v286 = vld [vmem:[#allocation2 + $0x4] sm:$0xff]
    %v287 = vld [vmem:[#allocation2 + $0xc] sm:$0x3]
    %s290 = scalar_lea.vmem [#allocation1], 1
    %291 = vst [vmem:[%s290] ss:$4 sm:$0xff] %v286
    %s292 = scalar_lea.vmem [#allocation1], 33
    %293 = vst [vmem:[%s292] ss:$4 sm:$0xff] %v287
    %v294 = vld.sshfl [vmem:[#allocation1] sm:$0xff pattern:$0x73625140]
    %v295 = vld.sshfl [vmem:[#allocation1 + $0x8] sm:$0xff pattern:$0x73625140]
    %v296 = vld.sshfl [vmem:[#allocation1 + $0x10] sm:$0xff pattern:$0x73625140]
    %v297 = vld.sshfl [vmem:[#allocation1 + $0x18] sm:$0xff pattern:$0x73625140]
    %v298 = vld.sshfl [vmem:[#allocation1 + $0x20] sm:$0xff pattern:$0x73625140]
    %304 = vst [vmem:[#allocation5] sm:$0xc] %v294
    %305 = vst [vmem:[#allocation5 + $0x8] sm:$0xc] %v295
    %306 = vst [vmem:[#allocation5 + $0x10] sm:$0xc] %v296
    %307 = vst [vmem:[#allocation5 + $0x18] sm:$0xc] %v297
    %308 = vst [vmem:[#allocation5 + $0x20] sm:$0xc] %v298
    %v309 = vld [vmem:[#allocation2 + $0x8] sm:$0xff]
    %v310 = vld [vmem:[#allocation2 + $0x10] sm:$0x3]
    %s313 = scalar_lea.vmem [#allocation1], 2
    %314 = vst [vmem:[%s313] ss:$4 sm:$0xff] %v309
    %s315 = scalar_lea.vmem [#allocation1], 34
    %316 = vst [vmem:[%s315] ss:$4 sm:$0xff] %v310
    %v317 = vld.sshfl [vmem:[#allocation1] sm:$0xff pattern:$0x73625140]
    %v318 = vld.sshfl [vmem:[#allocation1 + $0x8] sm:$0xff pattern:$0x73625140]
    %v319 = vld.sshfl [vmem:[#allocation1 + $0x10] sm:$0xff pattern:$0x73625140]
    %v320 = vld.sshfl [vmem:[#allocation1 + $0x18] sm:$0xff pattern:$0x73625140]
    %v321 = vld.sshfl [vmem:[#allocation1 + $0x20] sm:$0xff pattern:$0x73625140]
    %327 = vst [vmem:[#allocation5] sm:$0x30] %v317
    %328 = vst [vmem:[#allocation5 + $0x8] sm:$0x30] %v318
    %329 = vst [vmem:[#allocation5 + $0x10] sm:$0x30] %v319
    %330 = vst [vmem:[#allocation5 + $0x18] sm:$0x30] %v320
    %331 = vst [vmem:[#allocation5 + $0x20] sm:$0x30] %v321
    %v332 = vld [vmem:[#allocation2 + $0xc] sm:$0xff]
    %v333 = vld [vmem:[#allocation2 + $0x14] sm:$0x3]
    %s336 = scalar_lea.vmem [#allocation1], 3
    %337 = vst [vmem:[%s336] ss:$4 sm:$0xff] %v332
    %s338 = scalar_lea.vmem [#allocation1], 35
    %339 = vst [vmem:[%s338] ss:$4 sm:$0xff] %v333
    %v340 = vld.sshfl [vmem:[#allocation1] sm:$0xff pattern:$0x73625140]
    %v341 = vld.sshfl [vmem:[#allocation1 + $0x8] sm:$0xff pattern:$0x73625140]
    %v342 = vld.sshfl [vmem:[#allocation1 + $0x10] sm:$0xff pattern:$0x73625140]
    %v343 = vld.sshfl [vmem:[#allocation1 + $0x18] sm:$0xff pattern:$0x73625140]
    %v344 = vld.sshfl [vmem:[#allocation1 + $0x20] sm:$0xff pattern:$0x73625140]
    %350 = vst [vmem:[#allocation5] sm:$0xc0] %v340
    %351 = vst [vmem:[#allocation5 + $0x8] sm:$0xc0] %v341
    %352 = vst [vmem:[#allocation5 + $0x10] sm:$0xc0] %v342
    %353 = vst [vmem:[#allocation5 + $0x18] sm:$0xc0] %v343
    %354 = vst [vmem:[#allocation5 + $0x20] sm:$0xc0] %v344
    %v355 = vld [vmem:[#allocation2 + $0x10] sm:$0xff]
    %v356 = vld [vmem:[#allocation2 + $0x18] sm:$0x3]
    %359 = vst [vmem:[#allocation1] ss:$4 sm:$0xff] %v355
    %s360 = scalar_lea.vmem [#allocation1], 32
    %361 = vst [vmem:[%s360] ss:$4 sm:$0xff] %v356
    %v362 = vld.sshfl [vmem:[#allocation1] sm:$0xff pattern:$0x73625140]
    %v363 = vld.sshfl [vmem:[#allocation1 + $0x8] sm:$0xff pattern:$0x73625140]
    %v364 = vld.sshfl [vmem:[#allocation1 + $0x10] sm:$0xff pattern:$0x73625140]
    %v365 = vld.sshfl [vmem:[#allocation1 + $0x18] sm:$0xff pattern:$0x73625140]
    %v366 = vld.sshfl [vmem:[#allocation1 + $0x20] sm:$0xff pattern:$0x73625140]
    %372 = vst [vmem:[#allocation5 + $0x28] sm:$0x3] %v362
    %373 = vst [vmem:[#allocation5 + $0x30] sm:$0x3] %v363
    %374 = vst [vmem:[#allocation5 + $0x38] sm:$0x3] %v364
    %375 = vst [vmem:[#allocation5 + $0x40] sm:$0x3] %v365
    %376 = vst [vmem:[#allocation5 + $0x48] sm:$0x3] %v366
    %v377 = vld [vmem:[#allocation2 + $0x14] sm:$0xff]
    %v378 = vld [vmem:[#allocation2 + $0x1c] sm:$0x3]
    %s381 = scalar_lea.vmem [#allocation1], 1
    %382 = vst [vmem:[%s381] ss:$4 sm:$0xff] %v377
    %s383 = scalar_lea.vmem [#allocation1], 33
    %384 = vst [vmem:[%s383] ss:$4 sm:$0xff] %v378
    %v385 = vld.sshfl [vmem:[#allocation1] sm:$0xff pattern:$0x73625140]
    %v386 = vld.sshfl [vmem:[#allocation1 + $0x8] sm:$0xff pattern:$0x73625140]
    %v387 = vld.sshfl [vmem:[#allocation1 + $0x10] sm:$0xff pattern:$0x73625140]
    %v388 = vld.sshfl [vmem:[#allocation1 + $0x18] sm:$0xff pattern:$0x73625140]
    %v389 = vld.sshfl [vmem:[#allocation1 + $0x20] sm:$0xff pattern:$0x73625140]
    %395 = vst [vmem:[#allocation5 + $0x28] sm:$0xc] %v385
    %396 = vst [vmem:[#allocation5 + $0x30] sm:$0xc] %v386
    %397 = vst [vmem:[#allocation5 + $0x38] sm:$0xc] %v387
    %398 = vst [vmem:[#allocation5 + $0x40] sm:$0xc] %v388
    %399 = vst [vmem:[#allocation5 + $0x48] sm:$0xc] %v389
    %v400 = vld [vmem:[#allocation2 + $0x18] sm:$0xff]
    %v401 = vld [vmem:[#allocation2 + $0x20] sm:$0x3]
    %s404 = scalar_lea.vmem [#allocation1], 2
    %405 = vst [vmem:[%s404] ss:$4 sm:$0xff] %v400
    %s406 = scalar_lea.vmem [#allocation1], 34
    %407 = vst [vmem:[%s406] ss:$4 sm:$0xff] %v401
    %v408 = vld.sshfl [vmem:[#allocation1] sm:$0xff pattern:$0x73625140]
    %v409 = vld.sshfl [vmem:[#allocation1 + $0x8] sm:$0xff pattern:$0x73625140]
    %v410 = vld.sshfl [vmem:[#allocation1 + $0x10] sm:$0xff pattern:$0x73625140]
    %v411 = vld.sshfl [vmem:[#allocation1 + $0x18] sm:$0xff pattern:$0x73625140]
    %v412 = vld.sshfl [vmem:[#allocation1 + $0x20] sm:$0xff pattern:$0x73625140]
    %418 = vst [vmem:[#allocation5 + $0x28] sm:$0x30] %v408
    %419 = vst [vmem:[#allocation5 + $0x30] sm:$0x30] %v409
    %420 = vst [vmem:[#allocation5 + $0x38] sm:$0x30] %v410
    %421 = vst [vmem:[#allocation5 + $0x40] sm:$0x30] %v411
    %422 = vst [vmem:[#allocation5 + $0x48] sm:$0x30] %v412
    %v423 = vld [vmem:[#allocation2 + $0x1c] sm:$0xff]
    %v424 = vld [vmem:[#allocation2 + $0x24] sm:$0x3]
    %s427 = scalar_lea.vmem [#allocation1], 3
    %428 = vst [vmem:[%s427] ss:$4 sm:$0xff] %v423
    %s429 = scalar_lea.vmem [#allocation1], 35
    %430 = vst [vmem:[%s429] ss:$4 sm:$0xff] %v424
    %v431 = vld.sshfl [vmem:[#allocation1] sm:$0xff pattern:$0x73625140]
    %v432 = vld.sshfl [vmem:[#allocation1 + $0x8] sm:$0xff pattern:$0x73625140]
    %v433 = vld.sshfl [vmem:[#allocation1 + $0x10] sm:$0xff pattern:$0x73625140]
    %v434 = vld.sshfl [vmem:[#allocation1 + $0x18] sm:$0xff pattern:$0x73625140]
    %v435 = vld.sshfl [vmem:[#allocation1 + $0x20] sm:$0xff pattern:$0x73625140]
    %441 = vst [vmem:[#allocation5 + $0x28] sm:$0xc0] %v431
    %442 = vst [vmem:[#allocation5 + $0x30] sm:$0xc0] %v432
    %443 = vst [vmem:[#allocation5 + $0x38] sm:$0xc0] %v433
    %444 = vst [vmem:[#allocation5 + $0x40] sm:$0xc0] %v434
    %445 = vst [vmem:[#allocation5 + $0x48] sm:$0xc0] %v435
    %v446 = vld [vmem:[#allocation2 + $0x20] sm:$0xff]
    %v447 = vld [vmem:[#allocation2 + $0x28] sm:$0x3]
    %450 = vst [vmem:[#allocation1] ss:$4 sm:$0xff] %v446
    %s451 = scalar_lea.vmem [#allocation1], 32
    %452 = vst [vmem:[%s451] ss:$4 sm:$0xff] %v447
    %v453 = vld.sshfl [vmem:[#allocation1] sm:$0xff pattern:$0x73625140]
    %v454 = vld.sshfl [vmem:[#allocation1 + $0x8] sm:$0xff pattern:$0x73625140]
    %v455 = vld.sshfl [vmem:[#allocation1 + $0x10] sm:$0xff pattern:$0x73625140]
    %v456 = vld.sshfl [vmem:[#allocation1 + $0x18] sm:$0xff pattern:$0x73625140]
    %v457 = vld.sshfl [vmem:[#allocation1 + $0x20] sm:$0xff pattern:$0x73625140]
    %463 = vst [vmem:[#allocation5 + $0x50] sm:$0x3] %v453
    %464 = vst [vmem:[#allocation5 + $0x58] sm:$0x3] %v454
    %465 = vst [vmem:[#allocation5 + $0x60] sm:$0x3] %v455
    %466 = vst [vmem:[#allocation5 + $0x68] sm:$0x3] %v456
    %467 = vst [vmem:[#allocation5 + $0x70] sm:$0x3] %v457
    %v468 = vld [vmem:[#allocation2 + $0x24] sm:$0xff]
    %v469 = vld [vmem:[#allocation2 + $0x2c] sm:$0x3]
    %s472 = scalar_lea.vmem [#allocation1], 1
    %473 = vst [vmem:[%s472] ss:$4 sm:$0xff] %v468
    %s474 = scalar_lea.vmem [#allocation1], 33
    %475 = vst [vmem:[%s474] ss:$4 sm:$0xff] %v469
    %v476 = vld.sshfl [vmem:[#allocation1] sm:$0xff pattern:$0x73625140]
    %v477 = vld.sshfl [vmem:[#allocation1 + $0x8] sm:$0xff pattern:$0x73625140]
    %v478 = vld.sshfl [vmem:[#allocation1 + $0x10] sm:$0xff pattern:$0x73625140]
    %v479 = vld.sshfl [vmem:[#allocation1 + $0x18] sm:$0xff pattern:$0x73625140]
    %v480 = vld.sshfl [vmem:[#allocation1 + $0x20] sm:$0xff pattern:$0x73625140]
    %486 = vst [vmem:[#allocation5 + $0x50] sm:$0xc] %v476
    %487 = vst [vmem:[#allocation5 + $0x58] sm:$0xc] %v477
    %488 = vst [vmem:[#allocation5 + $0x60] sm:$0xc] %v478
    %489 = vst [vmem:[#allocation5 + $0x68] sm:$0xc] %v479
    %490 = vst [vmem:[#allocation5 + $0x70] sm:$0xc] %v480
    %v491 = vld [vmem:[#allocation2 + $0x28] sm:$0xff]
    %v492 = vld [vmem:[#allocation2 + $0x30] sm:$0x3]
    %s495 = scalar_lea.vmem [#allocation1], 2
    %496 = vst [vmem:[%s495] ss:$4 sm:$0xff] %v491
    %s497 = scalar_lea.vmem [#allocation1], 34
    %498 = vst [vmem:[%s497] ss:$4 sm:$0xff] %v492
    %v499 = vld.sshfl [vmem:[#allocation1] sm:$0xff pattern:$0x73625140]
    %v500 = vld.sshfl [vmem:[#allocation1 + $0x8] sm:$0xff pattern:$0x73625140]
    %v501 = vld.sshfl [vmem:[#allocation1 + $0x10] sm:$0xff pattern:$0x73625140]
    %v502 = vld.sshfl [vmem:[#allocation1 + $0x18] sm:$0xff pattern:$0x73625140]
    %v503 = vld.sshfl [vmem:[#allocation1 + $0x20] sm:$0xff pattern:$0x73625140]
    %509 = vst [vmem:[#allocation5 + $0x50] sm:$0x30] %v499
    %510 = vst [vmem:[#allocation5 + $0x58] sm:$0x30] %v500
    %511 = vst [vmem:[#allocation5 + $0x60] sm:$0x30] %v501
    %512 = vst [vmem:[#allocation5 + $0x68] sm:$0x30] %v502
    %513 = vst [vmem:[#allocation5 + $0x70] sm:$0x30] %v503
    %v514 = vld [vmem:[#allocation2 + $0x2c] sm:$0xff]
    %v515 = vld [vmem:[#allocation2 + $0x34] sm:$0x3]
    %s518 = scalar_lea.vmem [#allocation1], 3
    %519 = vst [vmem:[%s518] ss:$4 sm:$0xff] %v514
    %s520 = scalar_lea.vmem [#allocation1], 35
    %521 = vst [vmem:[%s520] ss:$4 sm:$0xff] %v515
    %v522 = vld.sshfl [vmem:[#allocation1] sm:$0xff pattern:$0x73625140]
    %v523 = vld.sshfl [vmem:[#allocation1 + $0x8] sm:$0xff pattern:$0x73625140]
    %v524 = vld.sshfl [vmem:[#allocation1 + $0x10] sm:$0xff pattern:$0x73625140]
    %v525 = vld.sshfl [vmem:[#allocation1 + $0x18] sm:$0xff pattern:$0x73625140]
    %v526 = vld.sshfl [vmem:[#allocation1 + $0x20] sm:$0xff pattern:$0x73625140]
    %532 = vst [vmem:[#allocation5 + $0x50] sm:$0xc0] %v522
    %533 = vst [vmem:[#allocation5 + $0x58] sm:$0xc0] %v523
    %534 = vst [vmem:[#allocation5 + $0x60] sm:$0xc0] %v524
    %535 = vst [vmem:[#allocation5 + $0x68] sm:$0xc0] %v525
    %536 = vst [vmem:[#allocation5 + $0x70] sm:$0xc0] %v526
    %v537 = vld [vmem:[#allocation2 + $0x30] sm:$0xff]
    %v538 = vld [vmem:[#allocation2 + $0x38] sm:$0x3]
    %541 = vst [vmem:[#allocation1] ss:$4 sm:$0xff] %v537
    %s542 = scalar_lea.vmem [#allocation1], 32
    %543 = vst [vmem:[%s542] ss:$4 sm:$0xff] %v538
    %v544 = vld.sshfl [vmem:[#allocation1] sm:$0xff pattern:$0x73625140]
    %v545 = vld.sshfl [vmem:[#allocation1 + $0x8] sm:$0xff pattern:$0x73625140]
    %v546 = vld.sshfl [vmem:[#allocation1 + $0x10] sm:$0xff pattern:$0x73625140]
    %v547 = vld.sshfl [vmem:[#allocation1 + $0x18] sm:$0xff pattern:$0x73625140]
    %v548 = vld.sshfl [vmem:[#allocation1 + $0x20] sm:$0xff pattern:$0x73625140]
    %554 = vst [vmem:[#allocation5 + $0x78] sm:$0x3] %v544
    %555 = vst [vmem:[#allocation5 + $0x80] sm:$0x3] %v545
    %556 = vst [vmem:[#allocation5 + $0x88] sm:$0x3] %v546
    %557 = vst [vmem:[#allocation5 + $0x90] sm:$0x3] %v547
    %558 = vst [vmem:[#allocation5 + $0x98] sm:$0x3] %v548
    %v559 = vld [vmem:[#allocation2 + $0x34] sm:$0xff]
    %v560 = vld [vmem:[#allocation2 + $0x3c] sm:$0x3]
    %s563 = scalar_lea.vmem [#allocation1], 1
    %564 = vst [vmem:[%s563] ss:$4 sm:$0xff] %v559
    %s565 = scalar_lea.vmem [#allocation1], 33
    %566 = vst [vmem:[%s565] ss:$4 sm:$0xff] %v560
    %v567 = vld.sshfl [vmem:[#allocation1] sm:$0xff pattern:$0x73625140]
    %v568 = vld.sshfl [vmem:[#allocation1 + $0x8] sm:$0xff pattern:$0x73625140]
    %v569 = vld.sshfl [vmem:[#allocation1 + $0x10] sm:$0xff pattern:$0x73625140]
    %v570 = vld.sshfl [vmem:[#allocation1 + $0x18] sm:$0xff pattern:$0x73625140]
    %v571 = vld.sshfl [vmem:[#allocation1 + $0x20] sm:$0xff pattern:$0x73625140]
    %577 = vst [vmem:[#allocation5 + $0x78] sm:$0xc] %v567
    %578 = vst [vmem:[#allocation5 + $0x80] sm:$0xc] %v568
    %579 = vst [vmem:[#allocation5 + $0x88] sm:$0xc] %v569
    %580 = vst [vmem:[#allocation5 + $0x90] sm:$0xc] %v570
    %581 = vst [vmem:[#allocation5 + $0x98] sm:$0xc] %v571
    %v582 = vld [vmem:[#allocation5] sm:$0xff]
    %v583 = vld [vmem:[#allocation5 + $0x8] sm:$0xff]
    %v584 = vld [vmem:[#allocation5 + $0x10] sm:$0xff]
    %v585 = vld [vmem:[#allocation5 + $0x18] sm:$0xff]
    %v586 = vld [vmem:[#allocation5 + $0x20] sm:$0xff]
    %v587 = vld [vmem:[#allocation5 + $0x28] sm:$0xff]
    %v588 = vld [vmem:[#allocation5 + $0x30] sm:$0xff]
    %v589 = vld [vmem:[#allocation5 + $0x38] sm:$0xff]
    %v590 = vld [vmem:[#allocation5 + $0x40] sm:$0xff]
    %v591 = vld [vmem:[#allocation5 + $0x48] sm:$0xff]
    %v592 = vld [vmem:[#allocation5 + $0x50] sm:$0xff]
    %v593 = vld [vmem:[#allocation5 + $0x58] sm:$0xff]
    %v594 = vld [vmem:[#allocation5 + $0x60] sm:$0xff]
    %v595 = vld [vmem:[#allocation5 + $0x68] sm:$0xff]
    %v596 = vld [vmem:[#allocation5 + $0x70] sm:$0xff]
    %v597 = vld [vmem:[#allocation5 + $0x78] sm:$0xf]
    %v598 = vld [vmem:[#allocation5 + $0x80] sm:$0xf]
    %v599 = vld [vmem:[#allocation5 + $0x88] sm:$0xf]
    %v600 = vld [vmem:[#allocation5 + $0x90] sm:$0xf]
    %v601 = vld [vmem:[#allocation5 + $0x98] sm:$0xf]
    %v602 = vpack.c.bf16 %v587, %v582
    %v603 = vpack.c.bf16 %v588, %v583
    %v604 = vpack.c.bf16 %v589, %v584
    %v605 = vpack.c.bf16 %v590, %v585
    %v606 = vpack.c.bf16 %v591, %v586
    %v607 = vpack.c.bf16 %v597, %v592
    %v608 = vpack.c.bf16 %v598, %v593
    %v609 = vpack.c.bf16 %v599, %v594
    %v610 = vpack.c.bf16 %v600, %v595
    %v611 = vpack.c.bf16 %v601, %v596
    %v612 = vld [vmem:[%s1] sm:$0xf]
    %v613 = vld [vmem:[%s1 + $0x4] sm:$0xf]
    %v614 = vld [vmem:[%s1 + $0x8] sm:$0xf]
    %v615 = vld [vmem:[%s1 + $0xc] sm:$0xf]
    %v616 = vld [vmem:[%s1 + $0x10] sm:$0xf]
    %v617 = vld [vmem:[%s1 + $0x14] sm:$0xf]
    %v618 = vld [vmem:[%s1 + $0x18] sm:$0xf]
    %v619 = vld [vmem:[%s1 + $0x1c] sm:$0xf]
    %v620 = vld [vmem:[%s1 + $0x20] sm:$0xf]
    %v621 = vld [vmem:[%s1 + $0x24] sm:$0xf]
    %v622 = vld [vmem:[%s1 + $0x28] sm:$0xf]
    %v623 = vld [vmem:[%s1 + $0x2c] sm:$0xf]
    %v624 = vld [vmem:[%s1 + $0x30] sm:$0xf]
    %v625 = vld [vmem:[%s1 + $0x34] sm:$0xf]
    %v626 = vld [vmem:[%s1 + $0x38] sm:$0xf]
    %v627 = vld [vmem:[%s1 + $0x3c] sm:$0xf]
    %v628 = vld [vmem:[%s1 + $0x40] sm:$0xf]
    %v629 = vld [vmem:[%s1 + $0x44] sm:$0xf]
    %v630 = vld [vmem:[%s1 + $0x48] sm:$0xf]
    %v631 = vld [vmem:[%s1 + $0x4c] sm:$0xf]
    %v632 = vld [vmem:[%s1 + $0x50] sm:$0xf]
    %v633 = vld [vmem:[%s1 + $0x54] sm:$0xf]
    %v634 = vld [vmem:[%s1 + $0x58] sm:$0xf]
    %v635 = vld [vmem:[%s1 + $0x5c] sm:$0xf]
    %v636 = vld [vmem:[%s1 + $0x60] sm:$0xf]
    %v637 = vld [vmem:[%s1 + $0x64] sm:$0xf]
    %v638 = vld [vmem:[%s1 + $0x68] sm:$0xf]
    %v639 = vld [vmem:[%s1 + $0x6c] sm:$0xf]
    %v640 = vld [vmem:[%s1 + $0x70] sm:$0xf]
    %v641 = vld [vmem:[%s1 + $0x74] sm:$0xf]
    %v642 = vld [vmem:[%s1 + $0x78] sm:$0xf]
    %v643 = vld [vmem:[%s1 + $0x7c] sm:$0xf]
    %v644 = vld [vmem:[%s1 + $0x80] sm:$0xf]
    %v645 = vld [vmem:[%s1 + $0x84] sm:$0xf]
    %v646 = vld [vmem:[%s1 + $0x88] sm:$0xf]
    %v647 = vld [vmem:[%s1 + $0x8c] sm:$0xf]
    %v648 = vld [vmem:[%s1 + $0x90] sm:$0xf]
    %v649 = vld [vmem:[%s1 + $0x94] sm:$0xf]
    %v650 = vld [vmem:[%s1 + $0x98] sm:$0xf]
    %v651 = vld [vmem:[%s1 + $0x9c] sm:$0xf]
    %v652 = vld [vmem:[%s1 + $0xa0] sm:$0xf]
    %v653 = vld [vmem:[%s1 + $0xa4] sm:$0xf]
    %v654 = vld [vmem:[%s1 + $0xa8] sm:$0xf]
    %v655 = vld [vmem:[%s1 + $0xac] sm:$0xf]
    %v656 = vld [vmem:[%s1 + $0xb0] sm:$0xf]
    %v657 = vld [vmem:[%s1 + $0xb4] sm:$0xf]
    %v658 = vld [vmem:[%s1 + $0xb8] sm:$0xf]
    %v659 = vld [vmem:[%s1 + $0xbc] sm:$0xf]
    %v660 = vld [vmem:[%s1 + $0xc0] sm:$0xf]
    %v661 = vld [vmem:[%s1 + $0xc4] sm:$0xf]
    %v662 = vld [vmem:[%s1 + $0xc8] sm:$0xf]
    %v663 = vld [vmem:[%s1 + $0xcc] sm:$0xf]
    %v664 = vld [vmem:[%s1 + $0xd0] sm:$0xf]
    %v665 = vld [vmem:[%s1 + $0xd4] sm:$0xf]
    %v666 = vld [vmem:[%s1 + $0xd8] sm:$0xf]
    %v667 = vld [vmem:[%s1 + $0xdc] sm:$0xf]
    %v668 = vld [vmem:[%s1 + $0xe0] sm:$0xf]
    %v669 = vld [vmem:[%s1 + $0xe4] sm:$0xf]
    %v670 = vld [vmem:[%s1 + $0xe8] sm:$0xf]
    %v671 = vld [vmem:[%s1 + $0xec] sm:$0xf]
    %v672 = vld [vmem:[%s1 + $0xf0] sm:$0xf]
    %v673 = vld [vmem:[%s1 + $0xf4] sm:$0xf]
    %v674 = vld [vmem:[%s1 + $0xf8] sm:$0xf]
    %v675 = vld [vmem:[%s1 + $0xfc] sm:$0xf]
    %v676 = vld [vmem:[%s1 + $0x100] sm:$0xf]
    %v677 = vld [vmem:[%s1 + $0x104] sm:$0xf]
    %v678 = vld [vmem:[%s1 + $0x108] sm:$0xf]
    %v679 = vld [vmem:[%s1 + $0x10c] sm:$0xf]
    %v680 = vld [vmem:[%s1 + $0x110] sm:$0xf]
    %v681 = vld [vmem:[%s1 + $0x114] sm:$0xf]
    %v682 = vld [vmem:[%s1 + $0x118] sm:$0xf]
    %v683 = vld [vmem:[%s1 + $0x11c] sm:$0xf]
    %v684 = vld [vmem:[%s1 + $0x120] sm:$0xf]
    %v685 = vld [vmem:[%s1 + $0x124] sm:$0xf]
    %v686 = vld [vmem:[%s1 + $0x128] sm:$0xf]
    %v687 = vld [vmem:[%s1 + $0x12c] sm:$0xf]
    %v688 = vld [vmem:[%s1 + $0x130] sm:$0xf]
    %v689 = vld [vmem:[%s1 + $0x134] sm:$0xf]
    %v690 = vld [vmem:[%s1 + $0x138] sm:$0xf]
    %v691 = vld [vmem:[%s1 + $0x13c] sm:$0xf]
    %v692 = vld [vmem:[%s2] sm:$0x1]
    %v694 = vperm.slane %v692, 0
    %v776 = vunpack.c.l.b16 %v612
    %v777 = vunpack.c.l.b16 %v613
    %v778 = vunpack.c.l.b16 %v614
    %v779 = vunpack.c.l.b16 %v615
    %v780 = vunpack.c.l.b16 %v616
    %v781 = vunpack.c.l.b16 %v617
    %v782 = vunpack.c.l.b16 %v618
    %v783 = vunpack.c.l.b16 %v619
    %v784 = vunpack.c.l.b16 %v620
    %v785 = vunpack.c.l.b16 %v621
    %v786 = vunpack.c.l.b16 %v622
    %v787 = vunpack.c.l.b16 %v623
    %v788 = vunpack.c.l.b16 %v624
    %v789 = vunpack.c.l.b16 %v625
    %v790 = vunpack.c.l.b16 %v626
    %v791 = vunpack.c.l.b16 %v627
    %v792 = vunpack.c.l.b16 %v628
    %v793 = vunpack.c.l.b16 %v629
    %v794 = vunpack.c.l.b16 %v630
    %v795 = vunpack.c.l.b16 %v631
    %v796 = vunpack.c.l.b16 %v632
    %v797 = vunpack.c.l.b16 %v633
    %v798 = vunpack.c.l.b16 %v634
    %v799 = vunpack.c.l.b16 %v635
    %v800 = vunpack.c.l.b16 %v636
    %v801 = vunpack.c.l.b16 %v637
    %v802 = vunpack.c.l.b16 %v638
    %v803 = vunpack.c.l.b16 %v639
    %v804 = vunpack.c.l.b16 %v640
    %v805 = vunpack.c.l.b16 %v641
    %v806 = vunpack.c.l.b16 %v642
    %v807 = vunpack.c.l.b16 %v643
    %v808 = vunpack.c.l.b16 %v644
    %v809 = vunpack.c.l.b16 %v645
    %v810 = vunpack.c.l.b16 %v646
    %v811 = vunpack.c.l.b16 %v647
    %v812 = vunpack.c.l.b16 %v648
    %v813 = vunpack.c.l.b16 %v649
    %v814 = vunpack.c.l.b16 %v650
    %v815 = vunpack.c.l.b16 %v651
    %v816 = vunpack.c.l.b16 %v652
    %v817 = vunpack.c.l.b16 %v653
    %v818 = vunpack.c.l.b16 %v654
    %v819 = vunpack.c.l.b16 %v655
    %v820 = vunpack.c.l.b16 %v656
    %v821 = vunpack.c.l.b16 %v657
    %v822 = vunpack.c.l.b16 %v658
    %v823 = vunpack.c.l.b16 %v659
    %v824 = vunpack.c.l.b16 %v660
    %v825 = vunpack.c.l.b16 %v661
    %v826 = vunpack.c.l.b16 %v662
    %v827 = vunpack.c.l.b16 %v663
    %v828 = vunpack.c.l.b16 %v664
    %v829 = vunpack.c.l.b16 %v665
    %v830 = vunpack.c.l.b16 %v666
    %v831 = vunpack.c.l.b16 %v667
    %v832 = vunpack.c.l.b16 %v668
    %v833 = vunpack.c.l.b16 %v669
    %v834 = vunpack.c.l.b16 %v670
    %v835 = vunpack.c.l.b16 %v671
    %v836 = vunpack.c.l.b16 %v672
    %v837 = vunpack.c.l.b16 %v673
    %v838 = vunpack.c.l.b16 %v674
    %v839 = vunpack.c.l.b16 %v675
    %v840 = vunpack.c.l.b16 %v676
    %v841 = vunpack.c.l.b16 %v677
    %v842 = vunpack.c.l.b16 %v678
    %v843 = vunpack.c.l.b16 %v679
    %v844 = vunpack.c.l.b16 %v680
    %v845 = vunpack.c.l.b16 %v681
    %v846 = vunpack.c.l.b16 %v682
    %v847 = vunpack.c.l.b16 %v683
    %v848 = vunpack.c.l.b16 %v684
    %v849 = vunpack.c.l.b16 %v685
    %v850 = vunpack.c.l.b16 %v686
    %v851 = vunpack.c.l.b16 %v687
    %v852 = vunpack.c.l.b16 %v688
    %v853 = vunpack.c.l.b16 %v689
    %v854 = vunpack.c.l.b16 %v690
    %v855 = vunpack.c.l.b16 %v691
    %v856 = vpack.c.b16 %v777, %v776
    %v857 = vpack.c.b16 %v779, %v778
    %v858 = vpack.c.b16 %v781, %v780
    %v859 = vpack.c.b16 %v783, %v782
    %v860 = vpack.c.b16 %v785, %v784
    %v861 = vpack.c.b16 %v787, %v786
    %v862 = vpack.c.b16 %v789, %v788
    %v863 = vpack.c.b16 %v791, %v790
    %v864 = vpack.c.b16 %v793, %v792
    %v865 = vpack.c.b16 %v795, %v794
    %v866 = vpack.c.b16 %v797, %v796
    %v867 = vpack.c.b16 %v799, %v798
    %v868 = vpack.c.b16 %v801, %v800
    %v869 = vpack.c.b16 %v803, %v802
    %v870 = vpack.c.b16 %v805, %v804
    %v871 = vpack.c.b16 %v807, %v806
    %v872 = vpack.c.b16 %v809, %v808
    %v873 = vpack.c.b16 %v811, %v810
    %v874 = vpack.c.b16 %v813, %v812
    %v875 = vpack.c.b16 %v815, %v814
    %v876 = vpack.c.b16 %v817, %v816
    %v877 = vpack.c.b16 %v819, %v818
    %v878 = vpack.c.b16 %v821, %v820
    %v879 = vpack.c.b16 %v823, %v822
    %v880 = vpack.c.b16 %v825, %v824
    %v881 = vpack.c.b16 %v827, %v826
    %v882 = vpack.c.b16 %v829, %v828
    %v883 = vpack.c.b16 %v831, %v830
    %v884 = vpack.c.b16 %v833, %v832
    %v885 = vpack.c.b16 %v835, %v834
    %v886 = vpack.c.b16 %v837, %v836
    %v887 = vpack.c.b16 %v839, %v838
    %v888 = vpack.c.b16 %v841, %v840
    %v889 = vpack.c.b16 %v843, %v842
    %v890 = vpack.c.b16 %v845, %v844
    %v891 = vpack.c.b16 %v847, %v846
    %v892 = vpack.c.b16 %v849, %v848
    %v893 = vpack.c.b16 %v851, %v850
    %v894 = vpack.c.b16 %v853, %v852
    %v895 = vpack.c.b16 %v855, %v854
    %936 = vmatpush.bf16.msra.mxu0 %v863
    %937 = vmatpush.bf16.msra.mxu0 %v862
    %938 = vmatpush.bf16.msra.mxu0 %v861
    %939 = vmatpush.bf16.msra.mxu0 %v860
    %940 = vmatpush.bf16.msra.mxu0 %v859
    %941 = vmatpush.bf16.msra.mxu0 %v858
    %942 = vmatpush.bf16.msra.mxu0 %v857
    %943 = vmatpush.bf16.msra.mxu0 %v856
    %944 = vmatmul.bf16.gmra.mxu0 %v602
    %v945 = vpop.f32.mrf.mxu0
    %v946 = vadd.f32 %v694, %v945
    %v947 = vpop.f32.mrf.mxu0
    %v948 = vadd.f32 %v694, %v947
    %949 = vmatmul.bf16.gmra.mxu0 %v607
    %v950 = vpop.f32.mrf.mxu0
    %v951 = vadd.f32 %v694, %v950
    %v952 = vpop.f32.mrf.mxu0
    %v953 = vadd.f32 %v694, %v952
    %954 = vdwg.mxu0
    %955 = vmatpush.bf16.msra.mxu0 %v871
    %956 = vmatpush.bf16.msra.mxu0 %v870
    %957 = vmatpush.bf16.msra.mxu0 %v869
    %958 = vmatpush.bf16.msra.mxu0 %v868
    %959 = vmatpush.bf16.msra.mxu0 %v867
    %960 = vmatpush.bf16.msra.mxu0 %v866
    %961 = vmatpush.bf16.msra.mxu0 %v865
    %962 = vmatpush.bf16.msra.mxu0 %v864
    %963 = vmatmul.bf16.gmra.mxu0 %v603
    %v964 = vpop.f32.mrf.mxu0
    %v965 = vadd.f32 %v946, %v964
    %v966 = vpop.f32.mrf.mxu0
    %v967 = vadd.f32 %v948, %v966
    %968 = vmatmul.bf16.gmra.mxu0 %v608
    %v969 = vpop.f32.mrf.mxu0
    %v970 = vadd.f32 %v951, %v969
    %v971 = vpop.f32.mrf.mxu0
    %v972 = vadd.f32 %v953, %v971
    %973 = vdwg.mxu0
    %974 = vmatpush.bf16.msra.mxu0 %v879
    %975 = vmatpush.bf16.msra.mxu0 %v878
    %976 = vmatpush.bf16.msra.mxu0 %v877
    %977 = vmatpush.bf16.msra.mxu0 %v876
    %978 = vmatpush.bf16.msra.mxu0 %v875
    %979 = vmatpush.bf16.msra.mxu0 %v874
    %980 = vmatpush.bf16.msra.mxu0 %v873
    %981 = vmatpush.bf16.msra.mxu0 %v872
    %982 = vmatmul.bf16.gmra.mxu0 %v604
    %v983 = vpop.f32.mrf.mxu0
    %v984 = vadd.f32 %v965, %v983
    %v985 = vpop.f32.mrf.mxu0
    %v986 = vadd.f32 %v967, %v985
    %987 = vmatmul.bf16.gmra.mxu0 %v609
    %v988 = vpop.f32.mrf.mxu0
    %v989 = vadd.f32 %v970, %v988
    %v990 = vpop.f32.mrf.mxu0
    %v991 = vadd.f32 %v972, %v990
    %992 = vdwg.mxu0
    %993 = vmatpush.bf16.msra.mxu0 %v887
    %994 = vmatpush.bf16.msra.mxu0 %v886
    %995 = vmatpush.bf16.msra.mxu0 %v885
    %996 = vmatpush.bf16.msra.mxu0 %v884
    %997 = vmatpush.bf16.msra.mxu0 %v883
    %998 = vmatpush.bf16.msra.mxu0 %v882
    %999 = vmatpush.bf16.msra.mxu0 %v881
    %1000 = vmatpush.bf16.msra.mxu0 %v880
    %1001 = vmatmul.bf16.gmra.mxu0 %v605
    %v1002 = vpop.f32.mrf.mxu0
    %v1003 = vadd.f32 %v984, %v1002
    %v1004 = vpop.f32.mrf.mxu0
    %v1005 = vadd.f32 %v986, %v1004
    %1006 = vmatmul.bf16.gmra.mxu0 %v610
    %v1007 = vpop.f32.mrf.mxu0
    %v1008 = vadd.f32 %v989, %v1007
    %v1009 = vpop.f32.mrf.mxu0
    %v1010 = vadd.f32 %v991, %v1009
    %1011 = vdwg.mxu0
    %1012 = vmatpush.bf16.msra.mxu0 %v895
    %1013 = vmatpush.bf16.msra.mxu0 %v894
    %1014 = vmatpush.bf16.msra.mxu0 %v893
    %1015 = vmatpush.bf16.msra.mxu0 %v892
    %1016 = vmatpush.bf16.msra.mxu0 %v891
    %1017 = vmatpush.bf16.msra.mxu0 %v890
    %1018 = vmatpush.bf16.msra.mxu0 %v889
    %1019 = vmatpush.bf16.msra.mxu0 %v888
    %1020 = vmatmul.bf16.gmra.mxu0 %v606
    %v1021 = vpop.f32.mrf.mxu0
    %v1022 = vadd.f32 %v1003, %v1021
    %v1023 = vpop.f32.mrf.mxu0
    %v1024 = vadd.f32 %v1005, %v1023
    %1025 = vmatmul.bf16.gmra.mxu0 %v611
    %v1026 = vpop.f32.mrf.mxu0
    %v1027 = vadd.f32 %v1008, %v1026
    %v1028 = vpop.f32.mrf.mxu0
    %v1029 = vadd.f32 %v1010, %v1028
    %1030 = vdwg.mxu0
    %v1031 = vmax.f32 %v1022, 0.0
    %v1032 = vmax.f32 %v1024, 0.0
    %v1033 = vmax.f32 %v1027, 0.0
    %v1034 = vmax.f32 %v1029, 0.0
    %1035 = vst [vmem:[#allocation3 + $0x4] sm:$0x3] %v1031
    %1037 = vst.sshfl [vmem:[#allocation1] sm:$0xff pattern:$0x73625140] %v1031
    %s1038 = scalar_lea.vmem [#allocation1], 1
    %v1039 = vld [vmem:[%s1038] ss:$4 sm:$0xff]
    %1041 = vst [vmem:[#allocation3 + $0x6] sm:$0x3] %v1039
    %1042 = vst.sshfl [vmem:[#allocation1] sm:$0xff pattern:$0x73625140] %v1031
    %s1043 = scalar_lea.vmem [#allocation1], 2
    %v1044 = vld [vmem:[%s1043] ss:$4 sm:$0xff]
    %1046 = vst [vmem:[#allocation3 + $0x8] sm:$0x3] %v1044
    %1047 = vst.sshfl [vmem:[#allocation1] sm:$0xff pattern:$0x73625140] %v1031
    %s1048 = scalar_lea.vmem [#allocation1], 3
    %v1049 = vld [vmem:[%s1048] ss:$4 sm:$0xff]
    %1051 = vst [vmem:[#allocation3 + $0xa] sm:$0x3] %v1049
    %1052 = vst [vmem:[#allocation3 + $0xc] sm:$0x3] %v1032
    %1054 = vst.sshfl [vmem:[#allocation1] sm:$0xff pattern:$0x73625140] %v1032
    %s1055 = scalar_lea.vmem [#allocation1], 1
    %v1056 = vld [vmem:[%s1055] ss:$4 sm:$0xff]
    %1058 = vst [vmem:[#allocation3 + $0xe] sm:$0x3] %v1056
    %1059 = vst.sshfl [vmem:[#allocation1] sm:$0xff pattern:$0x73625140] %v1032
    %s1060 = scalar_lea.vmem [#allocation1], 2
    %v1061 = vld [vmem:[%s1060] ss:$4 sm:$0xff]
    %1063 = vst [vmem:[#allocation3 + $0x10] sm:$0x3] %v1061
    %1064 = vst.sshfl [vmem:[#allocation1] sm:$0xff pattern:$0x73625140] %v1032
    %s1065 = scalar_lea.vmem [#allocation1], 3
    %v1066 = vld [vmem:[%s1065] ss:$4 sm:$0xff]
    %1068 = vst [vmem:[#allocation3 + $0x12] sm:$0x3] %v1066
    %1069 = vst [vmem:[#allocation3 + $0x14] sm:$0x3] %v1033
    %1071 = vst.sshfl [vmem:[#allocation1] sm:$0xff pattern:$0x73625140] %v1033
    %s1072 = scalar_lea.vmem [#allocation1], 1
    %v1073 = vld [vmem:[%s1072] ss:$4 sm:$0xff]
    %1075 = vst [vmem:[#allocation3 + $0x16] sm:$0x3] %v1073
    %1076 = vst.sshfl [vmem:[#allocation1] sm:$0xff pattern:$0x73625140] %v1033
    %s1077 = scalar_lea.vmem [#allocation1], 2
    %v1078 = vld [vmem:[%s1077] ss:$4 sm:$0xff]
    %1080 = vst [vmem:[#allocation3 + $0x18] sm:$0x3] %v1078
    %1081 = vst.sshfl [vmem:[#allocation1] sm:$0xff pattern:$0x73625140] %v1033
    %s1082 = scalar_lea.vmem [#allocation1], 3
    %v1083 = vld [vmem:[%s1082] ss:$4 sm:$0xff]
    %1085 = vst [vmem:[#allocation3 + $0x1a] sm:$0x3] %v1083
    %1086 = vst [vmem:[#allocation3 + $0x1c] sm:$0x3] %v1034
    %1088 = vst.sshfl [vmem:[#allocation1] sm:$0xff pattern:$0x73625140] %v1034
    %s1089 = scalar_lea.vmem [#allocation1], 1
    %v1090 = vld [vmem:[%s1089] ss:$4 sm:$0xff]
    %1092 = vst [vmem:[#allocation3 + $0x1e] sm:$0x3] %v1090
    %v1093 = vld [vmem:[#allocation3] sm:$0xff]
    %v1094 = vld [vmem:[#allocation3 + $0x8] sm:$0x3]
    %1097 = vst [vmem:[#allocation1] ss:$4 sm:$0xff] %v1093
    %s1098 = scalar_lea.vmem [#allocation1], 32
    %1099 = vst [vmem:[%s1098] ss:$4 sm:$0xff] %v1094
    %v1100 = vld.sshfl [vmem:[#allocation1] sm:$0xff pattern:$0x73625140]
    %v1101 = vld.sshfl [vmem:[#allocation1 + $0x8] sm:$0xff pattern:$0x73625140]
    %v1102 = vld.sshfl [vmem:[#allocation1 + $0x10] sm:$0xff pattern:$0x73625140]
    %v1103 = vld.sshfl [vmem:[#allocation1 + $0x18] sm:$0xff pattern:$0x73625140]
    %v1104 = vld.sshfl [vmem:[#allocation1 + $0x20] sm:$0xff pattern:$0x73625140]
    %1110 = vst [vmem:[#allocation5] sm:$0x3] %v1100
    %1111 = vst [vmem:[#allocation5 + $0x8] sm:$0x3] %v1101
    %1112 = vst [vmem:[#allocation5 + $0x10] sm:$0x3] %v1102
    %1113 = vst [vmem:[#allocation5 + $0x18] sm:$0x3] %v1103
    %1114 = vst [vmem:[#allocation5 + $0x20] sm:$0x3] %v1104
    %v1115 = vld [vmem:[#allocation3 + $0x4] sm:$0xff]
    %v1116 = vld [vmem:[#allocation3 + $0xc] sm:$0x3]
    %s1119 = scalar_lea.vmem [#allocation1], 1
    %1120 = vst [vmem:[%s1119] ss:$4 sm:$0xff] %v1115
    %s1121 = scalar_lea.vmem [#allocation1], 33
    %1122 = vst [vmem:[%s1121] ss:$4 sm:$0xff] %v1116
    %v1123 = vld.sshfl [vmem:[#allocation1] sm:$0xff pattern:$0x73625140]
    %v1124 = vld.sshfl [vmem:[#allocation1 + $0x8] sm:$0xff pattern:$0x73625140]
    %v1125 = vld.sshfl [vmem:[#allocation1 + $0x10] sm:$0xff pattern:$0x73625140]
    %v1126 = vld.sshfl [vmem:[#allocation1 + $0x18] sm:$0xff pattern:$0x73625140]
    %v1127 = vld.sshfl [vmem:[#allocation1 + $0x20] sm:$0xff pattern:$0x73625140]
    %1133 = vst [vmem:[#allocation5] sm:$0xc] %v1123
    %1134 = vst [vmem:[#allocation5 + $0x8] sm:$0xc] %v1124
    %1135 = vst [vmem:[#allocation5 + $0x10] sm:$0xc] %v1125
    %1136 = vst [vmem:[#allocation5 + $0x18] sm:$0xc] %v1126
    %1137 = vst [vmem:[#allocation5 + $0x20] sm:$0xc] %v1127
    %v1138 = vld [vmem:[#allocation3 + $0x8] sm:$0xff]
    %v1139 = vld [vmem:[#allocation3 + $0x10] sm:$0x3]
    %s1142 = scalar_lea.vmem [#allocation1], 2
    %1143 = vst [vmem:[%s1142] ss:$4 sm:$0xff] %v1138
    %s1144 = scalar_lea.vmem [#allocation1], 34
    %1145 = vst [vmem:[%s1144] ss:$4 sm:$0xff] %v1139
    %v1146 = vld.sshfl [vmem:[#allocation1] sm:$0xff pattern:$0x73625140]
    %v1147 = vld.sshfl [vmem:[#allocation1 + $0x8] sm:$0xff pattern:$0x73625140]
    %v1148 = vld.sshfl [vmem:[#allocation1 + $0x10] sm:$0xff pattern:$0x73625140]
    %v1149 = vld.sshfl [vmem:[#allocation1 + $0x18] sm:$0xff pattern:$0x73625140]
    %v1150 = vld.sshfl [vmem:[#allocation1 + $0x20] sm:$0xff pattern:$0x73625140]
    %1156 = vst [vmem:[#allocation5] sm:$0x30] %v1146
    %1157 = vst [vmem:[#allocation5 + $0x8] sm:$0x30] %v1147
    %1158 = vst [vmem:[#allocation5 + $0x10] sm:$0x30] %v1148
    %1159 = vst [vmem:[#allocation5 + $0x18] sm:$0x30] %v1149
    %1160 = vst [vmem:[#allocation5 + $0x20] sm:$0x30] %v1150
    %v1161 = vld [vmem:[#allocation3 + $0xc] sm:$0xff]
    %v1162 = vld [vmem:[#allocation3 + $0x14] sm:$0x3]
    %s1165 = scalar_lea.vmem [#allocation1], 3
    %1166 = vst [vmem:[%s1165] ss:$4 sm:$0xff] %v1161
    %s1167 = scalar_lea.vmem [#allocation1], 35
    %1168 = vst [vmem:[%s1167] ss:$4 sm:$0xff] %v1162
    %v1169 = vld.sshfl [vmem:[#allocation1] sm:$0xff pattern:$0x73625140]
    %v1170 = vld.sshfl [vmem:[#allocation1 + $0x8] sm:$0xff pattern:$0x73625140]
    %v1171 = vld.sshfl [vmem:[#allocation1 + $0x10] sm:$0xff pattern:$0x73625140]
    %v1172 = vld.sshfl [vmem:[#allocation1 + $0x18] sm:$0xff pattern:$0x73625140]
    %v1173 = vld.sshfl [vmem:[#allocation1 + $0x20] sm:$0xff pattern:$0x73625140]
    %1179 = vst [vmem:[#allocation5] sm:$0xc0] %v1169
    %1180 = vst [vmem:[#allocation5 + $0x8] sm:$0xc0] %v1170
    %1181 = vst [vmem:[#allocation5 + $0x10] sm:$0xc0] %v1171
    %1182 = vst [vmem:[#allocation5 + $0x18] sm:$0xc0] %v1172
    %1183 = vst [vmem:[#allocation5 + $0x20] sm:$0xc0] %v1173
    %v1184 = vld [vmem:[#allocation3 + $0x10] sm:$0xff]
    %v1185 = vld [vmem:[#allocation3 + $0x18] sm:$0x3]
    %1188 = vst [vmem:[#allocation1] ss:$4 sm:$0xff] %v1184
    %s1189 = scalar_lea.vmem [#allocation1], 32
    %1190 = vst [vmem:[%s1189] ss:$4 sm:$0xff] %v1185
    %v1191 = vld.sshfl [vmem:[#allocation1] sm:$0xff pattern:$0x73625140]
    %v1192 = vld.sshfl [vmem:[#allocation1 + $0x8] sm:$0xff pattern:$0x73625140]
    %v1193 = vld.sshfl [vmem:[#allocation1 + $0x10] sm:$0xff pattern:$0x73625140]
    %v1194 = vld.sshfl [vmem:[#allocation1 + $0x18] sm:$0xff pattern:$0x73625140]
    %v1195 = vld.sshfl [vmem:[#allocation1 + $0x20] sm:$0xff pattern:$0x73625140]
    %1201 = vst [vmem:[#allocation5 + $0x28] sm:$0x3] %v1191
    %1202 = vst [vmem:[#allocation5 + $0x30] sm:$0x3] %v1192
    %1203 = vst [vmem:[#allocation5 + $0x38] sm:$0x3] %v1193
    %1204 = vst [vmem:[#allocation5 + $0x40] sm:$0x3] %v1194
    %1205 = vst [vmem:[#allocation5 + $0x48] sm:$0x3] %v1195
    %v1206 = vld [vmem:[#allocation3 + $0x14] sm:$0xff]
    %v1207 = vld [vmem:[#allocation3 + $0x1c] sm:$0x3]
    %s1210 = scalar_lea.vmem [#allocation1], 1
    %1211 = vst [vmem:[%s1210] ss:$4 sm:$0xff] %v1206
    %s1212 = scalar_lea.vmem [#allocation1], 33
    %1213 = vst [vmem:[%s1212] ss:$4 sm:$0xff] %v1207
    %v1214 = vld.sshfl [vmem:[#allocation1] sm:$0xff pattern:$0x73625140]
    %v1215 = vld.sshfl [vmem:[#allocation1 + $0x8] sm:$0xff pattern:$0x73625140]
    %v1216 = vld.sshfl [vmem:[#allocation1 + $0x10] sm:$0xff pattern:$0x73625140]
    %v1217 = vld.sshfl [vmem:[#allocation1 + $0x18] sm:$0xff pattern:$0x73625140]
    %v1218 = vld.sshfl [vmem:[#allocation1 + $0x20] sm:$0xff pattern:$0x73625140]
    %1224 = vst [vmem:[#allocation5 + $0x28] sm:$0xc] %v1214
    %1225 = vst [vmem:[#allocation5 + $0x30] sm:$0xc] %v1215
    %1226 = vst [vmem:[#allocation5 + $0x38] sm:$0xc] %v1216
    %1227 = vst [vmem:[#allocation5 + $0x40] sm:$0xc] %v1217
    %1228 = vst [vmem:[#allocation5 + $0x48] sm:$0xc] %v1218
    %v1229 = vld [vmem:[#allocation3 + $0x18] sm:$0xff]
    %v1230 = vld [vmem:[#allocation3 + $0x20] sm:$0x3]
    %s1233 = scalar_lea.vmem [#allocation1], 2
    %1234 = vst [vmem:[%s1233] ss:$4 sm:$0xff] %v1229
    %s1235 = scalar_lea.vmem [#allocation1], 34
    %1236 = vst [vmem:[%s1235] ss:$4 sm:$0xff] %v1230
    %v1237 = vld.sshfl [vmem:[#allocation1] sm:$0xff pattern:$0x73625140]
    %v1238 = vld.sshfl [vmem:[#allocation1 + $0x8] sm:$0xff pattern:$0x73625140]
    %v1239 = vld.sshfl [vmem:[#allocation1 + $0x10] sm:$0xff pattern:$0x73625140]
    %v1240 = vld.sshfl [vmem:[#allocation1 + $0x18] sm:$0xff pattern:$0x73625140]
    %v1241 = vld.sshfl [vmem:[#allocation1 + $0x20] sm:$0xff pattern:$0x73625140]
    %1247 = vst [vmem:[#allocation5 + $0x28] sm:$0x30] %v1237
    %1248 = vst [vmem:[#allocation5 + $0x30] sm:$0x30] %v1238
    %1249 = vst [vmem:[#allocation5 + $0x38] sm:$0x30] %v1239
    %1250 = vst [vmem:[#allocation5 + $0x40] sm:$0x30] %v1240
    %1251 = vst [vmem:[#allocation5 + $0x48] sm:$0x30] %v1241
    %v1252 = vld [vmem:[#allocation5] sm:$0xff]
    %v1253 = vld [vmem:[#allocation5 + $0x8] sm:$0xff]
    %v1254 = vld [vmem:[#allocation5 + $0x10] sm:$0xff]
    %v1255 = vld [vmem:[#allocation5 + $0x18] sm:$0xff]
    %v1256 = vld [vmem:[#allocation5 + $0x20] sm:$0xff]
    %v1257 = vld [vmem:[#allocation5 + $0x28] sm:$0x3f]
    %v1258 = vld [vmem:[#allocation5 + $0x30] sm:$0x3f]
    %v1259 = vld [vmem:[#allocation5 + $0x38] sm:$0x3f]
    %v1260 = vld [vmem:[#allocation5 + $0x40] sm:$0x3f]
    %v1261 = vld [vmem:[#allocation5 + $0x48] sm:$0x3f]
    %v1262 = vpack.c.bf16 %v1257, %v1252
    %v1263 = vpack.c.bf16 %v1258, %v1253
    %v1264 = vpack.c.bf16 %v1259, %v1254
    %v1265 = vpack.c.bf16 %v1260, %v1255
    %v1266 = vpack.c.bf16 %v1261, %v1256
    %v1267 = vld [vmem:[#allocation7] sm:$0xf]
    %v1268 = vld [vmem:[#allocation7 + $0x4] sm:$0xf]
    %v1269 = vld [vmem:[#allocation7 + $0x8] sm:$0xf]
    %v1270 = vld [vmem:[#allocation7 + $0xc] sm:$0xf]
    %v1271 = vld [vmem:[#allocation7 + $0x10] sm:$0xf]
    %v1272 = vld [vmem:[#allocation7 + $0x14] sm:$0xf]
    %v1273 = vld [vmem:[#allocation7 + $0x18] sm:$0xf]
    %v1274 = vld [vmem:[#allocation7 + $0x1c] sm:$0xf]
    %v1275 = vld [vmem:[#allocation7 + $0x20] sm:$0xf]
    %v1276 = vld [vmem:[#allocation7 + $0x24] sm:$0xf]
    %v1277 = vld [vmem:[#allocation7 + $0x28] sm:$0xf]
    %v1278 = vld [vmem:[#allocation7 + $0x2c] sm:$0xf]
    %v1279 = vld [vmem:[#allocation7 + $0x30] sm:$0xf]
    %v1280 = vld [vmem:[#allocation7 + $0x34] sm:$0xf]
    %v1281 = vld [vmem:[#allocation7 + $0x38] sm:$0xf]
    %v1282 = vld [vmem:[#allocation7 + $0x3c] sm:$0xf]
    %v1283 = vld [vmem:[#allocation7 + $0x40] sm:$0xf]
    %v1284 = vld [vmem:[#allocation7 + $0x44] sm:$0xf]
    %v1285 = vld [vmem:[#allocation7 + $0x48] sm:$0xf]
    %v1286 = vld [vmem:[#allocation7 + $0x4c] sm:$0xf]
    %v1287 = vld [vmem:[#allocation7 + $0x50] sm:$0xf]
    %v1288 = vld [vmem:[#allocation7 + $0x54] sm:$0xf]
    %v1289 = vld [vmem:[#allocation7 + $0x58] sm:$0xf]
    %v1290 = vld [vmem:[#allocation7 + $0x5c] sm:$0xf]
    %v1291 = vld [vmem:[#allocation7 + $0x60] sm:$0xf]
    %v1292 = vld [vmem:[#allocation7 + $0x64] sm:$0xf]
    %v1293 = vld [vmem:[#allocation7 + $0x68] sm:$0xf]
    %v1294 = vld [vmem:[#allocation7 + $0x6c] sm:$0xf]
    %v1295 = vld [vmem:[#allocation7 + $0x70] sm:$0xf]
    %v1296 = vld [vmem:[#allocation7 + $0x74] sm:$0xf]
    %v1297 = vld [vmem:[#allocation7 + $0x78] sm:$0xf]
    %v1298 = vld [vmem:[#allocation7 + $0x7c] sm:$0xf]
    %v1299 = vld [vmem:[#allocation7 + $0x80] sm:$0xf]
    %v1300 = vld [vmem:[#allocation7 + $0x84] sm:$0xf]
    %v1301 = vld [vmem:[#allocation7 + $0x88] sm:$0xf]
    %v1302 = vld [vmem:[#allocation7 + $0x8c] sm:$0xf]
    %v1303 = vld [vmem:[#allocation7 + $0x90] sm:$0xf]
    %v1304 = vld [vmem:[#allocation7 + $0x94] sm:$0xf]
    %v1305 = vld [vmem:[#allocation7 + $0x98] sm:$0xf]
    %v1306 = vld [vmem:[#allocation7 + $0x9c] sm:$0xf]
    %v1307 = vld [vmem:[#allocation7 + $0xa0] sm:$0xf]
    %v1308 = vld [vmem:[#allocation7 + $0xa4] sm:$0xf]
    %v1309 = vld [vmem:[#allocation7 + $0xa8] sm:$0xf]
    %v1310 = vld [vmem:[#allocation7 + $0xac] sm:$0xf]
    %v1311 = vld [vmem:[#allocation7 + $0xb0] sm:$0xf]
    %v1312 = vld [vmem:[#allocation7 + $0xb4] sm:$0xf]
    %v1313 = vld [vmem:[#allocation7 + $0xb8] sm:$0xf]
    %v1314 = vld [vmem:[#allocation7 + $0xbc] sm:$0xf]
    %v1315 = vld [vmem:[#allocation7 + $0xc0] sm:$0xf]
    %v1316 = vld [vmem:[#allocation7 + $0xc4] sm:$0xf]
    %v1317 = vld [vmem:[#allocation7 + $0xc8] sm:$0xf]
    %v1318 = vld [vmem:[#allocation7 + $0xcc] sm:$0xf]
    %v1319 = vld [vmem:[#allocation7 + $0xd0] sm:$0xf]
    %v1320 = vld [vmem:[#allocation7 + $0xd4] sm:$0xf]
    %v1321 = vld [vmem:[#allocation7 + $0xd8] sm:$0xf]
    %v1322 = vld [vmem:[#allocation7 + $0xdc] sm:$0xf]
    %v1323 = vld [vmem:[#allocation7 + $0xe0] sm:$0xf]
    %v1324 = vld [vmem:[#allocation7 + $0xe4] sm:$0xf]
    %v1325 = vld [vmem:[#allocation7 + $0xe8] sm:$0xf]
    %v1326 = vld [vmem:[#allocation7 + $0xec] sm:$0xf]
    %v1327 = vld [vmem:[#allocation7 + $0xf0] sm:$0xf]
    %v1328 = vld [vmem:[#allocation7 + $0xf4] sm:$0xf]
    %v1329 = vld [vmem:[#allocation7 + $0xf8] sm:$0xf]
    %v1330 = vld [vmem:[#allocation7 + $0xfc] sm:$0xf]
    %v1331 = vld [vmem:[#allocation7 + $0x100] sm:$0xf]
    %v1332 = vld [vmem:[#allocation7 + $0x104] sm:$0xf]
    %v1333 = vld [vmem:[#allocation7 + $0x108] sm:$0xf]
    %v1334 = vld [vmem:[#allocation7 + $0x10c] sm:$0xf]
    %v1335 = vld [vmem:[#allocation7 + $0x110] sm:$0xf]
    %v1336 = vld [vmem:[#allocation7 + $0x114] sm:$0xf]
    %v1337 = vld [vmem:[#allocation7 + $0x118] sm:$0xf]
    %v1338 = vld [vmem:[#allocation7 + $0x11c] sm:$0xf]
    %v1339 = vld [vmem:[#allocation7 + $0x120] sm:$0xf]
    %v1340 = vld [vmem:[#allocation7 + $0x124] sm:$0xf]
    %v1341 = vld [vmem:[#allocation7 + $0x128] sm:$0xf]
    %v1342 = vld [vmem:[#allocation7 + $0x12c] sm:$0xf]
    %v1343 = vld [vmem:[#allocation7 + $0x130] sm:$0xf]
    %v1344 = vld [vmem:[#allocation7 + $0x134] sm:$0xf]
    %v1345 = vld [vmem:[#allocation7 + $0x138] sm:$0xf]
    %v1346 = vld [vmem:[#allocation7 + $0x13c] sm:$0xf]
    %v1347 = vld [vmem:[%s4] sm:$0x1]
    %v1349 = vperm.slane %v1347, 0
    %v1431 = vunpack.c.l.b16 %v1267
    %v1432 = vunpack.c.l.b16 %v1268
    %v1433 = vunpack.c.l.b16 %v1269
    %v1434 = vunpack.c.l.b16 %v1270
    %v1435 = vunpack.c.l.b16 %v1271
    %v1436 = vunpack.c.l.b16 %v1272
    %v1437 = vunpack.c.l.b16 %v1273
    %v1438 = vunpack.c.l.b16 %v1274
    %v1439 = vunpack.c.l.b16 %v1275
    %v1440 = vunpack.c.l.b16 %v1276
    %v1441 = vunpack.c.l.b16 %v1277
    %v1442 = vunpack.c.l.b16 %v1278
    %v1443 = vunpack.c.l.b16 %v1279
    %v1444 = vunpack.c.l.b16 %v1280
    %v1445 = vunpack.c.l.b16 %v1281
    %v1446 = vunpack.c.l.b16 %v1282
    %v1447 = vunpack.c.l.b16 %v1283
    %v1448 = vunpack.c.l.b16 %v1284
    %v1449 = vunpack.c.l.b16 %v1285
    %v1450 = vunpack.c.l.b16 %v1286
    %v1451 = vunpack.c.l.b16 %v1287
    %v1452 = vunpack.c.l.b16 %v1288
    %v1453 = vunpack.c.l.b16 %v1289
    %v1454 = vunpack.c.l.b16 %v1290
    %v1455 = vunpack.c.l.b16 %v1291
    %v1456 = vunpack.c.l.b16 %v1292
    %v1457 = vunpack.c.l.b16 %v1293
    %v1458 = vunpack.c.l.b16 %v1294
    %v1459 = vunpack.c.l.b16 %v1295
    %v1460 = vunpack.c.l.b16 %v1296
    %v1461 = vunpack.c.l.b16 %v1297
    %v1462 = vunpack.c.l.b16 %v1298
    %v1463 = vunpack.c.l.b16 %v1299
    %v1464 = vunpack.c.l.b16 %v1300
    %v1465 = vunpack.c.l.b16 %v1301
    %v1466 = vunpack.c.l.b16 %v1302
    %v1467 = vunpack.c.l.b16 %v1303
    %v1468 = vunpack.c.l.b16 %v1304
    %v1469 = vunpack.c.l.b16 %v1305
    %v1470 = vunpack.c.l.b16 %v1306
    %v1471 = vunpack.c.l.b16 %v1307
    %v1472 = vunpack.c.l.b16 %v1308
    %v1473 = vunpack.c.l.b16 %v1309
    %v1474 = vunpack.c.l.b16 %v1310
    %v1475 = vunpack.c.l.b16 %v1311
    %v1476 = vunpack.c.l.b16 %v1312
    %v1477 = vunpack.c.l.b16 %v1313
    %v1478 = vunpack.c.l.b16 %v1314
    %v1479 = vunpack.c.l.b16 %v1315
    %v1480 = vunpack.c.l.b16 %v1316
    %v1481 = vunpack.c.l.b16 %v1317
    %v1482 = vunpack.c.l.b16 %v1318
    %v1483 = vunpack.c.l.b16 %v1319
    %v1484 = vunpack.c.l.b16 %v1320
    %v1485 = vunpack.c.l.b16 %v1321
    %v1486 = vunpack.c.l.b16 %v1322
    %v1487 = vunpack.c.l.b16 %v1323
    %v1488 = vunpack.c.l.b16 %v1324
    %v1489 = vunpack.c.l.b16 %v1325
    %v1490 = vunpack.c.l.b16 %v1326
    %v1491 = vunpack.c.l.b16 %v1327
    %v1492 = vunpack.c.l.b16 %v1328
    %v1493 = vunpack.c.l.b16 %v1329
    %v1494 = vunpack.c.l.b16 %v1330
    %v1495 = vunpack.c.l.b16 %v1331
    %v1496 = vunpack.c.l.b16 %v1332
    %v1497 = vunpack.c.l.b16 %v1333
    %v1498 = vunpack.c.l.b16 %v1334
    %v1499 = vunpack.c.l.b16 %v1335
    %v1500 = vunpack.c.l.b16 %v1336
    %v1501 = vunpack.c.l.b16 %v1337
    %v1502 = vunpack.c.l.b16 %v1338
    %v1503 = vunpack.c.l.b16 %v1339
    %v1504 = vunpack.c.l.b16 %v1340
    %v1505 = vunpack.c.l.b16 %v1341
    %v1506 = vunpack.c.l.b16 %v1342
    %v1507 = vunpack.c.l.b16 %v1343
    %v1508 = vunpack.c.l.b16 %v1344
    %v1509 = vunpack.c.l.b16 %v1345
    %v1510 = vunpack.c.l.b16 %v1346
    %v1511 = vpack.c.b16 %v1432, %v1431
    %v1512 = vpack.c.b16 %v1434, %v1433
    %v1513 = vpack.c.b16 %v1436, %v1435
    %v1514 = vpack.c.b16 %v1438, %v1437
    %v1515 = vpack.c.b16 %v1440, %v1439
    %v1516 = vpack.c.b16 %v1442, %v1441
    %v1517 = vpack.c.b16 %v1444, %v1443
    %v1518 = vpack.c.b16 %v1446, %v1445
    %v1519 = vpack.c.b16 %v1448, %v1447
    %v1520 = vpack.c.b16 %v1450, %v1449
    %v1521 = vpack.c.b16 %v1452, %v1451
    %v1522 = vpack.c.b16 %v1454, %v1453
    %v1523 = vpack.c.b16 %v1456, %v1455
    %v1524 = vpack.c.b16 %v1458, %v1457
    %v1525 = vpack.c.b16 %v1460, %v1459
    %v1526 = vpack.c.b16 %v1462, %v1461
    %v1527 = vpack.c.b16 %v1464, %v1463
    %v1528 = vpack.c.b16 %v1466, %v1465
    %v1529 = vpack.c.b16 %v1468, %v1467
    %v1530 = vpack.c.b16 %v1470, %v1469
    %v1531 = vpack.c.b16 %v1472, %v1471
    %v1532 = vpack.c.b16 %v1474, %v1473
    %v1533 = vpack.c.b16 %v1476, %v1475
    %v1534 = vpack.c.b16 %v1478, %v1477
    %v1535 = vpack.c.b16 %v1480, %v1479
    %v1536 = vpack.c.b16 %v1482, %v1481
    %v1537 = vpack.c.b16 %v1484, %v1483
    %v1538 = vpack.c.b16 %v1486, %v1485
    %v1539 = vpack.c.b16 %v1488, %v1487
    %v1540 = vpack.c.b16 %v1490, %v1489
    %v1541 = vpack.c.b16 %v1492, %v1491
    %v1542 = vpack.c.b16 %v1494, %v1493
    %v1543 = vpack.c.b16 %v1496, %v1495
    %v1544 = vpack.c.b16 %v1498, %v1497
    %v1545 = vpack.c.b16 %v1500, %v1499
    %v1546 = vpack.c.b16 %v1502, %v1501
    %v1547 = vpack.c.b16 %v1504, %v1503
    %v1548 = vpack.c.b16 %v1506, %v1505
    %v1549 = vpack.c.b16 %v1508, %v1507
    %v1550 = vpack.c.b16 %v1510, %v1509
    %1591 = vmatpush.bf16.msra.mxu0 %v1518
    %1592 = vmatpush.bf16.msra.mxu0 %v1517
    %1593 = vmatpush.bf16.msra.mxu0 %v1516
    %1594 = vmatpush.bf16.msra.mxu0 %v1515
    %1595 = vmatpush.bf16.msra.mxu0 %v1514
    %1596 = vmatpush.bf16.msra.mxu0 %v1513
    %1597 = vmatpush.bf16.msra.mxu0 %v1512
    %1598 = vmatpush.bf16.msra.mxu0 %v1511
    %1599 = vmatmul.bf16.gmra.mxu0 %v1262
    %v1600 = vpop.f32.mrf.mxu0
    %v1601 = vadd.f32 %v1349, %v1600
    %v1602 = vpop.f32.mrf.mxu0
    %v1603 = vadd.f32 %v1349, %v1602
    %1604 = vdwg.mxu0
    %1605 = vmatpush.bf16.msra.mxu0 %v1526
    %1606 = vmatpush.bf16.msra.mxu0 %v1525
    %1607 = vmatpush.bf16.msra.mxu0 %v1524
    %1608 = vmatpush.bf16.msra.mxu0 %v1523
    %1609 = vmatpush.bf16.msra.mxu0 %v1522
    %1610 = vmatpush.bf16.msra.mxu0 %v1521
    %1611 = vmatpush.bf16.msra.mxu0 %v1520
    %1612 = vmatpush.bf16.msra.mxu0 %v1519
    %1613 = vmatmul.bf16.gmra.mxu0 %v1263
    %v1614 = vpop.f32.mrf.mxu0
    %v1615 = vadd.f32 %v1601, %v1614
    %v1616 = vpop.f32.mrf.mxu0
    %v1617 = vadd.f32 %v1603, %v1616
    %1618 = vdwg.mxu0
    %1619 = vmatpush.bf16.msra.mxu0 %v1534
    %1620 = vmatpush.bf16.msra.mxu0 %v1533
    %1621 = vmatpush.bf16.msra.mxu0 %v1532
    %1622 = vmatpush.bf16.msra.mxu0 %v1531
    %1623 = vmatpush.bf16.msra.mxu0 %v1530
    %1624 = vmatpush.bf16.msra.mxu0 %v1529
    %1625 = vmatpush.bf16.msra.mxu0 %v1528
    %1626 = vmatpush.bf16.msra.mxu0 %v1527
    %1627 = vmatmul.bf16.gmra.mxu0 %v1264
    %v1628 = vpop.f32.mrf.mxu0
    %v1629 = vadd.f32 %v1615, %v1628
    %v1630 = vpop.f32.mrf.mxu0
    %v1631 = vadd.f32 %v1617, %v1630
    %1632 = vdwg.mxu0
    %1633 = vmatpush.bf16.msra.mxu0 %v1542
    %1634 = vmatpush.bf16.msra.mxu0 %v1541
    %1635 = vmatpush.bf16.msra.mxu0 %v1540
    %1636 = vmatpush.bf16.msra.mxu0 %v1539
    %1637 = vmatpush.bf16.msra.mxu0 %v1538
    %1638 = vmatpush.bf16.msra.mxu0 %v1537
    %1639 = vmatpush.bf16.msra.mxu0 %v1536
    %1640 = vmatpush.bf16.msra.mxu0 %v1535
    %1641 = vmatmul.bf16.gmra.mxu0 %v1265
    %v1642 = vpop.f32.mrf.mxu0
    %v1643 = vadd.f32 %v1629, %v1642
    %v1644 = vpop.f32.mrf.mxu0
    %v1645 = vadd.f32 %v1631, %v1644
    %1646 = vdwg.mxu0
    %1647 = vmatpush.bf16.msra.mxu0 %v1550
    %1648 = vmatpush.bf16.msra.mxu0 %v1549
    %1649 = vmatpush.bf16.msra.mxu0 %v1548
    %1650 = vmatpush.bf16.msra.mxu0 %v1547
    %1651 = vmatpush.bf16.msra.mxu0 %v1546
    %1652 = vmatpush.bf16.msra.mxu0 %v1545
    %1653 = vmatpush.bf16.msra.mxu0 %v1544
    %1654 = vmatpush.bf16.msra.mxu0 %v1543
    %1655 = vmatmul.bf16.gmra.mxu0 %v1266
    %v1656 = vpop.f32.mrf.mxu0
    %v1657 = vadd.f32 %v1643, %v1656
    %v1658 = vpop.f32.mrf.mxu0
    %v1659 = vadd.f32 %v1645, %v1658
    %1660 = vdwg.mxu0
    %v1661 = vmax.f32 %v1657, 0.0
    %v1662 = vmax.f32 %v1659, 0.0
    %1663 = vst [vmem:[#allocation4 + $0x4] sm:$0x3] %v1661
    %1665 = vst.sshfl [vmem:[#allocation1] sm:$0xff pattern:$0x73625140] %v1661
    %s1666 = scalar_lea.vmem [#allocation1], 1
    %v1667 = vld [vmem:[%s1666] ss:$4 sm:$0xff]
    %1669 = vst [vmem:[#allocation4 + $0x6] sm:$0x3] %v1667
    %1670 = vst.sshfl [vmem:[#allocation1] sm:$0xff pattern:$0x73625140] %v1661
    %s1671 = scalar_lea.vmem [#allocation1], 2
    %v1672 = vld [vmem:[%s1671] ss:$4 sm:$0xff]
    %1674 = vst [vmem:[#allocation4 + $0x8] sm:$0x3] %v1672
    %1675 = vst.sshfl [vmem:[#allocation1] sm:$0xff pattern:$0x73625140] %v1661
    %s1676 = scalar_lea.vmem [#allocation1], 3
    %v1677 = vld [vmem:[%s1676] ss:$4 sm:$0xff]
    %1679 = vst [vmem:[#allocation4 + $0xa] sm:$0x3] %v1677
    %1680 = vst [vmem:[#allocation4 + $0xc] sm:$0x3] %v1662
    %1682 = vst.sshfl [vmem:[#allocation1] sm:$0xff pattern:$0x73625140] %v1662
    %s1683 = scalar_lea.vmem [#allocation1], 1
    %v1684 = vld [vmem:[%s1683] ss:$4 sm:$0xff]
    %1686 = vst [vmem:[#allocation4 + $0xe] sm:$0x3] %v1684
    %1687 = vst.sshfl [vmem:[#allocation1] sm:$0xff pattern:$0x73625140] %v1662
    %s1688 = scalar_lea.vmem [#allocation1], 2
    %v1689 = vld [vmem:[%s1688] ss:$4 sm:$0xff]
    %1691 = vst [vmem:[#allocation4 + $0x10] sm:$0x3] %v1689
    %v1692 = vld [vmem:[#allocation4] sm:$0xff]
    %v1693 = vld [vmem:[#allocation4 + $0x8] sm:$0x3]
    %1696 = vst [vmem:[#allocation1] ss:$4 sm:$0xff] %v1692
    %s1697 = scalar_lea.vmem [#allocation1], 32
    %1698 = vst [vmem:[%s1697] ss:$4 sm:$0xff] %v1693
    %v1699 = vld.sshfl [vmem:[#allocation1] sm:$0xff pattern:$0x73625140]
    %v1700 = vld.sshfl [vmem:[#allocation1 + $0x8] sm:$0xff pattern:$0x73625140]
    %v1701 = vld.sshfl [vmem:[#allocation1 + $0x10] sm:$0xff pattern:$0x73625140]
    %v1702 = vld.sshfl [vmem:[#allocation1 + $0x18] sm:$0xff pattern:$0x73625140]
    %v1703 = vld.sshfl [vmem:[#allocation1 + $0x20] sm:$0xff pattern:$0x73625140]
    %1709 = vst [vmem:[#allocation5] sm:$0x3] %v1699
    %1710 = vst [vmem:[#allocation5 + $0x8] sm:$0x3] %v1700
    %1711 = vst [vmem:[#allocation5 + $0x10] sm:$0x3] %v1701
    %1712 = vst [vmem:[#allocation5 + $0x18] sm:$0x3] %v1702
    %1713 = vst [vmem:[#allocation5 + $0x20] sm:$0x3] %v1703
    %v1714 = vld [vmem:[#allocation4 + $0x4] sm:$0xff]
    %v1715 = vld [vmem:[#allocation4 + $0xc] sm:$0x3]
    %s1718 = scalar_lea.vmem [#allocation1], 1
    %1719 = vst [vmem:[%s1718] ss:$4 sm:$0xff] %v1714
    %s1720 = scalar_lea.vmem [#allocation1], 33
    %1721 = vst [vmem:[%s1720] ss:$4 sm:$0xff] %v1715
    %v1722 = vld.sshfl [vmem:[#allocation1] sm:$0xff pattern:$0x73625140]
    %v1723 = vld.sshfl [vmem:[#allocation1 + $0x8] sm:$0xff pattern:$0x73625140]
    %v1724 = vld.sshfl [vmem:[#allocation1 + $0x10] sm:$0xff pattern:$0x73625140]
    %v1725 = vld.sshfl [vmem:[#allocation1 + $0x18] sm:$0xff pattern:$0x73625140]
    %v1726 = vld.sshfl [vmem:[#allocation1 + $0x20] sm:$0xff pattern:$0x73625140]
    %1732 = vst [vmem:[#allocation5] sm:$0xc] %v1722
    %1733 = vst [vmem:[#allocation5 + $0x8] sm:$0xc] %v1723
    %1734 = vst [vmem:[#allocation5 + $0x10] sm:$0xc] %v1724
    %1735 = vst [vmem:[#allocation5 + $0x18] sm:$0xc] %v1725
    %1736 = vst [vmem:[#allocation5 + $0x20] sm:$0xc] %v1726
    %v1737 = vld [vmem:[#allocation4 + $0x8] sm:$0xff]
    %v1738 = vld [vmem:[#allocation4 + $0x10] sm:$0x3]
    %s1741 = scalar_lea.vmem [#allocation1], 2
    %1742 = vst [vmem:[%s1741] ss:$4 sm:$0xff] %v1737
    %s1743 = scalar_lea.vmem [#allocation1], 34
    %1744 = vst [vmem:[%s1743] ss:$4 sm:$0xff] %v1738
    %v1745 = vld.sshfl [vmem:[#allocation1] sm:$0xff pattern:$0x73625140]
    %v1746 = vld.sshfl [vmem:[#allocation1 + $0x8] sm:$0xff pattern:$0x73625140]
    %v1747 = vld.sshfl [vmem:[#allocation1 + $0x10] sm:$0xff pattern:$0x73625140]
    %v1748 = vld.sshfl [vmem:[#allocation1 + $0x18] sm:$0xff pattern:$0x73625140]
    %v1749 = vld.sshfl [vmem:[#allocation1 + $0x20] sm:$0xff pattern:$0x73625140]
    %1755 = vst [vmem:[#allocation5] sm:$0x30] %v1745
    %1756 = vst [vmem:[#allocation5 + $0x8] sm:$0x30] %v1746
    %1757 = vst [vmem:[#allocation5 + $0x10] sm:$0x30] %v1747
    %1758 = vst [vmem:[#allocation5 + $0x18] sm:$0x30] %v1748
    %1759 = vst [vmem:[#allocation5 + $0x20] sm:$0x30] %v1749
    %v1760 = vld [vmem:[#allocation4 + $0xc] sm:$0xff]
    %v1761 = vld [vmem:[#allocation4 + $0x14] sm:$0x3]
    %s1764 = scalar_lea.vmem [#allocation1], 3
    %1765 = vst [vmem:[%s1764] ss:$4 sm:$0xff] %v1760
    %s1766 = scalar_lea.vmem [#allocation1], 35
    %1767 = vst [vmem:[%s1766] ss:$4 sm:$0xff] %v1761
    %v1768 = vld.sshfl [vmem:[#allocation1] sm:$0xff pattern:$0x73625140]
    %v1769 = vld.sshfl [vmem:[#allocation1 + $0x8] sm:$0xff pattern:$0x73625140]
    %v1770 = vld.sshfl [vmem:[#allocation1 + $0x10] sm:$0xff pattern:$0x73625140]
    %v1771 = vld.sshfl [vmem:[#allocation1 + $0x18] sm:$0xff pattern:$0x73625140]
    %v1772 = vld.sshfl [vmem:[#allocation1 + $0x20] sm:$0xff pattern:$0x73625140]
    %1778 = vst [vmem:[#allocation5] sm:$0xc0] %v1768
    %1779 = vst [vmem:[#allocation5 + $0x8] sm:$0xc0] %v1769
    %1780 = vst [vmem:[#allocation5 + $0x10] sm:$0xc0] %v1770
    %1781 = vst [vmem:[#allocation5 + $0x18] sm:$0xc0] %v1771
    %1782 = vst [vmem:[#allocation5 + $0x20] sm:$0xc0] %v1772
    %v1783 = vld [vmem:[#allocation5] sm:$0xff]
    %v1784 = vld [vmem:[#allocation5 + $0x8] sm:$0xff]
    %v1785 = vld [vmem:[#allocation5 + $0x10] sm:$0xff]
    %v1786 = vld [vmem:[#allocation5 + $0x18] sm:$0xff]
    %v1787 = vld [vmem:[#allocation5 + $0x20] sm:$0xff]
    %v1788 = vpack.c.bf16 %v1783, %v1783
    %v1789 = vpack.c.bf16 %v1784, %v1784
    %v1790 = vpack.c.bf16 %v1785, %v1785
    %v1791 = vpack.c.bf16 %v1786, %v1786
    %v1792 = vpack.c.bf16 %v1787, %v1787
    %v1793 = vld [vmem:[#allocation10] sm:$0xf]
    %v1794 = vld [vmem:[#allocation10 + $0x4] sm:$0xf]
    %v1795 = vld [vmem:[#allocation10 + $0x8] sm:$0xf]
    %v1796 = vld [vmem:[#allocation10 + $0xc] sm:$0xf]
    %v1797 = vld [vmem:[#allocation10 + $0x10] sm:$0xf]
    %v1798 = vld [vmem:[#allocation10 + $0x14] sm:$0xf]
    %v1799 = vld [vmem:[#allocation10 + $0x18] sm:$0xf]
    %v1800 = vld [vmem:[#allocation10 + $0x1c] sm:$0xf]
    %v1801 = vld [vmem:[#allocation10 + $0x20] sm:$0xf]
    %v1802 = vld [vmem:[#allocation10 + $0x24] sm:$0xf]
    %v1803 = vld [vmem:[#allocation10 + $0x28] sm:$0xf]
    %v1804 = vld [vmem:[#allocation10 + $0x2c] sm:$0xf]
    %v1805 = vld [vmem:[#allocation10 + $0x30] sm:$0xf]
    %v1806 = vld [vmem:[#allocation10 + $0x34] sm:$0xf]
    %v1807 = vld [vmem:[#allocation10 + $0x38] sm:$0xf]
    %v1808 = vld [vmem:[#allocation10 + $0x3c] sm:$0xf]
    %v1809 = vld [vmem:[#allocation10 + $0x40] sm:$0xf]
    %v1810 = vld [vmem:[#allocation10 + $0x44] sm:$0xf]
    %v1811 = vld [vmem:[#allocation10 + $0x48] sm:$0xf]
    %v1812 = vld [vmem:[#allocation10 + $0x4c] sm:$0xf]
    %v1813 = vld [vmem:[#allocation10 + $0x50] sm:$0xf]
    %v1814 = vld [vmem:[#allocation10 + $0x54] sm:$0xf]
    %v1815 = vld [vmem:[#allocation10 + $0x58] sm:$0xf]
    %v1816 = vld [vmem:[#allocation10 + $0x5c] sm:$0xf]
    %v1817 = vld [vmem:[#allocation10 + $0x60] sm:$0xf]
    %v1818 = vld [vmem:[#allocation10 + $0x64] sm:$0xf]
    %v1819 = vld [vmem:[#allocation10 + $0x68] sm:$0xf]
    %v1820 = vld [vmem:[#allocation10 + $0x6c] sm:$0xf]
    %v1821 = vld [vmem:[#allocation10 + $0x70] sm:$0xf]
    %v1822 = vld [vmem:[#allocation10 + $0x74] sm:$0xf]
    %v1823 = vld [vmem:[#allocation10 + $0x78] sm:$0xf]
    %v1824 = vld [vmem:[#allocation10 + $0x7c] sm:$0xf]
    %v1825 = vld [vmem:[#allocation10 + $0x80] sm:$0xf]
    %v1826 = vld [vmem:[#allocation10 + $0x84] sm:$0xf]
    %v1827 = vld [vmem:[#allocation10 + $0x88] sm:$0xf]
    %v1828 = vld [vmem:[#allocation10 + $0x8c] sm:$0xf]
    %v1829 = vld [vmem:[#allocation10 + $0x90] sm:$0xf]
    %v1830 = vld [vmem:[#allocation10 + $0x94] sm:$0xf]
    %v1831 = vld [vmem:[#allocation10 + $0x98] sm:$0xf]
    %v1832 = vld [vmem:[#allocation10 + $0x9c] sm:$0xf]
    %v1833 = vld [vmem:[#allocation10 + $0xa0] sm:$0xf]
    %v1834 = vld [vmem:[#allocation10 + $0xa4] sm:$0xf]
    %v1835 = vld [vmem:[#allocation10 + $0xa8] sm:$0xf]
    %v1836 = vld [vmem:[#allocation10 + $0xac] sm:$0xf]
    %v1837 = vld [vmem:[#allocation10 + $0xb0] sm:$0xf]
    %v1838 = vld [vmem:[#allocation10 + $0xb4] sm:$0xf]
    %v1839 = vld [vmem:[#allocation10 + $0xb8] sm:$0xf]
    %v1840 = vld [vmem:[#allocation10 + $0xbc] sm:$0xf]
    %v1841 = vld [vmem:[#allocation10 + $0xc0] sm:$0xf]
    %v1842 = vld [vmem:[#allocation10 + $0xc4] sm:$0xf]
    %v1843 = vld [vmem:[#allocation10 + $0xc8] sm:$0xf]
    %v1844 = vld [vmem:[#allocation10 + $0xcc] sm:$0xf]
    %v1845 = vld [vmem:[#allocation10 + $0xd0] sm:$0xf]
    %v1846 = vld [vmem:[#allocation10 + $0xd4] sm:$0xf]
    %v1847 = vld [vmem:[#allocation10 + $0xd8] sm:$0xf]
    %v1848 = vld [vmem:[#allocation10 + $0xdc] sm:$0xf]
    %v1849 = vld [vmem:[#allocation10 + $0xe0] sm:$0xf]
    %v1850 = vld [vmem:[#allocation10 + $0xe4] sm:$0xf]
    %v1851 = vld [vmem:[#allocation10 + $0xe8] sm:$0xf]
    %v1852 = vld [vmem:[#allocation10 + $0xec] sm:$0xf]
    %v1853 = vld [vmem:[#allocation10 + $0xf0] sm:$0xf]
    %v1854 = vld [vmem:[#allocation10 + $0xf4] sm:$0xf]
    %v1855 = vld [vmem:[#allocation10 + $0xf8] sm:$0xf]
    %v1856 = vld [vmem:[#allocation10 + $0xfc] sm:$0xf]
    %v1857 = vld [vmem:[#allocation10 + $0x100] sm:$0xf]
    %v1858 = vld [vmem:[#allocation10 + $0x104] sm:$0xf]
    %v1859 = vld [vmem:[#allocation10 + $0x108] sm:$0xf]
    %v1860 = vld [vmem:[#allocation10 + $0x10c] sm:$0xf]
    %v1861 = vld [vmem:[#allocation10 + $0x110] sm:$0xf]
    %v1862 = vld [vmem:[#allocation10 + $0x114] sm:$0xf]
    %v1863 = vld [vmem:[#allocation10 + $0x118] sm:$0xf]
    %v1864 = vld [vmem:[#allocation10 + $0x11c] sm:$0xf]
    %v1865 = vld [vmem:[#allocation10 + $0x120] sm:$0xf]
    %v1866 = vld [vmem:[#allocation10 + $0x124] sm:$0xf]
    %v1867 = vld [vmem:[#allocation10 + $0x128] sm:$0xf]
    %v1868 = vld [vmem:[#allocation10 + $0x12c] sm:$0xf]
    %v1869 = vld [vmem:[#allocation10 + $0x130] sm:$0xf]
    %v1870 = vld [vmem:[#allocation10 + $0x134] sm:$0xf]
    %v1871 = vld [vmem:[#allocation10 + $0x138] sm:$0xf]
    %v1872 = vld [vmem:[#allocation10 + $0x13c] sm:$0xf]
    %v1873 = vld [vmem:[%s6] sm:$0x1]
    %v1875 = vperm.slane %v1873, 0
    %v1957 = vunpack.c.l.b16 %v1793
    %v1958 = vunpack.c.l.b16 %v1794
    %v1959 = vunpack.c.l.b16 %v1795
    %v1960 = vunpack.c.l.b16 %v1796
    %v1961 = vunpack.c.l.b16 %v1797
    %v1962 = vunpack.c.l.b16 %v1798
    %v1963 = vunpack.c.l.b16 %v1799
    %v1964 = vunpack.c.l.b16 %v1800
    %v1965 = vunpack.c.l.b16 %v1801
    %v1966 = vunpack.c.l.b16 %v1802
    %v1967 = vunpack.c.l.b16 %v1803
    %v1968 = vunpack.c.l.b16 %v1804
    %v1969 = vunpack.c.l.b16 %v1805
    %v1970 = vunpack.c.l.b16 %v1806
    %v1971 = vunpack.c.l.b16 %v1807
    %v1972 = vunpack.c.l.b16 %v1808
    %v1973 = vunpack.c.l.b16 %v1809
    %v1974 = vunpack.c.l.b16 %v1810
    %v1975 = vunpack.c.l.b16 %v1811
    %v1976 = vunpack.c.l.b16 %v1812
    %v1977 = vunpack.c.l.b16 %v1813
    %v1978 = vunpack.c.l.b16 %v1814
    %v1979 = vunpack.c.l.b16 %v1815
    %v1980 = vunpack.c.l.b16 %v1816
    %v1981 = vunpack.c.l.b16 %v1817
    %v1982 = vunpack.c.l.b16 %v1818
    %v1983 = vunpack.c.l.b16 %v1819
    %v1984 = vunpack.c.l.b16 %v1820
    %v1985 = vunpack.c.l.b16 %v1821
    %v1986 = vunpack.c.l.b16 %v1822
    %v1987 = vunpack.c.l.b16 %v1823
    %v1988 = vunpack.c.l.b16 %v1824
    %v1989 = vunpack.c.l.b16 %v1825
    %v1990 = vunpack.c.l.b16 %v1826
    %v1991 = vunpack.c.l.b16 %v1827
    %v1992 = vunpack.c.l.b16 %v1828
    %v1993 = vunpack.c.l.b16 %v1829
    %v1994 = vunpack.c.l.b16 %v1830
    %v1995 = vunpack.c.l.b16 %v1831
    %v1996 = vunpack.c.l.b16 %v1832
    %v1997 = vunpack.c.l.b16 %v1833
    %v1998 = vunpack.c.l.b16 %v1834
    %v1999 = vunpack.c.l.b16 %v1835
    %v2000 = vunpack.c.l.b16 %v1836
    %v2001 = vunpack.c.l.b16 %v1837
    %v2002 = vunpack.c.l.b16 %v1838
    %v2003 = vunpack.c.l.b16 %v1839
    %v2004 = vunpack.c.l.b16 %v1840
    %v2005 = vunpack.c.l.b16 %v1841
    %v2006 = vunpack.c.l.b16 %v1842
    %v2007 = vunpack.c.l.b16 %v1843
    %v2008 = vunpack.c.l.b16 %v1844
    %v2009 = vunpack.c.l.b16 %v1845
    %v2010 = vunpack.c.l.b16 %v1846
    %v2011 = vunpack.c.l.b16 %v1847
    %v2012 = vunpack.c.l.b16 %v1848
    %v2013 = vunpack.c.l.b16 %v1849
    %v2014 = vunpack.c.l.b16 %v1850
    %v2015 = vunpack.c.l.b16 %v1851
    %v2016 = vunpack.c.l.b16 %v1852
    %v2017 = vunpack.c.l.b16 %v1853
    %v2018 = vunpack.c.l.b16 %v1854
    %v2019 = vunpack.c.l.b16 %v1855
    %v2020 = vunpack.c.l.b16 %v1856
    %v2021 = vunpack.c.l.b16 %v1857
    %v2022 = vunpack.c.l.b16 %v1858
    %v2023 = vunpack.c.l.b16 %v1859
    %v2024 = vunpack.c.l.b16 %v1860
    %v2025 = vunpack.c.l.b16 %v1861
    %v2026 = vunpack.c.l.b16 %v1862
    %v2027 = vunpack.c.l.b16 %v1863
    %v2028 = vunpack.c.l.b16 %v1864
    %v2029 = vunpack.c.l.b16 %v1865
    %v2030 = vunpack.c.l.b16 %v1866
    %v2031 = vunpack.c.l.b16 %v1867
    %v2032 = vunpack.c.l.b16 %v1868
    %v2033 = vunpack.c.l.b16 %v1869
    %v2034 = vunpack.c.l.b16 %v1870
    %v2035 = vunpack.c.l.b16 %v1871
    %v2036 = vunpack.c.l.b16 %v1872
    %v2037 = vpack.c.b16 %v1958, %v1957
    %v2038 = vpack.c.b16 %v1960, %v1959
    %v2039 = vpack.c.b16 %v1962, %v1961
    %v2040 = vpack.c.b16 %v1964, %v1963
    %v2041 = vpack.c.b16 %v1966, %v1965
    %v2042 = vpack.c.b16 %v1968, %v1967
    %v2043 = vpack.c.b16 %v1970, %v1969
    %v2044 = vpack.c.b16 %v1972, %v1971
    %v2045 = vpack.c.b16 %v1974, %v1973
    %v2046 = vpack.c.b16 %v1976, %v1975
    %v2047 = vpack.c.b16 %v1978, %v1977
    %v2048 = vpack.c.b16 %v1980, %v1979
    %v2049 = vpack.c.b16 %v1982, %v1981
    %v2050 = vpack.c.b16 %v1984, %v1983
    %v2051 = vpack.c.b16 %v1986, %v1985
    %v2052 = vpack.c.b16 %v1988, %v1987
    %v2053 = vpack.c.b16 %v1990, %v1989
    %v2054 = vpack.c.b16 %v1992, %v1991
    %v2055 = vpack.c.b16 %v1994, %v1993
    %v2056 = vpack.c.b16 %v1996, %v1995
    %v2057 = vpack.c.b16 %v1998, %v1997
    %v2058 = vpack.c.b16 %v2000, %v1999
    %v2059 = vpack.c.b16 %v2002, %v2001
    %v2060 = vpack.c.b16 %v2004, %v2003
    %v2061 = vpack.c.b16 %v2006, %v2005
    %v2062 = vpack.c.b16 %v2008, %v2007
    %v2063 = vpack.c.b16 %v2010, %v2009
    %v2064 = vpack.c.b16 %v2012, %v2011
    %v2065 = vpack.c.b16 %v2014, %v2013
    %v2066 = vpack.c.b16 %v2016, %v2015
    %v2067 = vpack.c.b16 %v2018, %v2017
    %v2068 = vpack.c.b16 %v2020, %v2019
    %v2069 = vpack.c.b16 %v2022, %v2021
    %v2070 = vpack.c.b16 %v2024, %v2023
    %v2071 = vpack.c.b16 %v2026, %v2025
    %v2072 = vpack.c.b16 %v2028, %v2027
    %v2073 = vpack.c.b16 %v2030, %v2029
    %v2074 = vpack.c.b16 %v2032, %v2031
    %v2075 = vpack.c.b16 %v2034, %v2033
    %v2076 = vpack.c.b16 %v2036, %v2035
    %2117 = vmatpush.bf16.msra.mxu0 %v2044
    %2118 = vmatpush.bf16.msra.mxu0 %v2043
    %2119 = vmatpush.bf16.msra.mxu0 %v2042
    %2120 = vmatpush.bf16.msra.mxu0 %v2041
    %2121 = vmatpush.bf16.msra.mxu0 %v2040
    %2122 = vmatpush.bf16.msra.mxu0 %v2039
    %2123 = vmatpush.bf16.msra.mxu0 %v2038
    %2124 = vmatpush.bf16.msra.mxu0 %v2037
    %2125 = vmatmul.bf16.gmra.mxu0 %v1788
    %v2126 = vpop.f32.mrf.mxu0
    %v2127 = vadd.f32 %v1875, %v2126
    %v2128 = vpop.f32.mrf.mxu0
    %2129 = vdwg.mxu0
    %2130 = vmatpush.bf16.msra.mxu0 %v2052
    %2131 = vmatpush.bf16.msra.mxu0 %v2051
    %2132 = vmatpush.bf16.msra.mxu0 %v2050
    %2133 = vmatpush.bf16.msra.mxu0 %v2049
    %2134 = vmatpush.bf16.msra.mxu0 %v2048
    %2135 = vmatpush.bf16.msra.mxu0 %v2047
    %2136 = vmatpush.bf16.msra.mxu0 %v2046
    %2137 = vmatpush.bf16.msra.mxu0 %v2045
    %2138 = vmatmul.bf16.gmra.mxu0 %v1789
    %v2139 = vpop.f32.mrf.mxu0
    %v2140 = vadd.f32 %v2127, %v2139
    %v2141 = vpop.f32.mrf.mxu0
    %2142 = vdwg.mxu0
    %2143 = vmatpush.bf16.msra.mxu0 %v2060
    %2144 = vmatpush.bf16.msra.mxu0 %v2059
    %2145 = vmatpush.bf16.msra.mxu0 %v2058
    %2146 = vmatpush.bf16.msra.mxu0 %v2057
    %2147 = vmatpush.bf16.msra.mxu0 %v2056
    %2148 = vmatpush.bf16.msra.mxu0 %v2055
    %2149 = vmatpush.bf16.msra.mxu0 %v2054
    %2150 = vmatpush.bf16.msra.mxu0 %v2053
    %2151 = vmatmul.bf16.gmra.mxu0 %v1790
    %v2152 = vpop.f32.mrf.mxu0
    %v2153 = vadd.f32 %v2140, %v2152
    %v2154 = vpop.f32.mrf.mxu0
    %2155 = vdwg.mxu0
    %2156 = vmatpush.bf16.msra.mxu0 %v2068
    %2157 = vmatpush.bf16.msra.mxu0 %v2067
    %2158 = vmatpush.bf16.msra.mxu0 %v2066
    %2159 = vmatpush.bf16.msra.mxu0 %v2065
    %2160 = vmatpush.bf16.msra.mxu0 %v2064
    %2161 = vmatpush.bf16.msra.mxu0 %v2063
    %2162 = vmatpush.bf16.msra.mxu0 %v2062
    %2163 = vmatpush.bf16.msra.mxu0 %v2061
    %2164 = vmatmul.bf16.gmra.mxu0 %v1791
    %v2165 = vpop.f32.mrf.mxu0
    %v2166 = vadd.f32 %v2153, %v2165
    %v2167 = vpop.f32.mrf.mxu0
    %2168 = vdwg.mxu0
    %2169 = vmatpush.bf16.msra.mxu0 %v2076
    %2170 = vmatpush.bf16.msra.mxu0 %v2075
    %2171 = vmatpush.bf16.msra.mxu0 %v2074
    %2172 = vmatpush.bf16.msra.mxu0 %v2073
    %2173 = vmatpush.bf16.msra.mxu0 %v2072
    %2174 = vmatpush.bf16.msra.mxu0 %v2071
    %2175 = vmatpush.bf16.msra.mxu0 %v2070
    %2176 = vmatpush.bf16.msra.mxu0 %v2069
    %2177 = vmatmul.bf16.gmra.mxu0 %v1792
    %v2178 = vpop.f32.mrf.mxu0
    %v2179 = vadd.f32 %v2166, %v2178
    %v2180 = vpop.f32.mrf.mxu0
    %2181 = vdwg.mxu0
    %v2182 = vmax.f32 %v2179, 0.0
    %2183 = vst [vmem:[#allocation6] sm:$0x3] %v2182
    %2185 = vst.sshfl [vmem:[#allocation1] sm:$0xff pattern:$0x73625140] %v2182
    %s2186 = scalar_lea.vmem [#allocation1], 1
    %v2187 = vld [vmem:[%s2186] ss:$4 sm:$0xff]
    %2189 = vst [vmem:[#allocation6 + $0x2] sm:$0x3] %v2187
    %2190 = vst.sshfl [vmem:[#allocation1] sm:$0xff pattern:$0x73625140] %v2182
    %s2191 = scalar_lea.vmem [#allocation1], 2
    %v2192 = vld [vmem:[%s2191] ss:$4 sm:$0xff]
    %2194 = vst [vmem:[#allocation6 + $0x4] sm:$0x3] %v2192
    %2195 = vst.sshfl [vmem:[#allocation1] sm:$0xff pattern:$0x73625140] %v2182
    %s2196 = scalar_lea.vmem [#allocation1], 3
    %v2197 = vld [vmem:[%s2196] ss:$4 sm:$0xff]
    %2199 = vst [vmem:[#allocation6 + $0x6] sm:$0x3] %v2197
    %v2200 = vld [vmem:[#allocation6] sm:$0xff]
    %2202 = vst [vmem:[#allocation1] ss:$4 sm:$0xff] %v2200
    %v2203 = vld.sshfl [vmem:[#allocation1] sm:$0xff pattern:$0x73625140]
    %v2204 = vld.sshfl [vmem:[#allocation1 + $0x8] sm:$0xff pattern:$0x73625140]
    %v2205 = vld.sshfl [vmem:[#allocation1 + $0x10] sm:$0xff pattern:$0x73625140]
    %v2206 = vld.sshfl [vmem:[#allocation1 + $0x18] sm:$0xff pattern:$0x73625140]
    %v2211 = vpack.c.bf16 %v2203, %v2203
    %v2212 = vpack.c.bf16 %v2204, %v2204
    %v2213 = vpack.c.bf16 %v2205, %v2205
    %v2214 = vpack.c.bf16 %v2206, %v2206
    %v2215 = vld [vmem:[%s7] sm:$0xf]
    %v2216 = vld [vmem:[%s7 + $0x4] sm:$0xf]
    %v2217 = vld [vmem:[%s7 + $0x8] sm:$0xf]
    %v2218 = vld [vmem:[%s7 + $0xc] sm:$0xf]
    %v2219 = vld [vmem:[%s7 + $0x10] sm:$0xf]
    %v2220 = vld [vmem:[%s7 + $0x14] sm:$0xf]
    %v2221 = vld [vmem:[%s7 + $0x18] sm:$0xf]
    %v2222 = vld [vmem:[%s7 + $0x1c] sm:$0xf]
    %v2223 = vld [vmem:[%s7 + $0x20] sm:$0xf]
    %v2224 = vld [vmem:[%s7 + $0x24] sm:$0xf]
    %v2225 = vld [vmem:[%s7 + $0x28] sm:$0xf]
    %v2226 = vld [vmem:[%s7 + $0x2c] sm:$0xf]
    %v2227 = vld [vmem:[%s7 + $0x30] sm:$0xf]
    %v2228 = vld [vmem:[%s7 + $0x34] sm:$0xf]
    %v2229 = vld [vmem:[%s7 + $0x38] sm:$0xf]
    %v2230 = vld [vmem:[%s7 + $0x3c] sm:$0xf]
    %v2231 = vld [vmem:[%s7 + $0x40] sm:$0xf]
    %v2232 = vld [vmem:[%s7 + $0x44] sm:$0xf]
    %v2233 = vld [vmem:[%s7 + $0x48] sm:$0xf]
    %v2234 = vld [vmem:[%s7 + $0x4c] sm:$0xf]
    %v2235 = vld [vmem:[%s7 + $0x50] sm:$0xf]
    %v2236 = vld [vmem:[%s7 + $0x54] sm:$0xf]
    %v2237 = vld [vmem:[%s7 + $0x58] sm:$0xf]
    %v2238 = vld [vmem:[%s7 + $0x5c] sm:$0xf]
    %v2239 = vld [vmem:[%s7 + $0x60] sm:$0xf]
    %v2240 = vld [vmem:[%s7 + $0x64] sm:$0xf]
    %v2241 = vld [vmem:[%s7 + $0x68] sm:$0xf]
    %v2242 = vld [vmem:[%s7 + $0x6c] sm:$0xf]
    %v2243 = vld [vmem:[%s7 + $0x70] sm:$0xf]
    %v2244 = vld [vmem:[%s7 + $0x74] sm:$0xf]
    %v2245 = vld [vmem:[%s7 + $0x78] sm:$0xf]
    %v2246 = vld [vmem:[%s7 + $0x7c] sm:$0xf]
    %v2247 = vld [vmem:[%s7 + $0x80] sm:$0xf]
    %v2248 = vld [vmem:[%s7 + $0x84] sm:$0xf]
    %v2249 = vld [vmem:[%s7 + $0x88] sm:$0xf]
    %v2250 = vld [vmem:[%s7 + $0x8c] sm:$0xf]
    %v2251 = vld [vmem:[%s7 + $0x90] sm:$0xf]
    %v2252 = vld [vmem:[%s7 + $0x94] sm:$0xf]
    %v2253 = vld [vmem:[%s7 + $0x98] sm:$0xf]
    %v2254 = vld [vmem:[%s7 + $0x9c] sm:$0xf]
    %v2255 = vld [vmem:[%s7 + $0xa0] sm:$0xf]
    %v2256 = vld [vmem:[%s7 + $0xa4] sm:$0xf]
    %v2257 = vld [vmem:[%s7 + $0xa8] sm:$0xf]
    %v2258 = vld [vmem:[%s7 + $0xac] sm:$0xf]
    %v2259 = vld [vmem:[%s7 + $0xb0] sm:$0xf]
    %v2260 = vld [vmem:[%s7 + $0xb4] sm:$0xf]
    %v2261 = vld [vmem:[%s7 + $0xb8] sm:$0xf]
    %v2262 = vld [vmem:[%s7 + $0xbc] sm:$0xf]
    %v2263 = vld [vmem:[%s7 + $0xc0] sm:$0xf]
    %v2264 = vld [vmem:[%s7 + $0xc4] sm:$0xf]
    %v2265 = vld [vmem:[%s7 + $0xc8] sm:$0xf]
    %v2266 = vld [vmem:[%s7 + $0xcc] sm:$0xf]
    %v2267 = vld [vmem:[%s7 + $0xd0] sm:$0xf]
    %v2268 = vld [vmem:[%s7 + $0xd4] sm:$0xf]
    %v2269 = vld [vmem:[%s7 + $0xd8] sm:$0xf]
    %v2270 = vld [vmem:[%s7 + $0xdc] sm:$0xf]
    %v2271 = vld [vmem:[%s7 + $0xe0] sm:$0xf]
    %v2272 = vld [vmem:[%s7 + $0xe4] sm:$0xf]
    %v2273 = vld [vmem:[%s7 + $0xe8] sm:$0xf]
    %v2274 = vld [vmem:[%s7 + $0xec] sm:$0xf]
    %v2275 = vld [vmem:[%s7 + $0xf0] sm:$0xf]
    %v2276 = vld [vmem:[%s7 + $0xf4] sm:$0xf]
    %v2277 = vld [vmem:[%s7 + $0xf8] sm:$0xf]
    %v2278 = vld [vmem:[%s7 + $0xfc] sm:$0xf]
    %v2279 = vld [vmem:[%s8] sm:$0x1]
    %v2281 = vperm.slane %v2279, 0
    %v2347 = vunpack.c.l.b16 %v2215
    %v2348 = vunpack.c.l.b16 %v2216
    %v2349 = vunpack.c.l.b16 %v2217
    %v2350 = vunpack.c.l.b16 %v2218
    %v2351 = vunpack.c.l.b16 %v2219
    %v2352 = vunpack.c.l.b16 %v2220
    %v2353 = vunpack.c.l.b16 %v2221
    %v2354 = vunpack.c.l.b16 %v2222
    %v2355 = vunpack.c.l.b16 %v2223
    %v2356 = vunpack.c.l.b16 %v2224
    %v2357 = vunpack.c.l.b16 %v2225
    %v2358 = vunpack.c.l.b16 %v2226
    %v2359 = vunpack.c.l.b16 %v2227
    %v2360 = vunpack.c.l.b16 %v2228
    %v2361 = vunpack.c.l.b16 %v2229
    %v2362 = vunpack.c.l.b16 %v2230
    %v2363 = vunpack.c.l.b16 %v2231
    %v2364 = vunpack.c.l.b16 %v2232
    %v2365 = vunpack.c.l.b16 %v2233
    %v2366 = vunpack.c.l.b16 %v2234
    %v2367 = vunpack.c.l.b16 %v2235
    %v2368 = vunpack.c.l.b16 %v2236
    %v2369 = vunpack.c.l.b16 %v2237
    %v2370 = vunpack.c.l.b16 %v2238
    %v2371 = vunpack.c.l.b16 %v2239
    %v2372 = vunpack.c.l.b16 %v2240
    %v2373 = vunpack.c.l.b16 %v2241
    %v2374 = vunpack.c.l.b16 %v2242
    %v2375 = vunpack.c.l.b16 %v2243
    %v2376 = vunpack.c.l.b16 %v2244
    %v2377 = vunpack.c.l.b16 %v2245
    %v2378 = vunpack.c.l.b16 %v2246
    %v2379 = vunpack.c.l.b16 %v2247
    %v2380 = vunpack.c.l.b16 %v2248
    %v2381 = vunpack.c.l.b16 %v2249
    %v2382 = vunpack.c.l.b16 %v2250
    %v2383 = vunpack.c.l.b16 %v2251
    %v2384 = vunpack.c.l.b16 %v2252
    %v2385 = vunpack.c.l.b16 %v2253
    %v2386 = vunpack.c.l.b16 %v2254
    %v2387 = vunpack.c.l.b16 %v2255
    %v2388 = vunpack.c.l.b16 %v2256
    %v2389 = vunpack.c.l.b16 %v2257
    %v2390 = vunpack.c.l.b16 %v2258
    %v2391 = vunpack.c.l.b16 %v2259
    %v2392 = vunpack.c.l.b16 %v2260
    %v2393 = vunpack.c.l.b16 %v2261
    %v2394 = vunpack.c.l.b16 %v2262
    %v2395 = vunpack.c.l.b16 %v2263
    %v2396 = vunpack.c.l.b16 %v2264
    %v2397 = vunpack.c.l.b16 %v2265
    %v2398 = vunpack.c.l.b16 %v2266
    %v2399 = vunpack.c.l.b16 %v2267
    %v2400 = vunpack.c.l.b16 %v2268
    %v2401 = vunpack.c.l.b16 %v2269
    %v2402 = vunpack.c.l.b16 %v2270
    %v2403 = vunpack.c.l.b16 %v2271
    %v2404 = vunpack.c.l.b16 %v2272
    %v2405 = vunpack.c.l.b16 %v2273
    %v2406 = vunpack.c.l.b16 %v2274
    %v2407 = vunpack.c.l.b16 %v2275
    %v2408 = vunpack.c.l.b16 %v2276
    %v2409 = vunpack.c.l.b16 %v2277
    %v2410 = vunpack.c.l.b16 %v2278
    %v2411 = vpack.c.b16 %v2348, %v2347
    %v2412 = vpack.c.b16 %v2350, %v2349
    %v2413 = vpack.c.b16 %v2352, %v2351
    %v2414 = vpack.c.b16 %v2354, %v2353
    %v2415 = vpack.c.b16 %v2356, %v2355
    %v2416 = vpack.c.b16 %v2358, %v2357
    %v2417 = vpack.c.b16 %v2360, %v2359
    %v2418 = vpack.c.b16 %v2362, %v2361
    %v2419 = vpack.c.b16 %v2364, %v2363
    %v2420 = vpack.c.b16 %v2366, %v2365
    %v2421 = vpack.c.b16 %v2368, %v2367
    %v2422 = vpack.c.b16 %v2370, %v2369
    %v2423 = vpack.c.b16 %v2372, %v2371
    %v2424 = vpack.c.b16 %v2374, %v2373
    %v2425 = vpack.c.b16 %v2376, %v2375
    %v2426 = vpack.c.b16 %v2378, %v2377
    %v2427 = vpack.c.b16 %v2380, %v2379
    %v2428 = vpack.c.b16 %v2382, %v2381
    %v2429 = vpack.c.b16 %v2384, %v2383
    %v2430 = vpack.c.b16 %v2386, %v2385
    %v2431 = vpack.c.b16 %v2388, %v2387
    %v2432 = vpack.c.b16 %v2390, %v2389
    %v2433 = vpack.c.b16 %v2392, %v2391
    %v2434 = vpack.c.b16 %v2394, %v2393
    %v2435 = vpack.c.b16 %v2396, %v2395
    %v2436 = vpack.c.b16 %v2398, %v2397
    %v2437 = vpack.c.b16 %v2400, %v2399
    %v2438 = vpack.c.b16 %v2402, %v2401
    %v2439 = vpack.c.b16 %v2404, %v2403
    %v2440 = vpack.c.b16 %v2406, %v2405
    %v2441 = vpack.c.b16 %v2408, %v2407
    %v2442 = vpack.c.b16 %v2410, %v2409
    %2475 = vmatpush.bf16.msra.mxu0 %v2418
    %2476 = vmatpush.bf16.msra.mxu0 %v2417
    %2477 = vmatpush.bf16.msra.mxu0 %v2416
    %2478 = vmatpush.bf16.msra.mxu0 %v2415
    %2479 = vmatpush.bf16.msra.mxu0 %v2414
    %2480 = vmatpush.bf16.msra.mxu0 %v2413
    %2481 = vmatpush.bf16.msra.mxu0 %v2412
    %2482 = vmatpush.bf16.msra.mxu0 %v2411
    %2483 = vmatmul.bf16.gmra.mxu0 %v2211
    %v2484 = vpop.f32.mrf.mxu0
    %v2485 = vadd.f32 %v2281, %v2484
    %v2486 = vpop.f32.mrf.mxu0
    %2487 = vdwg.mxu0
    %2488 = vmatpush.bf16.msra.mxu0 %v2426
    %2489 = vmatpush.bf16.msra.mxu0 %v2425
    %2490 = vmatpush.bf16.msra.mxu0 %v2424
    %2491 = vmatpush.bf16.msra.mxu0 %v2423
    %2492 = vmatpush.bf16.msra.mxu0 %v2422
    %2493 = vmatpush.bf16.msra.mxu0 %v2421
    %2494 = vmatpush.bf16.msra.mxu0 %v2420
    %2495 = vmatpush.bf16.msra.mxu0 %v2419
    %2496 = vmatmul.bf16.gmra.mxu0 %v2212
    %v2497 = vpop.f32.mrf.mxu0
    %v2498 = vadd.f32 %v2485, %v2497
    %v2499 = vpop.f32.mrf.mxu0
    %2500 = vdwg.mxu0
    %2501 = vmatpush.bf16.msra.mxu0 %v2434
    %2502 = vmatpush.bf16.msra.mxu0 %v2433
    %2503 = vmatpush.bf16.msra.mxu0 %v2432
    %2504 = vmatpush.bf16.msra.mxu0 %v2431
    %2505 = vmatpush.bf16.msra.mxu0 %v2430
    %2506 = vmatpush.bf16.msra.mxu0 %v2429
    %2507 = vmatpush.bf16.msra.mxu0 %v2428
    %2508 = vmatpush.bf16.msra.mxu0 %v2427
    %2509 = vmatmul.bf16.gmra.mxu0 %v2213
    %v2510 = vpop.f32.mrf.mxu0
    %v2511 = vadd.f32 %v2498, %v2510
    %v2512 = vpop.f32.mrf.mxu0
    %2513 = vdwg.mxu0
    %2514 = vmatpush.bf16.msra.mxu0 %v2442
    %2515 = vmatpush.bf16.msra.mxu0 %v2441
    %2516 = vmatpush.bf16.msra.mxu0 %v2440
    %2517 = vmatpush.bf16.msra.mxu0 %v2439
    %2518 = vmatpush.bf16.msra.mxu0 %v2438
    %2519 = vmatpush.bf16.msra.mxu0 %v2437
    %2520 = vmatpush.bf16.msra.mxu0 %v2436
    %2521 = vmatpush.bf16.msra.mxu0 %v2435
    %2522 = vmatmul.bf16.gmra.mxu0 %v2214
    %v2523 = vpop.f32.mrf.mxu0
    %v2524 = vadd.f32 %v2511, %v2523
    %v2525 = vpop.f32.mrf.mxu0
    %2526 = vdwg.mxu0
    %v2527 = vmax.f32 %v2524, 0.0
    %vm2528 = vcmask 254976
    %2529 = vst.msk [vmem:[#allocation12] sm:$0x3] %vm2528, %v2527
    // Predicated region
    $region46: #{conv_encoder_forward.1} parent=1 // pred_check
      _
    $region47: #{conv_encoder_forward.1} parent=1 // pred_check_branch
      %2531 = sbr.rel (0) target = $region49
    $region48: #{conv_encoder_forward.1} parent=1 // pred_region
      %2533 = vsyncadd [#allocation9], 0
      %s2535 = sshll.u32 [#allocation12], 4
      %s2536 = int_to_ptr.vmem [resolvable:$true] %s2535
      %s2537 = sshll.u32 %s9, 4
      %s2538 = int_to_ptr.hbm [resolvable:$true] %s2537
      %2540 = dma.vmem_to_hbm [thread:$0]  %s2536, 32, %s2538, [#allocation9]
    $region49: #{conv_encoder_forward.1} parent=1 // pred_fallthru
      _
    // Predicated region
    $region50: #{conv_encoder_forward.1} parent=1 // pred_check
      _
    $region51: #{conv_encoder_forward.1} parent=1 // pred_check_branch
      %2542 = sbr.rel (0) target = $region53
    $region52: #{conv_encoder_forward.1} parent=1 // pred_region
      %2544 = dma.done [#allocation9], 32
    $region53: #{conv_encoder_forward.1} parent=1 // pred_fallthru
      _
    %2545 = vsyncpa [#allocation8], 1
    %2546 = vsyncpa [#allocation11], 1
    %2547 = vsyncpa [#allocation9], 1

</llo_original>
